<compile_context>
chip_gen: v5e
topology: v5e:2x2
jax: 0.10.0
libtpu: 0.0.40
codegen_flags: <defaults>
</compile_context>

<pallas_src>
import numpy as np
import jax
import jax.numpy as jnp
from jax.experimental import pallas as pl
from jax.experimental.pallas import tpu as pltpu

_EPS = 1e-5


# ------------------------------------------------------------------------------
# Fused Conv3x3 + BN(eval) + ReLU + MaxPool2x2 core (one batch element per grid
# step).  Input is the zero-padded image flattened row-major to (Hp*Wp, Cin);
# the conv output for pixel (y, x) lives at flat row y*Wp + x, so the nine taps
# are nine statically-shifted matmuls accumulated in f32.
# ------------------------------------------------------------------------------

def _conv_bn_relu_pool_core(x_ref, w_ref, scale_ref, bias_ref, H, W):
    Wp = W + 2
    L = (H - 1) * Wp + W          # flat rows covering every valid output pixel
    Lv = L - 1 - Wp               # rows of the 2x2-max intermediate
    acc = None
    t = 0
    for dy in range(3):
        for dx in range(3):
            s = dy * Wp + dx
            win = x_ref[0, s:s + L, :].astype(jnp.bfloat16)        # (L, Cin) bf16
            d = jnp.dot(win, w_ref[t], preferred_element_type=jnp.float32)
            acc = d if acc is None else acc + d
            t += 1
    # folded conv-bias + BN scale/shift, then ReLU (all f32)
    conv = jnp.maximum(acc * scale_ref[...] + bias_ref[...], 0.0)   # (L, Cout)
    # 2x2 stride-2 max pool on the flat layout: horizontal pairs, then rows Wp apart.
    # (Rows belonging to padding columns are garbage but are never selected.)
    hmax = jnp.maximum(conv[:L - 1, :], conv[1:, :])
    vmax = jnp.maximum(hmax[:Lv, :], hmax[Wp:Wp + Lv, :])           # (Lv, Cout)
    return vmax


def _make_stage_kernel(H, W):
    def kernel(x_ref, w_ref, scale_ref, bias_ref, g_ref, out_ref):
        vmax = _conv_bn_relu_pool_core(x_ref, w_ref, scale_ref, bias_ref, H, W)
        # 0/1 gather matmul -> pooled activations already laid out as the next
        # stage's zero-padded flattened slab; one dense lane-wide store.
        out_ref[0] = jnp.dot(g_ref[...], vmax, preferred_element_type=jnp.float32)
    return kernel


def _make_final_kernel(H, W):
    def kernel(x_ref, w_ref, scale_ref, bias_ref, gp_ref, fcw_ref, fcb_ref, out_ref):
        vmax = _conv_bn_relu_pool_core(x_ref, w_ref, scale_ref, bias_ref, H, W)
        # global average pool (AdaptiveAvgPool2d((1,1))) as a scaled gather matmul
        pooled = jnp.dot(gp_ref[...], vmax, preferred_element_type=jnp.float32)  # (1, Cout)
        out_ref[0] = jnp.dot(pooled, fcw_ref[...],
                             preferred_element_type=jnp.float32) + fcb_ref[...]
    return kernel


# ----------------------------- constant gather matrices --------------------------

def _pool_gather_matrix(H, W):
    """(Hop*Wop, Lv) 0/1 matrix: flat 2x2-max rows -> next stage's padded flat slab."""
    Wp = W + 2
    Ho, Wo = H // 2, W // 2
    Hop, Wop = Ho + 2, Wo + 2
    L = (H - 1) * Wp + W
    Lv = L - 1 - Wp
    g = np.zeros((Hop * Wop, Lv), np.float32)
    for yo in range(Ho):
        for xo in range(Wo):
            g[(yo + 1) * Wop + (xo + 1), 2 * yo * Wp + 2 * xo] = 1.0
    return g


def _pool_avg_vector(H, W):
    """(1, Lv) matrix: flat 2x2-max rows -> global average over the Ho*Wo outputs."""
    Wp = W + 2
    Ho, Wo = H // 2, W // 2
    L = (H - 1) * Wp + W
    Lv = L - 1 - Wp
    g = np.zeros((1, Lv), np.float32)
    for yo in range(Ho):
        for xo in range(Wo):
            g[0, 2 * yo * Wp + 2 * xo] = 1.0 / (Ho * Wo)
    return g


# ------------------------------- parameter folding -------------------------------

def _fold_bn(p):
    scale = p["gamma"] / jnp.sqrt(p["var"] + _EPS)
    bias = (p["b"] - p["mean"]) * scale + p["beta"]
    cout = scale.shape[0]
    return scale.reshape(1, cout), bias.reshape(1, cout)


def _tap_weights(p):
    # (Cout, Cin, kh, kw) -> (kh*kw, Cin, Cout), bf16 for the MXU
    cout, cin, kh, kw = p["w"].shape
    return jnp.transpose(p["w"], (2, 3, 1, 0)).reshape(kh * kw, cin, cout).astype(jnp.bfloat16)


# --------------------------------- stage wrappers ---------------------------------

def _conv_stage(x_flat, p, H, W):
    """x_flat: (N, (H+2)*(W+2), Cin) zero-padded flattened NHWC -> same layout, pooled."""
    n, _, cin = x_flat.shape
    cout = p["w"].shape[0]
    Hp, Wp = H + 2, W + 2
    Ho, Wo = H // 2, W // 2
    Hop, Wop = Ho + 2, Wo + 2
    L = (H - 1) * Wp + W
    Lv = L - 1 - Wp
    w9 = _tap_weights(p)
    scale, bias = _fold_bn(p)
    g = jnp.asarray(_pool_gather_matrix(H, W))
    return pl.pallas_call(
        _make_stage_kernel(H, W),
        out_shape=jax.ShapeDtypeStruct((n, Hop * Wop, cout), jnp.float32),
        grid=(n,),
        in_specs=[
            pl.BlockSpec((1, Hp * Wp, cin), lambda b: (b, 0, 0)),
            pl.BlockSpec((9, cin, cout), lambda b: (0, 0, 0)),
            pl.BlockSpec((1, cout), lambda b: (0, 0)),
            pl.BlockSpec((1, cout), lambda b: (0, 0)),
            pl.BlockSpec((Hop * Wop, Lv), lambda b: (0, 0)),
        ],
        out_specs=pl.BlockSpec((1, Hop * Wop, cout), lambda b: (b, 0, 0)),
        compiler_params=pltpu.CompilerParams(
            dimension_semantics=("parallel",),
            vmem_limit_bytes=32 * 1024 * 1024),
    )(x_flat, w9, scale, bias, g)


def _final_stage(x_flat, p, fc_w, fc_b, H, W):
    """Last conv stage fused with global-avg-pool + FC head. Returns (N, num_classes)."""
    n, _, cin = x_flat.shape
    cout = p["w"].shape[0]
    nc = fc_w.shape[0]
    Hp, Wp = H + 2, W + 2
    L = (H - 1) * Wp + W
    Lv = L - 1 - Wp
    w9 = _tap_weights(p)
    scale, bias = _fold_bn(p)
    gp = jnp.asarray(_pool_avg_vector(H, W))
    out = pl.pallas_call(
        _make_final_kernel(H, W),
        out_shape=jax.ShapeDtypeStruct((n, 1, nc), jnp.float32),
        grid=(n,),
        in_specs=[
            pl.BlockSpec((1, Hp * Wp, cin), lambda b: (b, 0, 0)),
            pl.BlockSpec((9, cin, cout), lambda b: (0, 0, 0)),
            pl.BlockSpec((1, cout), lambda b: (0, 0)),
            pl.BlockSpec((1, cout), lambda b: (0, 0)),
            pl.BlockSpec((1, Lv), lambda b: (0, 0)),
            pl.BlockSpec((cout, nc), lambda b: (0, 0)),
            pl.BlockSpec((1, nc), lambda b: (0, 0)),
        ],
        out_specs=pl.BlockSpec((1, 1, nc), lambda b: (b, 0, 0)),
        compiler_params=pltpu.CompilerParams(
            dimension_semantics=("parallel",),
            vmem_limit_bytes=32 * 1024 * 1024),
    )(x_flat, w9, scale, bias, gp, fc_w.T.astype(jnp.float32), fc_b.reshape(1, nc))
    return out.reshape(n, nc)


# --------------------------------- full forward ------------------------------------

@jax.jit
def toy_model_forward(x_nchw, params):
    n, cin, H, W = x_nchw.shape
    assert H % 8 == 0 and W % 8 == 0, "spatial dims must survive three 2x2 pools"
    # one-time layout glue: NCHW -> NHWC, SAME zero-pad, flatten spatial row-major
    x = jnp.transpose(x_nchw, (0, 2, 3, 1))
    x = jnp.pad(x, ((0, 0), (1, 1), (1, 1), (0, 0)))
    x = x.reshape(n, (H + 2) * (W + 2), cin)
    x = _conv_stage(x, params["c1"], H, W)                 # (N, (H/2+2)*(W/2+2), 64)
    x = _conv_stage(x, params["c2"], H // 2, W // 2)       # (N, (H/4+2)*(W/4+2), 128)
    return _final_stage(x, params["c3"], params["fc_w"], params["fc_b"], H // 4, W // 4)


# ---------------------------- deterministic parameters ------------------------------

def _conv_block_params(key, cin, cout, k=3):
    k1, k2 = jax.random.split(key)
    return dict(
        w=jax.random.normal(k1, (cout, cin, k, k), jnp.float32) * (1.0 / (k * k * cin)) ** 0.5,
        b=jax.random.normal(k2, (cout,), jnp.float32) * 0.01,
        gamma=1.0 + 0.01 * jnp.arange(cout, dtype=jnp.float32),
        beta=0.01 * jnp.arange(cout, dtype=jnp.float32),
        mean=0.001 * jnp.arange(cout, dtype=jnp.float32),
        var=1.0 + 0.02 * jnp.arange(cout, dtype=jnp.float32),
    )


def init_params(key, num_classes=10):
    k1, k2, k3, k4, k5 = jax.random.split(key, 5)
    return dict(
        c1=_conv_block_params(k1, 3, 64),
        c2=_conv_block_params(k2, 64, 128),
        c3=_conv_block_params(k3, 128, 256),
        fc_w=jax.random.normal(k4, (num_classes, 256), jnp.float32) * (1.0 / 256.0) ** 0.5,
        fc_b=jax.random.normal(k5, (num_classes,), jnp.float32) * 0.01,
    )


# ------------------------------ pure-JAX reference ----------------------------------

def _ref_forward(x_nchw, params):
    x = x_nchw
    for name in ("c1", "c2", "c3"):
        p = params[name]
        x = jax.lax.conv_general_dilated(
            x, p["w"], (1, 1), "SAME",
            dimension_numbers=("NCHW", "OIHW", "NCHW"))
        x = x + p["b"][None, :, None, None]
        scale = p["gamma"] / jnp.sqrt(p["var"] + _EPS)
        x = (x - p["mean"][None, :, None, None]) * scale[None, :, None, None] \
            + p["beta"][None, :, None, None]
        x = jnp.maximum(x, 0.0)
        x = jax.lax.reduce_window(x, -jnp.inf, jax.lax.max,
                                  (1, 1, 2, 2), (1, 1, 2, 2), "VALID")
    x = jnp.mean(x, axis=(2, 3))                      # (N, 256)
    return x @ params["fc_w"].T + params["fc_b"]


if __name__ == "__main__":
    key = jax.random.PRNGKey(0)
    kx, kp = jax.random.split(key)
    x = jax.random.normal(kx, (2, 3, 16, 16), jnp.float32)   # NCHW, like PyTorch
    params = init_params(kp, num_classes=10)

    out = jax.block_until_ready(toy_model_forward(x, params))
    assert out.shape == (2, 10), out.shape

    ref = jax.block_until_ready(_ref_forward(x, params))
    # bf16 MXU operands (f32 accumulation) -> loosened tolerance vs the f32 reference
    max_err = float(jnp.max(jnp.abs(out - ref)))
    assert jnp.allclose(out, ref, atol=5e-2, rtol=5e-2), max_err

    print("KERNEL_OK")
</pallas_src>

<mosaic_0001>
module attributes {stable_mosaic.version = 11 : i64} {
  func.func @kernel(%arg0: i32, %arg1: memref<1x324x3xf32, #tpu.memory_space<vmem>>, %arg2: memref<9x3x64xbf16, #tpu.memory_space<vmem>>, %arg3: memref<1x64xf32, #tpu.memory_space<vmem>>, %arg4: memref<1x64xf32, #tpu.memory_space<vmem>>, %arg5: memref<100x267xf32, #tpu.memory_space<vmem>>, %arg6: memref<1x100x64xf32, #tpu.memory_space<vmem>>) attributes {dimension_semantics = [#tpu.dimension_semantics<parallel>], iteration_bounds = array<i64: 2>, scalar_prefetch = 0 : i64, scratch_operands = 0 : i64, tpu.core_type = #tpu.core_type<tc>, window_params = [{transform_indices = @transform_0, window_bounds = array<i64: 1, 324, 3>}, {pipeline_mode = #tpu.pipeline_mode<synchronous>, transform_indices = @transform_1, window_bounds = array<i64: 9, 3, 64>}, {pipeline_mode = #tpu.pipeline_mode<synchronous>, transform_indices = @transform_2, window_bounds = array<i64: 1, 64>}, {pipeline_mode = #tpu.pipeline_mode<synchronous>, transform_indices = @transform_3, window_bounds = array<i64: 1, 64>}, {pipeline_mode = #tpu.pipeline_mode<synchronous>, transform_indices = @transform_4, window_bounds = array<i64: 100, 267>}, {transform_indices = @transform_5, window_bounds = array<i64: 1, 100, 64>}]} {
    %c0 = arith.constant 0 : index
    %c0_0 = arith.constant 0 : index
    %c0_1 = arith.constant 0 : index
    %0 = vector.load %arg1[%c0, %c0_0, %c0_1] : memref<1x324x3xf32, #tpu.memory_space<vmem>>, vector<1x286x3xf32>
    %1 = vector.shape_cast %0 : vector<1x286x3xf32> to vector<286x3xf32>
    %2 = arith.truncf %1 : vector<286x3xf32> to vector<286x3xbf16>
    %c0_2 = arith.constant 0 : index
    %c0_3 = arith.constant 0 : index
    %c0_4 = arith.constant 0 : index
    %3 = vector.load %arg2[%c0_2, %c0_3, %c0_4] : memref<9x3x64xbf16, #tpu.memory_space<vmem>>, vector<1x3x64xbf16>
    %4 = vector.shape_cast %3 : vector<1x3x64xbf16> to vector<3x64xbf16>
    %cst = arith.constant dense<0.000000e+00> : vector<286x64xf32>
    %5 = tpu.matmul %2, %4, %cst {dimension_numbers = #tpu.dot_dimension_numbers<[1], [0], [0], [1], [0, 0, 1, 1], [], []>} : vector<286x3xbf16>, vector<3x64xbf16>, vector<286x64xf32> -> vector<286x64xf32>
    %c0_5 = arith.constant 0 : index
    %c1 = arith.constant 1 : index
    %c0_6 = arith.constant 0 : index
    %6 = vector.load %arg1[%c0_5, %c1, %c0_6] : memref<1x324x3xf32, #tpu.memory_space<vmem>>, vector<1x286x3xf32>
    %7 = vector.shape_cast %6 : vector<1x286x3xf32> to vector<286x3xf32>
    %8 = arith.truncf %7 : vector<286x3xf32> to vector<286x3xbf16>
    %c1_7 = arith.constant 1 : index
    %c0_8 = arith.constant 0 : index
    %c0_9 = arith.constant 0 : index
    %9 = vector.load %arg2[%c1_7, %c0_8, %c0_9] : memref<9x3x64xbf16, #tpu.memory_space<vmem>>, vector<1x3x64xbf16>
    %10 = vector.shape_cast %9 : vector<1x3x64xbf16> to vector<3x64xbf16>
    %cst_10 = arith.constant dense<0.000000e+00> : vector<286x64xf32>
    %11 = tpu.matmul %8, %10, %cst_10 {dimension_numbers = #tpu.dot_dimension_numbers<[1], [0], [0], [1], [0, 0, 1, 1], [], []>} : vector<286x3xbf16>, vector<3x64xbf16>, vector<286x64xf32> -> vector<286x64xf32>
    %12 = arith.addf %5, %11 : vector<286x64xf32>
    %c0_11 = arith.constant 0 : index
    %c2 = arith.constant 2 : index
    %c0_12 = arith.constant 0 : index
    %13 = vector.load %arg1[%c0_11, %c2, %c0_12] : memref<1x324x3xf32, #tpu.memory_space<vmem>>, vector<1x286x3xf32>
    %14 = vector.shape_cast %13 : vector<1x286x3xf32> to vector<286x3xf32>
    %15 = arith.truncf %14 : vector<286x3xf32> to vector<286x3xbf16>
    %c2_13 = arith.constant 2 : index
    %c0_14 = arith.constant 0 : index
    %c0_15 = arith.constant 0 : index
    %16 = vector.load %arg2[%c2_13, %c0_14, %c0_15] : memref<9x3x64xbf16, #tpu.memory_space<vmem>>, vector<1x3x64xbf16>
    %17 = vector.shape_cast %16 : vector<1x3x64xbf16> to vector<3x64xbf16>
    %cst_16 = arith.constant dense<0.000000e+00> : vector<286x64xf32>
    %18 = tpu.matmul %15, %17, %cst_16 {dimension_numbers = #tpu.dot_dimension_numbers<[1], [0], [0], [1], [0, 0, 1, 1], [], []>} : vector<286x3xbf16>, vector<3x64xbf16>, vector<286x64xf32> -> vector<286x64xf32>
    %19 = arith.addf %12, %18 : vector<286x64xf32>
    %c0_17 = arith.constant 0 : index
    %c18 = arith.constant 18 : index
    %c0_18 = arith.constant 0 : index
    %20 = vector.load %arg1[%c0_17, %c18, %c0_18] : memref<1x324x3xf32, #tpu.memory_space<vmem>>, vector<1x286x3xf32>
    %21 = vector.shape_cast %20 : vector<1x286x3xf32> to vector<286x3xf32>
    %22 = arith.truncf %21 : vector<286x3xf32> to vector<286x3xbf16>
    %c3 = arith.constant 3 : index
    %c0_19 = arith.constant 0 : index
    %c0_20 = arith.constant 0 : index
    %23 = vector.load %arg2[%c3, %c0_19, %c0_20] : memref<9x3x64xbf16, #tpu.memory_space<vmem>>, vector<1x3x64xbf16>
    %24 = vector.shape_cast %23 : vector<1x3x64xbf16> to vector<3x64xbf16>
    %cst_21 = arith.constant dense<0.000000e+00> : vector<286x64xf32>
    %25 = tpu.matmul %22, %24, %cst_21 {dimension_numbers = #tpu.dot_dimension_numbers<[1], [0], [0], [1], [0, 0, 1, 1], [], []>} : vector<286x3xbf16>, vector<3x64xbf16>, vector<286x64xf32> -> vector<286x64xf32>
    %26 = arith.addf %19, %25 : vector<286x64xf32>
    %c0_22 = arith.constant 0 : index
    %c19 = arith.constant 19 : index
    %c0_23 = arith.constant 0 : index
    %27 = vector.load %arg1[%c0_22, %c19, %c0_23] : memref<1x324x3xf32, #tpu.memory_space<vmem>>, vector<1x286x3xf32>
    %28 = vector.shape_cast %27 : vector<1x286x3xf32> to vector<286x3xf32>
    %29 = arith.truncf %28 : vector<286x3xf32> to vector<286x3xbf16>
    %c4 = arith.constant 4 : index
    %c0_24 = arith.constant 0 : index
    %c0_25 = arith.constant 0 : index
    %30 = vector.load %arg2[%c4, %c0_24, %c0_25] : memref<9x3x64xbf16, #tpu.memory_space<vmem>>, vector<1x3x64xbf16>
    %31 = vector.shape_cast %30 : vector<1x3x64xbf16> to vector<3x64xbf16>
    %cst_26 = arith.constant dense<0.000000e+00> : vector<286x64xf32>
    %32 = tpu.matmul %29, %31, %cst_26 {dimension_numbers = #tpu.dot_dimension_numbers<[1], [0], [0], [1], [0, 0, 1, 1], [], []>} : vector<286x3xbf16>, vector<3x64xbf16>, vector<286x64xf32> -> vector<286x64xf32>
    %33 = arith.addf %26, %32 : vector<286x64xf32>
    %c0_27 = arith.constant 0 : index
    %c20 = arith.constant 20 : index
    %c0_28 = arith.constant 0 : index
    %34 = vector.load %arg1[%c0_27, %c20, %c0_28] : memref<1x324x3xf32, #tpu.memory_space<vmem>>, vector<1x286x3xf32>
    %35 = vector.shape_cast %34 : vector<1x286x3xf32> to vector<286x3xf32>
    %36 = arith.truncf %35 : vector<286x3xf32> to vector<286x3xbf16>
    %c5 = arith.constant 5 : index
    %c0_29 = arith.constant 0 : index
    %c0_30 = arith.constant 0 : index
    %37 = vector.load %arg2[%c5, %c0_29, %c0_30] : memref<9x3x64xbf16, #tpu.memory_space<vmem>>, vector<1x3x64xbf16>
    %38 = vector.shape_cast %37 : vector<1x3x64xbf16> to vector<3x64xbf16>
    %cst_31 = arith.constant dense<0.000000e+00> : vector<286x64xf32>
    %39 = tpu.matmul %36, %38, %cst_31 {dimension_numbers = #tpu.dot_dimension_numbers<[1], [0], [0], [1], [0, 0, 1, 1], [], []>} : vector<286x3xbf16>, vector<3x64xbf16>, vector<286x64xf32> -> vector<286x64xf32>
    %40 = arith.addf %33, %39 : vector<286x64xf32>
    %c0_32 = arith.constant 0 : index
    %c36 = arith.constant 36 : index
    %c0_33 = arith.constant 0 : index
    %41 = vector.load %arg1[%c0_32, %c36, %c0_33] : memref<1x324x3xf32, #tpu.memory_space<vmem>>, vector<1x286x3xf32>
    %42 = vector.shape_cast %41 : vector<1x286x3xf32> to vector<286x3xf32>
    %43 = arith.truncf %42 : vector<286x3xf32> to vector<286x3xbf16>
    %c6 = arith.constant 6 : index
    %c0_34 = arith.constant 0 : index
    %c0_35 = arith.constant 0 : index
    %44 = vector.load %arg2[%c6, %c0_34, %c0_35] : memref<9x3x64xbf16, #tpu.memory_space<vmem>>, vector<1x3x64xbf16>
    %45 = vector.shape_cast %44 : vector<1x3x64xbf16> to vector<3x64xbf16>
    %cst_36 = arith.constant dense<0.000000e+00> : vector<286x64xf32>
    %46 = tpu.matmul %43, %45, %cst_36 {dimension_numbers = #tpu.dot_dimension_numbers<[1], [0], [0], [1], [0, 0, 1, 1], [], []>} : vector<286x3xbf16>, vector<3x64xbf16>, vector<286x64xf32> -> vector<286x64xf32>
    %47 = arith.addf %40, %46 : vector<286x64xf32>
    %c0_37 = arith.constant 0 : index
    %c37 = arith.constant 37 : index
    %c0_38 = arith.constant 0 : index
    %48 = vector.load %arg1[%c0_37, %c37, %c0_38] : memref<1x324x3xf32, #tpu.memory_space<vmem>>, vector<1x286x3xf32>
    %49 = vector.shape_cast %48 : vector<1x286x3xf32> to vector<286x3xf32>
    %50 = arith.truncf %49 : vector<286x3xf32> to vector<286x3xbf16>
    %c7 = arith.constant 7 : index
    %c0_39 = arith.constant 0 : index
    %c0_40 = arith.constant 0 : index
    %51 = vector.load %arg2[%c7, %c0_39, %c0_40] : memref<9x3x64xbf16, #tpu.memory_space<vmem>>, vector<1x3x64xbf16>
    %52 = vector.shape_cast %51 : vector<1x3x64xbf16> to vector<3x64xbf16>
    %cst_41 = arith.constant dense<0.000000e+00> : vector<286x64xf32>
    %53 = tpu.matmul %50, %52, %cst_41 {dimension_numbers = #tpu.dot_dimension_numbers<[1], [0], [0], [1], [0, 0, 1, 1], [], []>} : vector<286x3xbf16>, vector<3x64xbf16>, vector<286x64xf32> -> vector<286x64xf32>
    %54 = arith.addf %47, %53 : vector<286x64xf32>
    %c0_42 = arith.constant 0 : index
    %c38 = arith.constant 38 : index
    %c0_43 = arith.constant 0 : index
    %55 = vector.load %arg1[%c0_42, %c38, %c0_43] : memref<1x324x3xf32, #tpu.memory_space<vmem>>, vector<1x286x3xf32>
    %56 = vector.shape_cast %55 : vector<1x286x3xf32> to vector<286x3xf32>
    %57 = arith.truncf %56 : vector<286x3xf32> to vector<286x3xbf16>
    %c8 = arith.constant 8 : index
    %c0_44 = arith.constant 0 : index
    %c0_45 = arith.constant 0 : index
    %58 = vector.load %arg2[%c8, %c0_44, %c0_45] : memref<9x3x64xbf16, #tpu.memory_space<vmem>>, vector<1x3x64xbf16>
    %59 = vector.shape_cast %58 : vector<1x3x64xbf16> to vector<3x64xbf16>
    %cst_46 = arith.constant dense<0.000000e+00> : vector<286x64xf32>
    %60 = tpu.matmul %57, %59, %cst_46 {dimension_numbers = #tpu.dot_dimension_numbers<[1], [0], [0], [1], [0, 0, 1, 1], [], []>} : vector<286x3xbf16>, vector<3x64xbf16>, vector<286x64xf32> -> vector<286x64xf32>
    %61 = arith.addf %54, %60 : vector<286x64xf32>
    %c0_47 = arith.constant 0 : index
    %c0_48 = arith.constant 0 : index
    %62 = vector.load %arg3[%c0_47, %c0_48] : memref<1x64xf32, #tpu.memory_space<vmem>>, vector<1x64xf32>
    %63 = vector.broadcast %62 : vector<1x64xf32> to vector<286x64xf32>
    %64 = arith.mulf %61, %63 : vector<286x64xf32>
    %c0_49 = arith.constant 0 : index
    %c0_50 = arith.constant 0 : index
    %65 = vector.load %arg4[%c0_49, %c0_50] : memref<1x64xf32, #tpu.memory_space<vmem>>, vector<1x64xf32>
    %66 = vector.broadcast %65 : vector<1x64xf32> to vector<286x64xf32>
    %67 = arith.addf %64, %66 : vector<286x64xf32>
    %cst_51 = arith.constant 0.000000e+00 : f32
    %68 = vector.broadcast %cst_51 : f32 to vector<286x64xf32>
    %69 = arith.maximumf %67, %68 : vector<286x64xf32>
    %70 = vector.extract_strided_slice %69 {offsets = [0, 0], sizes = [285, 64], strides = [1, 1]} : vector<286x64xf32> to vector<285x64xf32>
    %71 = vector.extract_strided_slice %69 {offsets = [1, 0], sizes = [285, 64], strides = [1, 1]} : vector<286x64xf32> to vector<285x64xf32>
    %72 = arith.maximumf %70, %71 : vector<285x64xf32>
    %73 = vector.extract_strided_slice %72 {offsets = [0, 0], sizes = [267, 64], strides = [1, 1]} : vector<285x64xf32> to vector<267x64xf32>
    %74 = vector.extract_strided_slice %72 {offsets = [18, 0], sizes = [267, 64], strides = [1, 1]} : vector<285x64xf32> to vector<267x64xf32>
    %75 = arith.maximumf %73, %74 : vector<267x64xf32>
    %c0_52 = arith.constant 0 : index
    %c0_53 = arith.constant 0 : index
    %76 = vector.load %arg5[%c0_52, %c0_53] : memref<100x267xf32, #tpu.memory_space<vmem>>, vector<100x267xf32>
    %cst_54 = arith.constant dense<0.000000e+00> : vector<100x64xf32>
    %77 = tpu.matmul %76, %75, %cst_54 {dimension_numbers = #tpu.dot_dimension_numbers<[1], [0], [0], [1], [0, 0, 1, 1], [], []>} : vector<100x267xf32>, vector<267x64xf32>, vector<100x64xf32> -> vector<100x64xf32>
    %c0_55 = arith.constant 0 : index
    %c0_56 = arith.constant 0 : index
    %c0_57 = arith.constant 0 : index
    %78 = vector.load %arg6[%c0_55, %c0_56, %c0_57] : memref<1x100x64xf32, #tpu.memory_space<vmem>>, vector<1x100x64xf32>
    %79 = vector.shape_cast %78 : vector<1x100x64xf32> to vector<100x64xf32>
    %80 = vector.shape_cast %77 : vector<100x64xf32> to vector<1x100x64xf32>
    tpu.vector_store %arg6[%c0_55, %c0_56, %c0_57], %80 {strides = array<i32>} : memref<1x100x64xf32, #tpu.memory_space<vmem>>, vector<1x100x64xf32>,
    return
  }
  func.func @transform_0(%arg0: i32) -> (i32, i32, i32) {
    %c0_i32 = arith.constant 0 : i32
    %c0_i32_0 = arith.constant 0 : i32
    %c0_i32_1 = arith.constant 0 : i32
    return %arg0, %c0_i32, %c0_i32_0 : i32, i32, i32
  }
  func.func @transform_1(%arg0: i32) -> (i32, i32, i32) {
    %c0_i32 = arith.constant 0 : i32
    %c0_i32_0 = arith.constant 0 : i32
    %c0_i32_1 = arith.constant 0 : i32
    %c0_i32_2 = arith.constant 0 : i32
    return %c0_i32, %c0_i32_0, %c0_i32_1 : i32, i32, i32
  }
  func.func @transform_2(%arg0: i32) -> (i32, i32) {
    %c0_i32 = arith.constant 0 : i32
    %c0_i32_0 = arith.constant 0 : i32
    %c0_i32_1 = arith.constant 0 : i32
    return %c0_i32, %c0_i32_0 : i32, i32
  }
  func.func @transform_3(%arg0: i32) -> (i32, i32) {
    %c0_i32 = arith.constant 0 : i32
    %c0_i32_0 = arith.constant 0 : i32
    %c0_i32_1 = arith.constant 0 : i32
    return %c0_i32, %c0_i32_0 : i32, i32
  }
  func.func @transform_4(%arg0: i32) -> (i32, i32) {
    %c0_i32 = arith.constant 0 : i32
    %c0_i32_0 = arith.constant 0 : i32
    %c0_i32_1 = arith.constant 0 : i32
    return %c0_i32, %c0_i32_0 : i32, i32
  }
  func.func @transform_5(%arg0: i32) -> (i32, i32, i32) {
    %c0_i32 = arith.constant 0 : i32
    %c0_i32_0 = arith.constant 0 : i32
    %c0_i32_1 = arith.constant 0 : i32
    return %arg0, %c0_i32, %c0_i32_0 : i32, i32, i32
  }
}

module attributes {stable_mosaic.version = 11 : i64} {
  func.func @kernel(%arg0: i32, %arg1: memref<1x100x64xf32, #tpu.memory_space<vmem>>, %arg2: memref<9x64x128xbf16, #tpu.memory_space<vmem>>, %arg3: memref<1x128xf32, #tpu.memory_space<vmem>>, %arg4: memref<1x128xf32, #tpu.memory_space<vmem>>, %arg5: memref<36x67xf32, #tpu.memory_space<vmem>>, %arg6: memref<1x36x128xf32, #tpu.memory_space<vmem>>) attributes {dimension_semantics = [#tpu.dimension_semantics<parallel>], iteration_bounds = array<i64: 2>, scalar_prefetch = 0 : i64, scratch_operands = 0 : i64, tpu.core_type = #tpu.core_type<tc>, window_params = [{transform_indices = @transform_0, window_bounds = array<i64: 1, 100, 64>}, {pipeline_mode = #tpu.pipeline_mode<synchronous>, transform_indices = @transform_1, window_bounds = array<i64: 9, 64, 128>}, {pipeline_mode = #tpu.pipeline_mode<synchronous>, transform_indices = @transform_2, window_bounds = array<i64: 1, 128>}, {pipeline_mode = #tpu.pipeline_mode<synchronous>, transform_indices = @transform_3, window_bounds = array<i64: 1, 128>}, {pipeline_mode = #tpu.pipeline_mode<synchronous>, transform_indices = @transform_4, window_bounds = array<i64: 36, 67>}, {transform_indices = @transform_5, window_bounds = array<i64: 1, 36, 128>}]} {
    %c0 = arith.constant 0 : index
    %c0_0 = arith.constant 0 : index
    %c0_1 = arith.constant 0 : index
    %0 = vector.load %arg1[%c0, %c0_0, %c0_1] : memref<1x100x64xf32, #tpu.memory_space<vmem>>, vector<1x78x64xf32>
    %1 = vector.shape_cast %0 : vector<1x78x64xf32> to vector<78x64xf32>
    %2 = arith.truncf %1 : vector<78x64xf32> to vector<78x64xbf16>
    %c0_2 = arith.constant 0 : index
    %c0_3 = arith.constant 0 : index
    %c0_4 = arith.constant 0 : index
    %3 = vector.load %arg2[%c0_2, %c0_3, %c0_4] : memref<9x64x128xbf16, #tpu.memory_space<vmem>>, vector<1x64x128xbf16>
    %4 = vector.shape_cast %3 : vector<1x64x128xbf16> to vector<64x128xbf16>
    %cst = arith.constant dense<0.000000e+00> : vector<78x128xf32>
    %5 = tpu.matmul %2, %4, %cst {dimension_numbers = #tpu.dot_dimension_numbers<[1], [0], [0], [1], [0, 0, 1, 1], [], []>} : vector<78x64xbf16>, vector<64x128xbf16>, vector<78x128xf32> -> vector<78x128xf32>
    %c0_5 = arith.constant 0 : index
    %c1 = arith.constant 1 : index
    %c0_6 = arith.constant 0 : index
    %6 = vector.load %arg1[%c0_5, %c1, %c0_6] : memref<1x100x64xf32, #tpu.memory_space<vmem>>, vector<1x78x64xf32>
    %7 = vector.shape_cast %6 : vector<1x78x64xf32> to vector<78x64xf32>
    %8 = arith.truncf %7 : vector<78x64xf32> to vector<78x64xbf16>
    %c1_7 = arith.constant 1 : index
    %c0_8 = arith.constant 0 : index
    %c0_9 = arith.constant 0 : index
    %9 = vector.load %arg2[%c1_7, %c0_8, %c0_9] : memref<9x64x128xbf16, #tpu.memory_space<vmem>>, vector<1x64x128xbf16>
    %10 = vector.shape_cast %9 : vector<1x64x128xbf16> to vector<64x128xbf16>
    %cst_10 = arith.constant dense<0.000000e+00> : vector<78x128xf32>
    %11 = tpu.matmul %8, %10, %cst_10 {dimension_numbers = #tpu.dot_dimension_numbers<[1], [0], [0], [1], [0, 0, 1, 1], [], []>} : vector<78x64xbf16>, vector<64x128xbf16>, vector<78x128xf32> -> vector<78x128xf32>
    %12 = arith.addf %5, %11 : vector<78x128xf32>
    %c0_11 = arith.constant 0 : index
    %c2 = arith.constant 2 : index
    %c0_12 = arith.constant 0 : index
    %13 = vector.load %arg1[%c0_11, %c2, %c0_12] : memref<1x100x64xf32, #tpu.memory_space<vmem>>, vector<1x78x64xf32>
    %14 = vector.shape_cast %13 : vector<1x78x64xf32> to vector<78x64xf32>
    %15 = arith.truncf %14 : vector<78x64xf32> to vector<78x64xbf16>
    %c2_13 = arith.constant 2 : index
    %c0_14 = arith.constant 0 : index
    %c0_15 = arith.constant 0 : index
    %16 = vector.load %arg2[%c2_13, %c0_14, %c0_15] : memref<9x64x128xbf16, #tpu.memory_space<vmem>>, vector<1x64x128xbf16>
    %17 = vector.shape_cast %16 : vector<1x64x128xbf16> to vector<64x128xbf16>
    %cst_16 = arith.constant dense<0.000000e+00> : vector<78x128xf32>
    %18 = tpu.matmul %15, %17, %cst_16 {dimension_numbers = #tpu.dot_dimension_numbers<[1], [0], [0], [1], [0, 0, 1, 1], [], []>} : vector<78x64xbf16>, vector<64x128xbf16>, vector<78x128xf32> -> vector<78x128xf32>
    %19 = arith.addf %12, %18 : vector<78x128xf32>
    %c0_17 = arith.constant 0 : index
    %c10 = arith.constant 10 : index
    %c0_18 = arith.constant 0 : index
    %20 = vector.load %arg1[%c0_17, %c10, %c0_18] : memref<1x100x64xf32, #tpu.memory_space<vmem>>, vector<1x78x64xf32>
    %21 = vector.shape_cast %20 : vector<1x78x64xf32> to vector<78x64xf32>
    %22 = arith.truncf %21 : vector<78x64xf32> to vector<78x64xbf16>
    %c3 = arith.constant 3 : index
    %c0_19 = arith.constant 0 : index
    %c0_20 = arith.constant 0 : index
    %23 = vector.load %arg2[%c3, %c0_19, %c0_20] : memref<9x64x128xbf16, #tpu.memory_space<vmem>>, vector<1x64x128xbf16>
    %24 = vector.shape_cast %23 : vector<1x64x128xbf16> to vector<64x128xbf16>
    %cst_21 = arith.constant dense<0.000000e+00> : vector<78x128xf32>
    %25 = tpu.matmul %22, %24, %cst_21 {dimension_numbers = #tpu.dot_dimension_numbers<[1], [0], [0], [1], [0, 0, 1, 1], [], []>} : vector<78x64xbf16>, vector<64x128xbf16>, vector<78x128xf32> -> vector<78x128xf32>
    %26 = arith.addf %19, %25 : vector<78x128xf32>
    %c0_22 = arith.constant 0 : index
    %c11 = arith.constant 11 : index
    %c0_23 = arith.constant 0 : index
    %27 = vector.load %arg1[%c0_22, %c11, %c0_23] : memref<1x100x64xf32, #tpu.memory_space<vmem>>, vector<1x78x64xf32>
    %28 = vector.shape_cast %27 : vector<1x78x64xf32> to vector<78x64xf32>
    %29 = arith.truncf %28 : vector<78x64xf32> to vector<78x64xbf16>
    %c4 = arith.constant 4 : index
    %c0_24 = arith.constant 0 : index
    %c0_25 = arith.constant 0 : index
    %30 = vector.load %arg2[%c4, %c0_24, %c0_25] : memref<9x64x128xbf16, #tpu.memory_space<vmem>>, vector<1x64x128xbf16>
    %31 = vector.shape_cast %30 : vector<1x64x128xbf16> to vector<64x128xbf16>
    %cst_26 = arith.constant dense<0.000000e+00> : vector<78x128xf32>
    %32 = tpu.matmul %29, %31, %cst_26 {dimension_numbers = #tpu.dot_dimension_numbers<[1], [0], [0], [1], [0, 0, 1, 1], [], []>} : vector<78x64xbf16>, vector<64x128xbf16>, vector<78x128xf32> -> vector<78x128xf32>
    %33 = arith.addf %26, %32 : vector<78x128xf32>
    %c0_27 = arith.constant 0 : index
    %c12 = arith.constant 12 : index
    %c0_28 = arith.constant 0 : index
    %34 = vector.load %arg1[%c0_27, %c12, %c0_28] : memref<1x100x64xf32, #tpu.memory_space<vmem>>, vector<1x78x64xf32>
    %35 = vector.shape_cast %34 : vector<1x78x64xf32> to vector<78x64xf32>
    %36 = arith.truncf %35 : vector<78x64xf32> to vector<78x64xbf16>
    %c5 = arith.constant 5 : index
    %c0_29 = arith.constant 0 : index
    %c0_30 = arith.constant 0 : index
    %37 = vector.load %arg2[%c5, %c0_29, %c0_30] : memref<9x64x128xbf16, #tpu.memory_space<vmem>>, vector<1x64x128xbf16>
    %38 = vector.shape_cast %37 : vector<1x64x128xbf16> to vector<64x128xbf16>
    %cst_31 = arith.constant dense<0.000000e+00> : vector<78x128xf32>
    %39 = tpu.matmul %36, %38, %cst_31 {dimension_numbers = #tpu.dot_dimension_numbers<[1], [0], [0], [1], [0, 0, 1, 1], [], []>} : vector<78x64xbf16>, vector<64x128xbf16>, vector<78x128xf32> -> vector<78x128xf32>
    %40 = arith.addf %33, %39 : vector<78x128xf32>
    %c0_32 = arith.constant 0 : index
    %c20 = arith.constant 20 : index
    %c0_33 = arith.constant 0 : index
    %41 = vector.load %arg1[%c0_32, %c20, %c0_33] : memref<1x100x64xf32, #tpu.memory_space<vmem>>, vector<1x78x64xf32>
    %42 = vector.shape_cast %41 : vector<1x78x64xf32> to vector<78x64xf32>
    %43 = arith.truncf %42 : vector<78x64xf32> to vector<78x64xbf16>
    %c6 = arith.constant 6 : index
    %c0_34 = arith.constant 0 : index
    %c0_35 = arith.constant 0 : index
    %44 = vector.load %arg2[%c6, %c0_34, %c0_35] : memref<9x64x128xbf16, #tpu.memory_space<vmem>>, vector<1x64x128xbf16>
    %45 = vector.shape_cast %44 : vector<1x64x128xbf16> to vector<64x128xbf16>
    %cst_36 = arith.constant dense<0.000000e+00> : vector<78x128xf32>
    %46 = tpu.matmul %43, %45, %cst_36 {dimension_numbers = #tpu.dot_dimension_numbers<[1], [0], [0], [1], [0, 0, 1, 1], [], []>} : vector<78x64xbf16>, vector<64x128xbf16>, vector<78x128xf32> -> vector<78x128xf32>
    %47 = arith.addf %40, %46 : vector<78x128xf32>
    %c0_37 = arith.constant 0 : index
    %c21 = arith.constant 21 : index
    %c0_38 = arith.constant 0 : index
    %48 = vector.load %arg1[%c0_37, %c21, %c0_38] : memref<1x100x64xf32, #tpu.memory_space<vmem>>, vector<1x78x64xf32>
    %49 = vector.shape_cast %48 : vector<1x78x64xf32> to vector<78x64xf32>
    %50 = arith.truncf %49 : vector<78x64xf32> to vector<78x64xbf16>
    %c7 = arith.constant 7 : index
    %c0_39 = arith.constant 0 : index
    %c0_40 = arith.constant 0 : index
    %51 = vector.load %arg2[%c7, %c0_39, %c0_40] : memref<9x64x128xbf16, #tpu.memory_space<vmem>>, vector<1x64x128xbf16>
    %52 = vector.shape_cast %51 : vector<1x64x128xbf16> to vector<64x128xbf16>
    %cst_41 = arith.constant dense<0.000000e+00> : vector<78x128xf32>
    %53 = tpu.matmul %50, %52, %cst_41 {dimension_numbers = #tpu.dot_dimension_numbers<[1], [0], [0], [1], [0, 0, 1, 1], [], []>} : vector<78x64xbf16>, vector<64x128xbf16>, vector<78x128xf32> -> vector<78x128xf32>
    %54 = arith.addf %47, %53 : vector<78x128xf32>
    %c0_42 = arith.constant 0 : index
    %c22 = arith.constant 22 : index
    %c0_43 = arith.constant 0 : index
    %55 = vector.load %arg1[%c0_42, %c22, %c0_43] : memref<1x100x64xf32, #tpu.memory_space<vmem>>, vector<1x78x64xf32>
    %56 = vector.shape_cast %55 : vector<1x78x64xf32> to vector<78x64xf32>
    %57 = arith.truncf %56 : vector<78x64xf32> to vector<78x64xbf16>
    %c8 = arith.constant 8 : index
    %c0_44 = arith.constant 0 : index
    %c0_45 = arith.constant 0 : index
    %58 = vector.load %arg2[%c8, %c0_44, %c0_45] : memref<9x64x128xbf16, #tpu.memory_space<vmem>>, vector<1x64x128xbf16>
    %59 = vector.shape_cast %58 : vector<1x64x128xbf16> to vector<64x128xbf16>
    %cst_46 = arith.constant dense<0.000000e+00> : vector<78x128xf32>
    %60 = tpu.matmul %57, %59, %cst_46 {dimension_numbers = #tpu.dot_dimension_numbers<[1], [0], [0], [1], [0, 0, 1, 1], [], []>} : vector<78x64xbf16>, vector<64x128xbf16>, vector<78x128xf32> -> vector<78x128xf32>
    %61 = arith.addf %54, %60 : vector<78x128xf32>
    %c0_47 = arith.constant 0 : index
    %c0_48 = arith.constant 0 : index
    %62 = vector.load %arg3[%c0_47, %c0_48] : memref<1x128xf32, #tpu.memory_space<vmem>>, vector<1x128xf32>
    %63 = vector.broadcast %62 : vector<1x128xf32> to vector<78x128xf32>
    %64 = arith.mulf %61, %63 : vector<78x128xf32>
    %c0_49 = arith.constant 0 : index
    %c0_50 = arith.constant 0 : index
    %65 = vector.load %arg4[%c0_49, %c0_50] : memref<1x128xf32, #tpu.memory_space<vmem>>, vector<1x128xf32>
    %66 = vector.broadcast %65 : vector<1x128xf32> to vector<78x128xf32>
    %67 = arith.addf %64, %66 : vector<78x128xf32>
    %cst_51 = arith.constant 0.000000e+00 : f32
    %68 = vector.broadcast %cst_51 : f32 to vector<78x128xf32>
    %69 = arith.maximumf %67, %68 : vector<78x128xf32>
    %70 = vector.extract_strided_slice %69 {offsets = [0, 0], sizes = [77, 128], strides = [1, 1]} : vector<78x128xf32> to vector<77x128xf32>
    %71 = vector.extract_strided_slice %69 {offsets = [1, 0], sizes = [77, 128], strides = [1, 1]} : vector<78x128xf32> to vector<77x128xf32>
    %72 = arith.maximumf %70, %71 : vector<77x128xf32>
    %73 = vector.extract_strided_slice %72 {offsets = [0, 0], sizes = [67, 128], strides = [1, 1]} : vector<77x128xf32> to vector<67x128xf32>
    %74 = vector.extract_strided_slice %72 {offsets = [10, 0], sizes = [67, 128], strides = [1, 1]} : vector<77x128xf32> to vector<67x128xf32>
    %75 = arith.maximumf %73, %74 : vector<67x128xf32>
    %c0_52 = arith.constant 0 : index
    %c0_53 = arith.constant 0 : index
    %76 = vector.load %arg5[%c0_52, %c0_53] : memref<36x67xf32, #tpu.memory_space<vmem>>, vector<36x67xf32>
    %cst_54 = arith.constant dense<0.000000e+00> : vector<36x128xf32>
    %77 = tpu.matmul %76, %75, %cst_54 {dimension_numbers = #tpu.dot_dimension_numbers<[1], [0], [0], [1], [0, 0, 1, 1], [], []>} : vector<36x67xf32>, vector<67x128xf32>, vector<36x128xf32> -> vector<36x128xf32>
    %c0_55 = arith.constant 0 : index
    %c0_56 = arith.constant 0 : index
    %c0_57 = arith.constant 0 : index
    %78 = vector.load %arg6[%c0_55, %c0_56, %c0_57] : memref<1x36x128xf32, #tpu.memory_space<vmem>>, vector<1x36x128xf32>
    %79 = vector.shape_cast %78 : vector<1x36x128xf32> to vector<36x128xf32>
    %80 = vector.shape_cast %77 : vector<36x128xf32> to vector<1x36x128xf32>
    tpu.vector_store %arg6[%c0_55, %c0_56, %c0_57], %80 {strides = array<i32>} : memref<1x36x128xf32, #tpu.memory_space<vmem>>, vector<1x36x128xf32>,
    return
  }
  func.func @transform_0(%arg0: i32) -> (i32, i32, i32) {
    %c0_i32 = arith.constant 0 : i32
    %c0_i32_0 = arith.constant 0 : i32
    %c0_i32_1 = arith.constant 0 : i32
    return %arg0, %c0_i32, %c0_i32_0 : i32, i32, i32
  }
  func.func @transform_1(%arg0: i32) -> (i32, i32, i32) {
    %c0_i32 = arith.constant 0 : i32
    %c0_i32_0 = arith.constant 0 : i32
    %c0_i32_1 = arith.constant 0 : i32
    %c0_i32_2 = arith.constant 0 : i32
    return %c0_i32, %c0_i32_0, %c0_i32_1 : i32, i32, i32
  }
  func.func @transform_2(%arg0: i32) -> (i32, i32) {
    %c0_i32 = arith.constant 0 : i32
    %c0_i32_0 = arith.constant 0 : i32
    %c0_i32_1 = arith.constant 0 : i32
    return %c0_i32, %c0_i32_0 : i32, i32
  }
  func.func @transform_3(%arg0: i32) -> (i32, i32) {
    %c0_i32 = arith.constant 0 : i32
    %c0_i32_0 = arith.constant 0 : i32
    %c0_i32_1 = arith.constant 0 : i32
    return %c0_i32, %c0_i32_0 : i32, i32
  }
  func.func @transform_4(%arg0: i32) -> (i32, i32) {
    %c0_i32 = arith.constant 0 : i32
    %c0_i32_0 = arith.constant 0 : i32
    %c0_i32_1 = arith.constant 0 : i32
    return %c0_i32, %c0_i32_0 : i32, i32
  }
  func.func @transform_5(%arg0: i32) -> (i32, i32, i32) {
    %c0_i32 = arith.constant 0 : i32
    %c0_i32_0 = arith.constant 0 : i32
    %c0_i32_1 = arith.constant 0 : i32
    return %arg0, %c0_i32, %c0_i32_0 : i32, i32, i32
  }
}

module attributes {stable_mosaic.version = 11 : i64} {
  func.func @kernel(%arg0: i32, %arg1: memref<1x36x128xf32, #tpu.memory_space<vmem>>, %arg2: memref<9x128x256xbf16, #tpu.memory_space<vmem>>, %arg3: memref<1x256xf32, #tpu.memory_space<vmem>>, %arg4: memref<1x256xf32, #tpu.memory_space<vmem>>, %arg5: memref<1x15xf32, #tpu.memory_space<vmem>>, %arg6: memref<256x10xf32, #tpu.memory_space<vmem>>, %arg7: memref<1x10xf32, #tpu.memory_space<vmem>>, %arg8: memref<1x1x10xf32, #tpu.memory_space<vmem>>) attributes {dimension_semantics = [#tpu.dimension_semantics<parallel>], iteration_bounds = array<i64: 2>, scalar_prefetch = 0 : i64, scratch_operands = 0 : i64, tpu.core_type = #tpu.core_type<tc>, window_params = [{transform_indices = @transform_0, window_bounds = array<i64: 1, 36, 128>}, {pipeline_mode = #tpu.pipeline_mode<synchronous>, transform_indices = @transform_1, window_bounds = array<i64: 9, 128, 256>}, {pipeline_mode = #tpu.pipeline_mode<synchronous>, transform_indices = @transform_2, window_bounds = array<i64: 1, 256>}, {pipeline_mode = #tpu.pipeline_mode<synchronous>, transform_indices = @transform_3, window_bounds = array<i64: 1, 256>}, {pipeline_mode = #tpu.pipeline_mode<synchronous>, transform_indices = @transform_4, window_bounds = array<i64: 1, 15>}, {pipeline_mode = #tpu.pipeline_mode<synchronous>, transform_indices = @transform_5, window_bounds = array<i64: 256, 10>}, {pipeline_mode = #tpu.pipeline_mode<synchronous>, transform_indices = @transform_6, window_bounds = array<i64: 1, 10>}, {transform_indices = @transform_7, window_bounds = array<i64: 1, 1, 10>}]} {
    %c0 = arith.constant 0 : index
    %c0_0 = arith.constant 0 : index
    %c0_1 = arith.constant 0 : index
    %0 = vector.load %arg1[%c0, %c0_0, %c0_1] : memref<1x36x128xf32, #tpu.memory_space<vmem>>, vector<1x22x128xf32>
    %1 = vector.shape_cast %0 : vector<1x22x128xf32> to vector<22x128xf32>
    %2 = arith.truncf %1 : vector<22x128xf32> to vector<22x128xbf16>
    %c0_2 = arith.constant 0 : index
    %c0_3 = arith.constant 0 : index
    %c0_4 = arith.constant 0 : index
    %3 = vector.load %arg2[%c0_2, %c0_3, %c0_4] : memref<9x128x256xbf16, #tpu.memory_space<vmem>>, vector<1x128x256xbf16>
    %4 = vector.shape_cast %3 : vector<1x128x256xbf16> to vector<128x256xbf16>
    %cst = arith.constant dense<0.000000e+00> : vector<22x256xf32>
    %5 = tpu.matmul %2, %4, %cst {dimension_numbers = #tpu.dot_dimension_numbers<[1], [0], [0], [1], [0, 0, 1, 1], [], []>} : vector<22x128xbf16>, vector<128x256xbf16>, vector<22x256xf32> -> vector<22x256xf32>
    %c0_5 = arith.constant 0 : index
    %c1 = arith.constant 1 : index
    %c0_6 = arith.constant 0 : index
    %6 = vector.load %arg1[%c0_5, %c1, %c0_6] : memref<1x36x128xf32, #tpu.memory_space<vmem>>, vector<1x22x128xf32>
    %7 = vector.shape_cast %6 : vector<1x22x128xf32> to vector<22x128xf32>
    %8 = arith.truncf %7 : vector<22x128xf32> to vector<22x128xbf16>
    %c1_7 = arith.constant 1 : index
    %c0_8 = arith.constant 0 : index
    %c0_9 = arith.constant 0 : index
    %9 = vector.load %arg2[%c1_7, %c0_8, %c0_9] : memref<9x128x256xbf16, #tpu.memory_space<vmem>>, vector<1x128x256xbf16>
    %10 = vector.shape_cast %9 : vector<1x128x256xbf16> to vector<128x256xbf16>
    %cst_10 = arith.constant dense<0.000000e+00> : vector<22x256xf32>
    %11 = tpu.matmul %8, %10, %cst_10 {dimension_numbers = #tpu.dot_dimension_numbers<[1], [0], [0], [1], [0, 0, 1, 1], [], []>} : vector<22x128xbf16>, vector<128x256xbf16>, vector<22x256xf32> -> vector<22x256xf32>
    %12 = arith.addf %5, %11 : vector<22x256xf32>
    %c0_11 = arith.constant 0 : index
    %c2 = arith.constant 2 : index
    %c0_12 = arith.constant 0 : index
    %13 = vector.load %arg1[%c0_11, %c2, %c0_12] : memref<1x36x128xf32, #tpu.memory_space<vmem>>, vector<1x22x128xf32>
    %14 = vector.shape_cast %13 : vector<1x22x128xf32> to vector<22x128xf32>
    %15 = arith.truncf %14 : vector<22x128xf32> to vector<22x128xbf16>
    %c2_13 = arith.constant 2 : index
    %c0_14 = arith.constant 0 : index
    %c0_15 = arith.constant 0 : index
    %16 = vector.load %arg2[%c2_13, %c0_14, %c0_15] : memref<9x128x256xbf16, #tpu.memory_space<vmem>>, vector<1x128x256xbf16>
    %17 = vector.shape_cast %16 : vector<1x128x256xbf16> to vector<128x256xbf16>
    %cst_16 = arith.constant dense<0.000000e+00> : vector<22x256xf32>
    %18 = tpu.matmul %15, %17, %cst_16 {dimension_numbers = #tpu.dot_dimension_numbers<[1], [0], [0], [1], [0, 0, 1, 1], [], []>} : vector<22x128xbf16>, vector<128x256xbf16>, vector<22x256xf32> -> vector<22x256xf32>
    %19 = arith.addf %12, %18 : vector<22x256xf32>
    %c0_17 = arith.constant 0 : index
    %c6 = arith.constant 6 : index
    %c0_18 = arith.constant 0 : index
    %20 = vector.load %arg1[%c0_17, %c6, %c0_18] : memref<1x36x128xf32, #tpu.memory_space<vmem>>, vector<1x22x128xf32>
    %21 = vector.shape_cast %20 : vector<1x22x128xf32> to vector<22x128xf32>
    %22 = arith.truncf %21 : vector<22x128xf32> to vector<22x128xbf16>
    %c3 = arith.constant 3 : index
    %c0_19 = arith.constant 0 : index
    %c0_20 = arith.constant 0 : index
    %23 = vector.load %arg2[%c3, %c0_19, %c0_20] : memref<9x128x256xbf16, #tpu.memory_space<vmem>>, vector<1x128x256xbf16>
    %24 = vector.shape_cast %23 : vector<1x128x256xbf16> to vector<128x256xbf16>
    %cst_21 = arith.constant dense<0.000000e+00> : vector<22x256xf32>
    %25 = tpu.matmul %22, %24, %cst_21 {dimension_numbers = #tpu.dot_dimension_numbers<[1], [0], [0], [1], [0, 0, 1, 1], [], []>} : vector<22x128xbf16>, vector<128x256xbf16>, vector<22x256xf32> -> vector<22x256xf32>
    %26 = arith.addf %19, %25 : vector<22x256xf32>
    %c0_22 = arith.constant 0 : index
    %c7 = arith.constant 7 : index
    %c0_23 = arith.constant 0 : index
    %27 = vector.load %arg1[%c0_22, %c7, %c0_23] : memref<1x36x128xf32, #tpu.memory_space<vmem>>, vector<1x22x128xf32>
    %28 = vector.shape_cast %27 : vector<1x22x128xf32> to vector<22x128xf32>
    %29 = arith.truncf %28 : vector<22x128xf32> to vector<22x128xbf16>
    %c4 = arith.constant 4 : index
    %c0_24 = arith.constant 0 : index
    %c0_25 = arith.constant 0 : index
    %30 = vector.load %arg2[%c4, %c0_24, %c0_25] : memref<9x128x256xbf16, #tpu.memory_space<vmem>>, vector<1x128x256xbf16>
    %31 = vector.shape_cast %30 : vector<1x128x256xbf16> to vector<128x256xbf16>
    %cst_26 = arith.constant dense<0.000000e+00> : vector<22x256xf32>
    %32 = tpu.matmul %29, %31, %cst_26 {dimension_numbers = #tpu.dot_dimension_numbers<[1], [0], [0], [1], [0, 0, 1, 1], [], []>} : vector<22x128xbf16>, vector<128x256xbf16>, vector<22x256xf32> -> vector<22x256xf32>
    %33 = arith.addf %26, %32 : vector<22x256xf32>
    %c0_27 = arith.constant 0 : index
    %c8 = arith.constant 8 : index
    %c0_28 = arith.constant 0 : index
    %34 = vector.load %arg1[%c0_27, %c8, %c0_28] : memref<1x36x128xf32, #tpu.memory_space<vmem>>, vector<1x22x128xf32>
    %35 = vector.shape_cast %34 : vector<1x22x128xf32> to vector<22x128xf32>
    %36 = arith.truncf %35 : vector<22x128xf32> to vector<22x128xbf16>
    %c5 = arith.constant 5 : index
    %c0_29 = arith.constant 0 : index
    %c0_30 = arith.constant 0 : index
    %37 = vector.load %arg2[%c5, %c0_29, %c0_30] : memref<9x128x256xbf16, #tpu.memory_space<vmem>>, vector<1x128x256xbf16>
    %38 = vector.shape_cast %37 : vector<1x128x256xbf16> to vector<128x256xbf16>
    %cst_31 = arith.constant dense<0.000000e+00> : vector<22x256xf32>
    %39 = tpu.matmul %36, %38, %cst_31 {dimension_numbers = #tpu.dot_dimension_numbers<[1], [0], [0], [1], [0, 0, 1, 1], [], []>} : vector<22x128xbf16>, vector<128x256xbf16>, vector<22x256xf32> -> vector<22x256xf32>
    %40 = arith.addf %33, %39 : vector<22x256xf32>
    %c0_32 = arith.constant 0 : index
    %c12 = arith.constant 12 : index
    %c0_33 = arith.constant 0 : index
    %41 = vector.load %arg1[%c0_32, %c12, %c0_33] : memref<1x36x128xf32, #tpu.memory_space<vmem>>, vector<1x22x128xf32>
    %42 = vector.shape_cast %41 : vector<1x22x128xf32> to vector<22x128xf32>
    %43 = arith.truncf %42 : vector<22x128xf32> to vector<22x128xbf16>
    %c6_34 = arith.constant 6 : index
    %c0_35 = arith.constant 0 : index
    %c0_36 = arith.constant 0 : index
    %44 = vector.load %arg2[%c6_34, %c0_35, %c0_36] : memref<9x128x256xbf16, #tpu.memory_space<vmem>>, vector<1x128x256xbf16>
    %45 = vector.shape_cast %44 : vector<1x128x256xbf16> to vector<128x256xbf16>
    %cst_37 = arith.constant dense<0.000000e+00> : vector<22x256xf32>
    %46 = tpu.matmul %43, %45, %cst_37 {dimension_numbers = #tpu.dot_dimension_numbers<[1], [0], [0], [1], [0, 0, 1, 1], [], []>} : vector<22x128xbf16>, vector<128x256xbf16>, vector<22x256xf32> -> vector<22x256xf32>
    %47 = arith.addf %40, %46 : vector<22x256xf32>
    %c0_38 = arith.constant 0 : index
    %c13 = arith.constant 13 : index
    %c0_39 = arith.constant 0 : index
    %48 = vector.load %arg1[%c0_38, %c13, %c0_39] : memref<1x36x128xf32, #tpu.memory_space<vmem>>, vector<1x22x128xf32>
    %49 = vector.shape_cast %48 : vector<1x22x128xf32> to vector<22x128xf32>
    %50 = arith.truncf %49 : vector<22x128xf32> to vector<22x128xbf16>
    %c7_40 = arith.constant 7 : index
    %c0_41 = arith.constant 0 : index
    %c0_42 = arith.constant 0 : index
    %51 = vector.load %arg2[%c7_40, %c0_41, %c0_42] : memref<9x128x256xbf16, #tpu.memory_space<vmem>>, vector<1x128x256xbf16>
    %52 = vector.shape_cast %51 : vector<1x128x256xbf16> to vector<128x256xbf16>
    %cst_43 = arith.constant dense<0.000000e+00> : vector<22x256xf32>
    %53 = tpu.matmul %50, %52, %cst_43 {dimension_numbers = #tpu.dot_dimension_numbers<[1], [0], [0], [1], [0, 0, 1, 1], [], []>} : vector<22x128xbf16>, vector<128x256xbf16>, vector<22x256xf32> -> vector<22x256xf32>
    %54 = arith.addf %47, %53 : vector<22x256xf32>
    %c0_44 = arith.constant 0 : index
    %c14 = arith.constant 14 : index
    %c0_45 = arith.constant 0 : index
    %55 = vector.load %arg1[%c0_44, %c14, %c0_45] : memref<1x36x128xf32, #tpu.memory_space<vmem>>, vector<1x22x128xf32>
    %56 = vector.shape_cast %55 : vector<1x22x128xf32> to vector<22x128xf32>
    %57 = arith.truncf %56 : vector<22x128xf32> to vector<22x128xbf16>
    %c8_46 = arith.constant 8 : index
    %c0_47 = arith.constant 0 : index
    %c0_48 = arith.constant 0 : index
    %58 = vector.load %arg2[%c8_46, %c0_47, %c0_48] : memref<9x128x256xbf16, #tpu.memory_space<vmem>>, vector<1x128x256xbf16>
    %59 = vector.shape_cast %58 : vector<1x128x256xbf16> to vector<128x256xbf16>
    %cst_49 = arith.constant dense<0.000000e+00> : vector<22x256xf32>
    %60 = tpu.matmul %57, %59, %cst_49 {dimension_numbers = #tpu.dot_dimension_numbers<[1], [0], [0], [1], [0, 0, 1, 1], [], []>} : vector<22x128xbf16>, vector<128x256xbf16>, vector<22x256xf32> -> vector<22x256xf32>
    %61 = arith.addf %54, %60 : vector<22x256xf32>
    %c0_50 = arith.constant 0 : index
    %c0_51 = arith.constant 0 : index
    %62 = vector.load %arg3[%c0_50, %c0_51] : memref<1x256xf32, #tpu.memory_space<vmem>>, vector<1x256xf32>
    %63 = vector.broadcast %62 : vector<1x256xf32> to vector<22x256xf32>
    %64 = arith.mulf %61, %63 : vector<22x256xf32>
    %c0_52 = arith.constant 0 : index
    %c0_53 = arith.constant 0 : index
    %65 = vector.load %arg4[%c0_52, %c0_53] : memref<1x256xf32, #tpu.memory_space<vmem>>, vector<1x256xf32>
    %66 = vector.broadcast %65 : vector<1x256xf32> to vector<22x256xf32>
    %67 = arith.addf %64, %66 : vector<22x256xf32>
    %cst_54 = arith.constant 0.000000e+00 : f32
    %68 = vector.broadcast %cst_54 : f32 to vector<22x256xf32>
    %69 = arith.maximumf %67, %68 : vector<22x256xf32>
    %70 = vector.extract_strided_slice %69 {offsets = [0, 0], sizes = [21, 256], strides = [1, 1]} : vector<22x256xf32> to vector<21x256xf32>
    %71 = vector.extract_strided_slice %69 {offsets = [1, 0], sizes = [21, 256], strides = [1, 1]} : vector<22x256xf32> to vector<21x256xf32>
    %72 = arith.maximumf %70, %71 : vector<21x256xf32>
    %73 = vector.extract_strided_slice %72 {offsets = [0, 0], sizes = [15, 256], strides = [1, 1]} : vector<21x256xf32> to vector<15x256xf32>
    %74 = vector.extract_strided_slice %72 {offsets = [6, 0], sizes = [15, 256], strides = [1, 1]} : vector<21x256xf32> to vector<15x256xf32>
    %75 = arith.maximumf %73, %74 : vector<15x256xf32>
    %c0_55 = arith.constant 0 : index
    %c0_56 = arith.constant 0 : index
    %76 = vector.load %arg5[%c0_55, %c0_56] : memref<1x15xf32, #tpu.memory_space<vmem>>, vector<1x15xf32>
    %cst_57 = arith.constant dense<0.000000e+00> : vector<1x256xf32>
    %77 = tpu.matmul %76, %75, %cst_57 {dimension_numbers = #tpu.dot_dimension_numbers<[1], [0], [0], [1], [0, 0, 1, 1], [], []>} : vector<1x15xf32>, vector<15x256xf32>, vector<1x256xf32> -> vector<1x256xf32>
    %c0_58 = arith.constant 0 : index
    %c0_59 = arith.constant 0 : index
    %78 = vector.load %arg6[%c0_58, %c0_59] : memref<256x10xf32, #tpu.memory_space<vmem>>, vector<256x10xf32>
    %cst_60 = arith.constant dense<0.000000e+00> : vector<1x10xf32>
    %79 = tpu.matmul %77, %78, %cst_60 {dimension_numbers = #tpu.dot_dimension_numbers<[1], [0], [0], [1], [0, 0, 1, 1], [], []>} : vector<1x256xf32>, vector<256x10xf32>, vector<1x10xf32> -> vector<1x10xf32>
    %c0_61 = arith.constant 0 : index
    %c0_62 = arith.constant 0 : index
    %80 = vector.load %arg7[%c0_61, %c0_62] : memref<1x10xf32, #tpu.memory_space<vmem>>, vector<1x10xf32>
    %81 = arith.addf %79, %80 : vector<1x10xf32>
    %c0_63 = arith.constant 0 : index
    %c0_64 = arith.constant 0 : index
    %c0_65 = arith.constant 0 : index
    %82 = vector.load %arg8[%c0_63, %c0_64, %c0_65] : memref<1x1x10xf32, #tpu.memory_space<vmem>>, vector<1x1x10xf32>
    %83 = vector.shape_cast %82 : vector<1x1x10xf32> to vector<1x10xf32>
    %84 = vector.shape_cast %81 : vector<1x10xf32> to vector<1x1x10xf32>
    tpu.vector_store %arg8[%c0_63, %c0_64, %c0_65], %84 {strides = array<i32>} : memref<1x1x10xf32, #tpu.memory_space<vmem>>, vector<1x1x10xf32>,
    return
  }
  func.func @transform_0(%arg0: i32) -> (i32, i32, i32) {
    %c0_i32 = arith.constant 0 : i32
    %c0_i32_0 = arith.constant 0 : i32
    %c0_i32_1 = arith.constant 0 : i32
    return %arg0, %c0_i32, %c0_i32_0 : i32, i32, i32
  }
  func.func @transform_1(%arg0: i32) -> (i32, i32, i32) {
    %c0_i32 = arith.constant 0 : i32
    %c0_i32_0 = arith.constant 0 : i32
    %c0_i32_1 = arith.constant 0 : i32
    %c0_i32_2 = arith.constant 0 : i32
    return %c0_i32, %c0_i32_0, %c0_i32_1 : i32, i32, i32
  }
  func.func @transform_2(%arg0: i32) -> (i32, i32) {
    %c0_i32 = arith.constant 0 : i32
    %c0_i32_0 = arith.constant 0 : i32
    %c0_i32_1 = arith.constant 0 : i32
    return %c0_i32, %c0_i32_0 : i32, i32
  }
  func.func @transform_3(%arg0: i32) -> (i32, i32) {
    %c0_i32 = arith.constant 0 : i32
    %c0_i32_0 = arith.constant 0 : i32
    %c0_i32_1 = arith.constant 0 : i32
    return %c0_i32, %c0_i32_0 : i32, i32
  }
  func.func @transform_4(%arg0: i32) -> (i32, i32) {
    %c0_i32 = arith.constant 0 : i32
    %c0_i32_0 = arith.constant 0 : i32
    %c0_i32_1 = arith.constant 0 : i32
    return %c0_i32, %c0_i32_0 : i32, i32
  }
  func.func @transform_5(%arg0: i32) -> (i32, i32) {
    %c0_i32 = arith.constant 0 : i32
    %c0_i32_0 = arith.constant 0 : i32
    %c0_i32_1 = arith.constant 0 : i32
    return %c0_i32, %c0_i32_0 : i32, i32
  }
  func.func @transform_6(%arg0: i32) -> (i32, i32) {
    %c0_i32 = arith.constant 0 : i32
    %c0_i32_0 = arith.constant 0 : i32
    %c0_i32_1 = arith.constant 0 : i32
    return %c0_i32, %c0_i32_0 : i32, i32
  }
  func.func @transform_7(%arg0: i32) -> (i32, i32, i32) {
    %c0_i32 = arith.constant 0 : i32
    %c0_i32_0 = arith.constant 0 : i32
    %c0_i32_1 = arith.constant 0 : i32
    return %arg0, %c0_i32, %c0_i32_0 : i32, i32, i32
  }
}

</mosaic_0001>

<llo_original>
// kernel: toy_model_forward.4
$region0: #{toy_model_forward.4}
  #allocation0 [shape = 'u32[]', space=smem, size = 0x4, offset = 0x4, fixed_abs, tag = 'smem constant byte address 0x4 - core index']
  #allocation1 [shape = 'u32[72,128]{1,0:T(1,128)}', space=vmem, size = 0x9000, scoped, tag = 'internal scratch']
  %s0 = inlined_call_operand.vmem [shape: f32[2,100,64], index: 0, kind: input, shape index: {}]
  %s1 = inlined_call_operand.vmem [shape: bf16[9,64,128], index: 1, kind: input, shape index: {}]
  %s2 = inlined_call_operand.vmem [shape: f32[1,128], index: 2, kind: input, shape index: {}]
  %s3 = inlined_call_operand.vmem [shape: f32[1,128], index: 3, kind: input, shape index: {}]
  %s4 = inlined_call_operand.hbm [shape: f32[36,67], index: 4, kind: input, shape index: {}]
  %s5 = inlined_call_operand.vmem [shape: f32[2,36,128], index: 5, kind: output, shape index: {}]
  %s6 = sld [smem:[#allocation0]]
  $region57: #{toy_model_forward.4} parent=0
    _
  %s8 = ssub.s32 1, %s6
  %s9 = scalar_select 0, %s8, %s6
  $region1: #{toy_model_forward.4} parent=0
    #allocation2 [shape = 'u8[20480]{0}', space=vmem, size = 0x5000, scoped, tag = 'input window, operand 4, single buffered']
    #allocation3 [shape = 's32[2]{0}', space=sflag, size = 0x8, scoped, tag = 'scoped memory for toy_model_forward.4']
    %10 = vsyncpa [#allocation3], 0
    loop: start=0, step=1, limit=4
    $region2: #{toy_model_forward.4} parent=1 // loop_pre_header
      _
    $region3: #{toy_model_forward.4} parent=1 // loop_header
      %s12 = sphi 0, %s16
      %p13 = scmp.ge.s32.totalorder %s12, 4
      %s22 = sphi 0, %s24
      %s25 = sphi 0, %s22
      %s26 = sphi 0, %s25
      %s42 = sphi 0, %s26
      %s46 = sphi 0, %s46
      %s48 = sphi 0, %s46
      %s49 = sphi 0, %s48
      %s63 = sphi 0, %s49
      %s67 = sphi 0, %s67
      %s69 = sphi 0, %s67
      %s70 = sphi 0, %s69
      %s84 = sphi 0, %s70
      %s88 = sphi 0, %s88
      %s90 = sphi 0, %s88
      %s91 = sphi 0, %s90
      %s105 = sphi 0, %s91
      %s109 = sphi 0, %s109
      %s111 = sphi 0, %s109
      %s112 = sphi 0, %s111
      %s126 = sphi 0, %s112
      %s132 = sphi 0, %s134
      %s135 = sphi 0, %s132
      %s136 = sphi 0, %s135
      %s152 = sphi 0, %s136
    $region4: #{toy_model_forward.4} parent=1 // loop_header_branch
      %15 = sbr.rel (%p13) target = $region8
    $region5: #{toy_model_forward.4} parent=1 // loop_body
      %s17 = ssub.s32 %s12, 1
      %s18 = ssub.s32 %s12, 2
      %s19 = sadd.s32 %s12, 1
      %s20 = ssub.s32 %s12, %s19
      %p21 = scmp.eq.s32.totalorder %s20, 0
      %s23 = sadd.s32 %s22, 1
      %s24 = scalar_select %p21, %s22, %s23
      %p27 = pneg %p21
      %p28 = scmp.eq.s32.totalorder %s12, 1
      %p29 = por %p27, %p28
      %p30 = scmp.ne.s32.totalorder %s22, %s25
      %p31 = scmp.eq.s32.totalorder %s12, 0
      %p32 = por %p30, %p31
      %p33 = scmp.ne.s32.totalorder %s22, %s25
      %p34 = scmp.eq.s32.totalorder %s17, 1
      %p35 = por %p33, %p34
      %p36 = scmp.ne.s32.totalorder %s25, %s26
      %p37 = scmp.eq.s32.totalorder %s17, 0
      %p38 = por %p36, %p37
      %p39 = scmp.ne.s32.totalorder %s25, %s26
      %p40 = scmp.eq.s32.totalorder %s18, 1
      %p41 = por %p39, %p40
      %p43 = scmp.ne.s32.totalorder %s26, %s42
      %p44 = scmp.eq.s32.totalorder %s18, 0
      %p45 = por %p43, %p44
      %s47 = sadd.s32 %s46, 1
      %p50 = scmp.eq.s32.totalorder %s12, 1
      %p51 = scmp.ne.s32.totalorder %s46, %s48
      %p52 = scmp.eq.s32.totalorder %s12, 0
      %p53 = por %p51, %p52
      %p54 = scmp.ne.s32.totalorder %s46, %s48
      %p55 = scmp.eq.s32.totalorder %s17, 1
      %p56 = por %p54, %p55
      %p57 = scmp.ne.s32.totalorder %s48, %s49
      %p58 = scmp.eq.s32.totalorder %s17, 0
      %p59 = por %p57, %p58
      %p60 = scmp.ne.s32.totalorder %s48, %s49
      %p61 = scmp.eq.s32.totalorder %s18, 1
      %p62 = por %p60, %p61
      %p64 = scmp.ne.s32.totalorder %s49, %s63
      %p65 = scmp.eq.s32.totalorder %s18, 0
      %p66 = por %p64, %p65
      %s68 = sadd.s32 %s67, 1
      %p71 = scmp.eq.s32.totalorder %s12, 1
      %p72 = scmp.ne.s32.totalorder %s67, %s69
      %p73 = scmp.eq.s32.totalorder %s12, 0
      %p74 = por %p72, %p73
      %p75 = scmp.ne.s32.totalorder %s67, %s69
      %p76 = scmp.eq.s32.totalorder %s17, 1
      %p77 = por %p75, %p76
      %p78 = scmp.ne.s32.totalorder %s69, %s70
      %p79 = scmp.eq.s32.totalorder %s17, 0
      %p80 = por %p78, %p79
      %p81 = scmp.ne.s32.totalorder %s69, %s70
      %p82 = scmp.eq.s32.totalorder %s18, 1
      %p83 = por %p81, %p82
      %p85 = scmp.ne.s32.totalorder %s70, %s84
      %p86 = scmp.eq.s32.totalorder %s18, 0
      %p87 = por %p85, %p86
      %s89 = sadd.s32 %s88, 1
      %p92 = scmp.eq.s32.totalorder %s12, 1
      %p93 = scmp.ne.s32.totalorder %s88, %s90
      %p94 = scmp.eq.s32.totalorder %s12, 0
      %p95 = por %p93, %p94
      %p96 = scmp.ne.s32.totalorder %s88, %s90
      %p97 = scmp.eq.s32.totalorder %s17, 1
      %p98 = por %p96, %p97
      %p99 = scmp.ne.s32.totalorder %s90, %s91
      %p100 = scmp.eq.s32.totalorder %s17, 0
      %p101 = por %p99, %p100
      %p102 = scmp.ne.s32.totalorder %s90, %s91
      %p103 = scmp.eq.s32.totalorder %s18, 1
      %p104 = por %p102, %p103
      %p106 = scmp.ne.s32.totalorder %s91, %s105
      %p107 = scmp.eq.s32.totalorder %s18, 0
      %p108 = por %p106, %p107
      %s110 = sadd.s32 %s109, 1
      %p113 = scmp.eq.s32.totalorder %s12, 1
      %p114 = scmp.ne.s32.totalorder %s109, %s111
      %p115 = scmp.eq.s32.totalorder %s12, 0
      %p116 = por %p114, %p115
      %p117 = scmp.ne.s32.totalorder %s109, %s111
      %p118 = scmp.eq.s32.totalorder %s17, 1
      %p119 = por %p117, %p118
      %p120 = scmp.ne.s32.totalorder %s111, %s112
      %p121 = scmp.eq.s32.totalorder %s17, 0
      %p122 = por %p120, %p121
      %p123 = scmp.ne.s32.totalorder %s111, %s112
      %p124 = scmp.eq.s32.totalorder %s18, 1
      %p125 = por %p123, %p124
      %p127 = scmp.ne.s32.totalorder %s112, %s126
      %p128 = scmp.eq.s32.totalorder %s18, 0
      %p129 = por %p127, %p128
      %s130 = ssub.s32 %s12, %s19
      %p131 = scmp.eq.s32.totalorder %s130, 0
      %s133 = sadd.s32 %s132, 1
      %s134 = scalar_select %p131, %s132, %s133
      %p137 = pneg %p131
      %p138 = scmp.eq.s32.totalorder %s12, 1
      %p139 = por %p137, %p138
      %p140 = scmp.ne.s32.totalorder %s132, %s135
      %p141 = scmp.eq.s32.totalorder %s12, 0
      %p142 = por %p140, %p141
      %p143 = scmp.ne.s32.totalorder %s132, %s135
      %p144 = scmp.eq.s32.totalorder %s17, 1
      %p145 = por %p143, %p144
      %p146 = scmp.ne.s32.totalorder %s135, %s136
      %p147 = scmp.eq.s32.totalorder %s17, 0
      %p148 = por %p146, %p147
      %p149 = scmp.ne.s32.totalorder %s135, %s136
      %p150 = scmp.eq.s32.totalorder %s18, 1
      %p151 = por %p149, %p150
      %p153 = scmp.ne.s32.totalorder %s136, %s152
      %p154 = scmp.eq.s32.totalorder %s18, 0
      %p155 = por %p153, %p154
      %p156 = scmp.le.s32.totalorder 1, %s12
      %p157 = scmp.lt.s32.totalorder %s12, 3
      %p158 = pnand %p156, %p157
      %p159 = pneg %p158
      // Predicated region
      $region9: #{toy_model_forward.4} parent=5 // pred_check
        _
      $region10: #{toy_model_forward.4} parent=5 // pred_check_branch
        %161 = sbr.rel (%p158) target = $region12
      $region11: #{toy_model_forward.4} parent=5 // pred_region
        %s162 = ssub.s32 %s12, 1
        // Predicated region
        $region13: #{toy_model_forward.4} parent=11 // pred_check
          %p163 = pneg %p59
        $region14: #{toy_model_forward.4} parent=11 // pred_check_branch
          %165 = sbr.rel (%p163) target = $region16
        $region15: #{toy_model_forward.4} parent=11 // pred_region
          _
        $region16: #{toy_model_forward.4} parent=11 // pred_fallthru
          _
        // Predicated region
        $region17: #{toy_model_forward.4} parent=11 // pred_check
          %p166 = pneg %p80
        $region18: #{toy_model_forward.4} parent=11 // pred_check_branch
          %168 = sbr.rel (%p166) target = $region20
        $region19: #{toy_model_forward.4} parent=11 // pred_region
          _
        $region20: #{toy_model_forward.4} parent=11 // pred_fallthru
          _
        // Predicated region
        $region21: #{toy_model_forward.4} parent=11 // pred_check
          %p169 = pneg %p101
        $region22: #{toy_model_forward.4} parent=11 // pred_check_branch
          %171 = sbr.rel (%p169) target = $region24
        $region23: #{toy_model_forward.4} parent=11 // pred_region
          _
        $region24: #{toy_model_forward.4} parent=11 // pred_fallthru
          _
        // Predicated region
        $region25: #{toy_model_forward.4} parent=11 // pred_check
          %p172 = pneg %p122
        $region26: #{toy_model_forward.4} parent=11 // pred_check_branch
          %174 = sbr.rel (%p172) target = $region28
        $region27: #{toy_model_forward.4} parent=11 // pred_region
          %176 = vsyncadd [#allocation3], 0
          %s177 = sshll.u32 %s4, 4
          %s178 = int_to_ptr.hbm [resolvable:$true] %s177
          %s179 = sshll.u32 [#allocation2], 4
          %s180 = int_to_ptr.vmem [resolvable:$true] %s179
          %185 = dma.hbm_to_vmem [thread:$0]  %s178, 640, %s180, [#allocation3], 128, 128, 8
        $region28: #{toy_model_forward.4} parent=11 // pred_fallthru
          _
      $region12: #{toy_model_forward.4} parent=5 // pred_fallthru
        _
      %p186 = scmp.lt.s32.totalorder %s12, 2
      // Predicated region
      $region29: #{toy_model_forward.4} parent=5 // pred_check
        %p187 = pneg %p186
      $region30: #{toy_model_forward.4} parent=5 // pred_check_branch
        %189 = sbr.rel (%p187) target = $region32
      $region31: #{toy_model_forward.4} parent=5 // pred_region
        // Predicated region
        $region33: #{toy_model_forward.4} parent=31 // pred_check
          %p190 = pneg %p32
        $region34: #{toy_model_forward.4} parent=31 // pred_check_branch
          %192 = sbr.rel (%p190) target = $region36
        $region35: #{toy_model_forward.4} parent=31 // pred_region
          %p193 = scmp.lt.s32.totalorder %s12, 1
          %s194 = scalar_select %p193, %s12, 1
          %s195 = smul.addr %s194, 13
          %s196 = smul.addr %s195, 8
          %s197 = scalar_lea.vmem %s0, %s196
        $region36: #{toy_model_forward.4} parent=31 // pred_fallthru
          _
      $region32: #{toy_model_forward.4} parent=5 // pred_fallthru
        _
      %p198 = scmp.le.s32.totalorder 1, %s12
      %p199 = scmp.lt.s32.totalorder %s12, 3
      %p200 = pnand %p198, %p199
      %p201 = pneg %p200
      // Predicated region
      $region37: #{toy_model_forward.4} parent=5 // pred_check
        _
      $region38: #{toy_model_forward.4} parent=5 // pred_check_branch
        %203 = sbr.rel (%p200) target = $region40
      $region39: #{toy_model_forward.4} parent=5 // pred_region
        %s204 = ssub.s32 %s12, 1
        // Predicated region
        $region41: #{toy_model_forward.4} parent=39 // pred_check
          %p205 = pneg %p122
        $region42: #{toy_model_forward.4} parent=39 // pred_check_branch
          %207 = sbr.rel (%p205) target = $region44
        $region43: #{toy_model_forward.4} parent=39 // pred_region
          %209 = dma.done [#allocation3], 640
        $region44: #{toy_model_forward.4} parent=39 // pred_fallthru
          _
        %p210 = scmp.lt.s32.totalorder %s17, 1
        %s211 = scalar_select %p210, %s17, 1
        %s212 = smul.addr %s211, 13
        %s213 = smul.addr %s212, 8
        %s214 = scalar_lea.vmem %s0, %s213
        %p215 = pneg %p38
        %p216 = pneg %p35
        %p217 = pneg %p59
        %p218 = pneg %p56
        %p219 = pneg %p80
        %p220 = pneg %p77
        %p221 = pneg %p101
        %p222 = pneg %p98
        %p223 = pneg %p122
        %p224 = pneg %p119
        %p225 = pneg %p148
        %p226 = pneg %p145
        %p227 = scmp.lt.s32.totalorder %s17, 1
        %s228 = scalar_select %p227, %s17, 1
        %s229 = smul.addr %s228, 5
        %s230 = smul.addr %s229, 8
        %s231 = scalar_lea.vmem %s5, %s230
        %p232 = scmp.lt.s32.totalorder %s17, 1
        %s233 = scalar_select %p232, %s17, 1
        %s234 = smul.addr %s233, 13
        %s235 = smul.addr %s234, 8
        %s236 = scalar_lea.vmem %s0, %s235
        %p237 = scmp.lt.s32.totalorder %s17, 1
        %s238 = scalar_select %p237, %s17, 1
        %s239 = smul.addr %s238, 5
        %s240 = smul.addr %s239, 8
        %s241 = scalar_lea.vmem %s5, %s240
        %v243 = vld [vmem:[%s236] sm:$0xff]
        %v244 = vld [vmem:[%s236 + $0x8] sm:$0xff]
        %v245 = vld [vmem:[%s236 + $0x10] sm:$0xff]
        %v246 = vld [vmem:[%s236 + $0x18] sm:$0xff]
        %v247 = vld [vmem:[%s236 + $0x20] sm:$0xff]
        %v248 = vld [vmem:[%s236 + $0x28] sm:$0xff]
        %v249 = vld [vmem:[%s236 + $0x30] sm:$0xff]
        %v250 = vld [vmem:[%s236 + $0x38] sm:$0xff]
        %v251 = vld [vmem:[%s236 + $0x40] sm:$0xff]
        %v252 = vld [vmem:[%s236 + $0x48] sm:$0x3f]
        %v253 = vpack.c.bf16 %v244, %v243
        %v254 = vpack.c.bf16 %v246, %v245
        %v255 = vpack.c.bf16 %v248, %v247
        %v256 = vpack.c.bf16 %v250, %v249
        %v257 = vpack.c.bf16 %v252, %v251
        %v258 = vld [vmem:[%s1] sm:$0xf]
        %v259 = vld [vmem:[%s1 + $0x4] sm:$0xf]
        %v260 = vld [vmem:[%s1 + $0x8] sm:$0xf]
        %v261 = vld [vmem:[%s1 + $0xc] sm:$0xf]
        %v262 = vld [vmem:[%s1 + $0x10] sm:$0xf]
        %v263 = vld [vmem:[%s1 + $0x14] sm:$0xf]
        %v264 = vld [vmem:[%s1 + $0x18] sm:$0xf]
        %v265 = vld [vmem:[%s1 + $0x1c] sm:$0xf]
        %v266 = vld [vmem:[%s236 + $0x1] sm:$0xff]
        %v267 = vld [vmem:[%s236 + $0x9] sm:$0xff]
        %v268 = vld [vmem:[%s236 + $0x11] sm:$0xff]
        %v269 = vld [vmem:[%s236 + $0x19] sm:$0xff]
        %v270 = vld [vmem:[%s236 + $0x21] sm:$0xff]
        %v271 = vld [vmem:[%s236 + $0x29] sm:$0xff]
        %v272 = vld [vmem:[%s236 + $0x31] sm:$0xff]
        %v273 = vld [vmem:[%s236 + $0x39] sm:$0xff]
        %v274 = vld [vmem:[%s236 + $0x41] sm:$0xff]
        %v275 = vld [vmem:[%s236 + $0x49] sm:$0x3f]
        %v276 = vpack.c.bf16 %v267, %v266
        %v277 = vpack.c.bf16 %v269, %v268
        %v278 = vpack.c.bf16 %v271, %v270
        %v279 = vpack.c.bf16 %v273, %v272
        %v280 = vpack.c.bf16 %v275, %v274
        %s281 = scalar_lea.vmem %s1, 32
        %v282 = vld [vmem:[%s281] sm:$0xf]
        %v283 = vld [vmem:[%s281 + $0x4] sm:$0xf]
        %v284 = vld [vmem:[%s281 + $0x8] sm:$0xf]
        %v285 = vld [vmem:[%s281 + $0xc] sm:$0xf]
        %v286 = vld [vmem:[%s281 + $0x10] sm:$0xf]
        %v287 = vld [vmem:[%s281 + $0x14] sm:$0xf]
        %v288 = vld [vmem:[%s281 + $0x18] sm:$0xf]
        %v289 = vld [vmem:[%s281 + $0x1c] sm:$0xf]
        %v298 = vunpack.c.l.b16 %v282
        %v299 = vunpack.c.l.b16 %v283
        %v300 = vunpack.c.l.b16 %v284
        %v301 = vunpack.c.l.b16 %v285
        %v302 = vunpack.c.l.b16 %v286
        %v303 = vunpack.c.l.b16 %v287
        %v304 = vunpack.c.l.b16 %v288
        %v305 = vunpack.c.l.b16 %v289
        %v306 = vpack.c.b16 %v299, %v298
        %v307 = vpack.c.b16 %v301, %v300
        %v308 = vpack.c.b16 %v303, %v302
        %v309 = vpack.c.b16 %v305, %v304
        %vm314 = vcmask 523264
        %v316 = vsel %vm314, %v276, 0
        %v319 = vsel %vm314, %v277, 0
        %v322 = vsel %vm314, %v278, 0
        %v325 = vsel %vm314, %v279, 0
        %v328 = vsel %vm314, %v280, 0
        %330 = vmatpush.bf16.msra.mxu0 0
        %331 = vmatpush.bf16.msra.mxu0 0
        %332 = vmatpush.bf16.msra.mxu0 0
        %333 = vmatpush.bf16.msra.mxu0 0
        %334 = vmatpush.bf16.msra.mxu0 %v309
        %335 = vmatpush.bf16.msra.mxu0 %v308
        %336 = vmatpush.bf16.msra.mxu0 %v307
        %337 = vmatpush.bf16.msra.mxu0 %v306
        %338 = vmatmul.bf16.gmra.mxu0 %v316
        %v339 = vpop.f32.mrf.mxu0
        %v340 = vadd.f32 0.0, %v339
        %v341 = vpop.f32.mrf.mxu0
        %v342 = vadd.f32 0.0, %v341
        %343 = vmatmul.bf16.gmra.mxu0 %v319
        %v344 = vpop.f32.mrf.mxu0
        %v345 = vadd.f32 0.0, %v344
        %v346 = vpop.f32.mrf.mxu0
        %v347 = vadd.f32 0.0, %v346
        %348 = vmatmul.bf16.gmra.mxu0 %v322
        %v349 = vpop.f32.mrf.mxu0
        %v350 = vadd.f32 0.0, %v349
        %v351 = vpop.f32.mrf.mxu0
        %v352 = vadd.f32 0.0, %v351
        %353 = vmatmul.bf16.gmra.mxu0 %v325
        %v354 = vpop.f32.mrf.mxu0
        %v355 = vadd.f32 0.0, %v354
        %v356 = vpop.f32.mrf.mxu0
        %v357 = vadd.f32 0.0, %v356
        %358 = vmatmul.bf16.gmra.mxu0 %v328
        %v359 = vpop.f32.mrf.mxu0
        %v360 = vadd.f32 0.0, %v359
        %v361 = vpop.f32.mrf.mxu0
        %v362 = vadd.f32 0.0, %v361
        %363 = vdwg.mxu0
        %v372 = vunpack.c.l.b16 %v258
        %v373 = vunpack.c.l.b16 %v259
        %v374 = vunpack.c.l.b16 %v260
        %v375 = vunpack.c.l.b16 %v261
        %v376 = vunpack.c.l.b16 %v262
        %v377 = vunpack.c.l.b16 %v263
        %v378 = vunpack.c.l.b16 %v264
        %v379 = vunpack.c.l.b16 %v265
        %v380 = vpack.c.b16 %v373, %v372
        %v381 = vpack.c.b16 %v375, %v374
        %v382 = vpack.c.b16 %v377, %v376
        %v383 = vpack.c.b16 %v379, %v378
        %v389 = vsel %vm314, %v253, 0
        %v392 = vsel %vm314, %v254, 0
        %v395 = vsel %vm314, %v255, 0
        %v398 = vsel %vm314, %v256, 0
        %v401 = vsel %vm314, %v257, 0
        %403 = vmatpush.bf16.msra.mxu0 0
        %404 = vmatpush.bf16.msra.mxu0 0
        %405 = vmatpush.bf16.msra.mxu0 0
        %406 = vmatpush.bf16.msra.mxu0 0
        %407 = vmatpush.bf16.msra.mxu0 %v383
        %408 = vmatpush.bf16.msra.mxu0 %v382
        %409 = vmatpush.bf16.msra.mxu0 %v381
        %410 = vmatpush.bf16.msra.mxu0 %v380
        %411 = vmatmul.bf16.gmra.mxu0 %v389
        %v412 = vpop.f32.mrf.mxu0
        %v413 = vadd.f32 %v340, %v412
        %v414 = vpop.f32.mrf.mxu0
        %v415 = vadd.f32 %v342, %v414
        %416 = vmatmul.bf16.gmra.mxu0 %v392
        %v417 = vpop.f32.mrf.mxu0
        %v418 = vadd.f32 %v345, %v417
        %v419 = vpop.f32.mrf.mxu0
        %v420 = vadd.f32 %v347, %v419
        %421 = vmatmul.bf16.gmra.mxu0 %v395
        %v422 = vpop.f32.mrf.mxu0
        %v423 = vadd.f32 %v350, %v422
        %v424 = vpop.f32.mrf.mxu0
        %v425 = vadd.f32 %v352, %v424
        %426 = vmatmul.bf16.gmra.mxu0 %v398
        %v427 = vpop.f32.mrf.mxu0
        %v428 = vadd.f32 %v355, %v427
        %v429 = vpop.f32.mrf.mxu0
        %v430 = vadd.f32 %v357, %v429
        %431 = vmatmul.bf16.gmra.mxu0 %v401
        %v432 = vpop.f32.mrf.mxu0
        %v433 = vadd.f32 %v360, %v432
        %v434 = vpop.f32.mrf.mxu0
        %v435 = vadd.f32 %v362, %v434
        %436 = vdwg.mxu0
        %v437 = vld [vmem:[%s236 + $0x2] sm:$0xff]
        %v438 = vld [vmem:[%s236 + $0xa] sm:$0xff]
        %v439 = vld [vmem:[%s236 + $0x12] sm:$0xff]
        %v440 = vld [vmem:[%s236 + $0x1a] sm:$0xff]
        %v441 = vld [vmem:[%s236 + $0x22] sm:$0xff]
        %v442 = vld [vmem:[%s236 + $0x2a] sm:$0xff]
        %v443 = vld [vmem:[%s236 + $0x32] sm:$0xff]
        %v444 = vld [vmem:[%s236 + $0x3a] sm:$0xff]
        %v445 = vld [vmem:[%s236 + $0x42] sm:$0xff]
        %v446 = vld [vmem:[%s236 + $0x4a] sm:$0x3f]
        %v447 = vpack.c.bf16 %v438, %v437
        %v448 = vpack.c.bf16 %v440, %v439
        %v449 = vpack.c.bf16 %v442, %v441
        %v450 = vpack.c.bf16 %v444, %v443
        %v451 = vpack.c.bf16 %v446, %v445
        %s452 = scalar_lea.vmem %s1, 64
        %v453 = vld [vmem:[%s452] sm:$0xf]
        %v454 = vld [vmem:[%s452 + $0x4] sm:$0xf]
        %v455 = vld [vmem:[%s452 + $0x8] sm:$0xf]
        %v456 = vld [vmem:[%s452 + $0xc] sm:$0xf]
        %v457 = vld [vmem:[%s452 + $0x10] sm:$0xf]
        %v458 = vld [vmem:[%s452 + $0x14] sm:$0xf]
        %v459 = vld [vmem:[%s452 + $0x18] sm:$0xf]
        %v460 = vld [vmem:[%s452 + $0x1c] sm:$0xf]
        %v469 = vunpack.c.l.b16 %v453
        %v470 = vunpack.c.l.b16 %v454
        %v471 = vunpack.c.l.b16 %v455
        %v472 = vunpack.c.l.b16 %v456
        %v473 = vunpack.c.l.b16 %v457
        %v474 = vunpack.c.l.b16 %v458
        %v475 = vunpack.c.l.b16 %v459
        %v476 = vunpack.c.l.b16 %v460
        %v477 = vpack.c.b16 %v470, %v469
        %v478 = vpack.c.b16 %v472, %v471
        %v479 = vpack.c.b16 %v474, %v473
        %v480 = vpack.c.b16 %v476, %v475
        %v486 = vsel %vm314, %v447, 0
        %v489 = vsel %vm314, %v448, 0
        %v492 = vsel %vm314, %v449, 0
        %v495 = vsel %vm314, %v450, 0
        %v498 = vsel %vm314, %v451, 0
        %500 = vmatpush.bf16.msra.mxu0 0
        %501 = vmatpush.bf16.msra.mxu0 0
        %502 = vmatpush.bf16.msra.mxu0 0
        %503 = vmatpush.bf16.msra.mxu0 0
        %504 = vmatpush.bf16.msra.mxu0 %v480
        %505 = vmatpush.bf16.msra.mxu0 %v479
        %506 = vmatpush.bf16.msra.mxu0 %v478
        %507 = vmatpush.bf16.msra.mxu0 %v477
        %508 = vmatmul.bf16.gmra.mxu0 %v486
        %v509 = vpop.f32.mrf.mxu0
        %v510 = vadd.f32 0.0, %v509
        %v511 = vpop.f32.mrf.mxu0
        %v512 = vadd.f32 0.0, %v511
        %513 = vmatmul.bf16.gmra.mxu0 %v489
        %v514 = vpop.f32.mrf.mxu0
        %v515 = vadd.f32 0.0, %v514
        %v516 = vpop.f32.mrf.mxu0
        %v517 = vadd.f32 0.0, %v516
        %518 = vmatmul.bf16.gmra.mxu0 %v492
        %v519 = vpop.f32.mrf.mxu0
        %v520 = vadd.f32 0.0, %v519
        %v521 = vpop.f32.mrf.mxu0
        %v522 = vadd.f32 0.0, %v521
        %523 = vmatmul.bf16.gmra.mxu0 %v495
        %v524 = vpop.f32.mrf.mxu0
        %v525 = vadd.f32 0.0, %v524
        %v526 = vpop.f32.mrf.mxu0
        %v527 = vadd.f32 0.0, %v526
        %528 = vmatmul.bf16.gmra.mxu0 %v498
        %v529 = vpop.f32.mrf.mxu0
        %v530 = vadd.f32 0.0, %v529
        %v531 = vpop.f32.mrf.mxu0
        %v532 = vadd.f32 0.0, %v531
        %533 = vdwg.mxu0
        %v534 = vadd.f32 %v413, %v510
        %v535 = vadd.f32 %v415, %v512
        %v536 = vadd.f32 %v418, %v515
        %v537 = vadd.f32 %v420, %v517
        %v538 = vadd.f32 %v423, %v520
        %v539 = vadd.f32 %v425, %v522
        %v540 = vadd.f32 %v428, %v525
        %v541 = vadd.f32 %v430, %v527
        %v542 = vadd.f32 %v433, %v530
        %v543 = vadd.f32 %v435, %v532
        %v544 = vld [vmem:[%s236 + $0xa] sm:$0xff]
        %v545 = vld [vmem:[%s236 + $0x12] sm:$0xff]
        %v546 = vld [vmem:[%s236 + $0x1a] sm:$0xff]
        %v547 = vld [vmem:[%s236 + $0x22] sm:$0xff]
        %v548 = vld [vmem:[%s236 + $0x2a] sm:$0xff]
        %v549 = vld [vmem:[%s236 + $0x32] sm:$0xff]
        %v550 = vld [vmem:[%s236 + $0x3a] sm:$0xff]
        %v551 = vld [vmem:[%s236 + $0x42] sm:$0xff]
        %v552 = vld [vmem:[%s236 + $0x4a] sm:$0xff]
        %v553 = vld [vmem:[%s236 + $0x52] sm:$0x3f]
        %v554 = vpack.c.bf16 %v545, %v544
        %v555 = vpack.c.bf16 %v547, %v546
        %v556 = vpack.c.bf16 %v549, %v548
        %v557 = vpack.c.bf16 %v551, %v550
        %v558 = vpack.c.bf16 %v553, %v552
        %s559 = scalar_lea.vmem %s1, 96
        %v560 = vld [vmem:[%s559] sm:$0xf]
        %v561 = vld [vmem:[%s559 + $0x4] sm:$0xf]
        %v562 = vld [vmem:[%s559 + $0x8] sm:$0xf]
        %v563 = vld [vmem:[%s559 + $0xc] sm:$0xf]
        %v564 = vld [vmem:[%s559 + $0x10] sm:$0xf]
        %v565 = vld [vmem:[%s559 + $0x14] sm:$0xf]
        %v566 = vld [vmem:[%s559 + $0x18] sm:$0xf]
        %v567 = vld [vmem:[%s559 + $0x1c] sm:$0xf]
        %v576 = vunpack.c.l.b16 %v560
        %v577 = vunpack.c.l.b16 %v561
        %v578 = vunpack.c.l.b16 %v562
        %v579 = vunpack.c.l.b16 %v563
        %v580 = vunpack.c.l.b16 %v564
        %v581 = vunpack.c.l.b16 %v565
        %v582 = vunpack.c.l.b16 %v566
        %v583 = vunpack.c.l.b16 %v567
        %v584 = vpack.c.b16 %v577, %v576
        %v585 = vpack.c.b16 %v579, %v578
        %v586 = vpack.c.b16 %v581, %v580
        %v587 = vpack.c.b16 %v583, %v582
        %v593 = vsel %vm314, %v554, 0
        %v596 = vsel %vm314, %v555, 0
        %v599 = vsel %vm314, %v556, 0
        %v602 = vsel %vm314, %v557, 0
        %v605 = vsel %vm314, %v558, 0
        %607 = vmatpush.bf16.msra.mxu0 0
        %608 = vmatpush.bf16.msra.mxu0 0
        %609 = vmatpush.bf16.msra.mxu0 0
        %610 = vmatpush.bf16.msra.mxu0 0
        %611 = vmatpush.bf16.msra.mxu0 %v587
        %612 = vmatpush.bf16.msra.mxu0 %v586
        %613 = vmatpush.bf16.msra.mxu0 %v585
        %614 = vmatpush.bf16.msra.mxu0 %v584
        %615 = vmatmul.bf16.gmra.mxu0 %v593
        %v616 = vpop.f32.mrf.mxu0
        %v617 = vadd.f32 0.0, %v616
        %v618 = vpop.f32.mrf.mxu0
        %v619 = vadd.f32 0.0, %v618
        %620 = vmatmul.bf16.gmra.mxu0 %v596
        %v621 = vpop.f32.mrf.mxu0
        %v622 = vadd.f32 0.0, %v621
        %v623 = vpop.f32.mrf.mxu0
        %v624 = vadd.f32 0.0, %v623
        %625 = vmatmul.bf16.gmra.mxu0 %v599
        %v626 = vpop.f32.mrf.mxu0
        %v627 = vadd.f32 0.0, %v626
        %v628 = vpop.f32.mrf.mxu0
        %v629 = vadd.f32 0.0, %v628
        %630 = vmatmul.bf16.gmra.mxu0 %v602
        %v631 = vpop.f32.mrf.mxu0
        %v632 = vadd.f32 0.0, %v631
        %v633 = vpop.f32.mrf.mxu0
        %v634 = vadd.f32 0.0, %v633
        %635 = vmatmul.bf16.gmra.mxu0 %v605
        %v636 = vpop.f32.mrf.mxu0
        %v637 = vadd.f32 0.0, %v636
        %v638 = vpop.f32.mrf.mxu0
        %v639 = vadd.f32 0.0, %v638
        %640 = vdwg.mxu0
        %v641 = vadd.f32 %v534, %v617
        %v642 = vadd.f32 %v535, %v619
        %v643 = vadd.f32 %v536, %v622
        %v644 = vadd.f32 %v537, %v624
        %v645 = vadd.f32 %v538, %v627
        %v646 = vadd.f32 %v539, %v629
        %v647 = vadd.f32 %v540, %v632
        %v648 = vadd.f32 %v541, %v634
        %v649 = vadd.f32 %v542, %v637
        %v650 = vadd.f32 %v543, %v639
        %v651 = vld [vmem:[%s236 + $0xb] sm:$0xff]
        %v652 = vld [vmem:[%s236 + $0x13] sm:$0xff]
        %v653 = vld [vmem:[%s236 + $0x1b] sm:$0xff]
        %v654 = vld [vmem:[%s236 + $0x23] sm:$0xff]
        %v655 = vld [vmem:[%s236 + $0x2b] sm:$0xff]
        %v656 = vld [vmem:[%s236 + $0x33] sm:$0xff]
        %v657 = vld [vmem:[%s236 + $0x3b] sm:$0xff]
        %v658 = vld [vmem:[%s236 + $0x43] sm:$0xff]
        %v659 = vld [vmem:[%s236 + $0x4b] sm:$0xff]
        %v660 = vld [vmem:[%s236 + $0x53] sm:$0x3f]
        %v661 = vpack.c.bf16 %v652, %v651
        %v662 = vpack.c.bf16 %v654, %v653
        %v663 = vpack.c.bf16 %v656, %v655
        %v664 = vpack.c.bf16 %v658, %v657
        %v665 = vpack.c.bf16 %v660, %v659
        %s666 = scalar_lea.vmem %s1, 128
        %v667 = vld [vmem:[%s666] sm:$0xf]
        %v668 = vld [vmem:[%s666 + $0x4] sm:$0xf]
        %v669 = vld [vmem:[%s666 + $0x8] sm:$0xf]
        %v670 = vld [vmem:[%s666 + $0xc] sm:$0xf]
        %v671 = vld [vmem:[%s666 + $0x10] sm:$0xf]
        %v672 = vld [vmem:[%s666 + $0x14] sm:$0xf]
        %v673 = vld [vmem:[%s666 + $0x18] sm:$0xf]
        %v674 = vld [vmem:[%s666 + $0x1c] sm:$0xf]
        %v683 = vunpack.c.l.b16 %v667
        %v684 = vunpack.c.l.b16 %v668
        %v685 = vunpack.c.l.b16 %v669
        %v686 = vunpack.c.l.b16 %v670
        %v687 = vunpack.c.l.b16 %v671
        %v688 = vunpack.c.l.b16 %v672
        %v689 = vunpack.c.l.b16 %v673
        %v690 = vunpack.c.l.b16 %v674
        %v691 = vpack.c.b16 %v684, %v683
        %v692 = vpack.c.b16 %v686, %v685
        %v693 = vpack.c.b16 %v688, %v687
        %v694 = vpack.c.b16 %v690, %v689
        %v700 = vsel %vm314, %v661, 0
        %v703 = vsel %vm314, %v662, 0
        %v706 = vsel %vm314, %v663, 0
        %v709 = vsel %vm314, %v664, 0
        %v712 = vsel %vm314, %v665, 0
        %714 = vmatpush.bf16.msra.mxu0 0
        %715 = vmatpush.bf16.msra.mxu0 0
        %716 = vmatpush.bf16.msra.mxu0 0
        %717 = vmatpush.bf16.msra.mxu0 0
        %718 = vmatpush.bf16.msra.mxu0 %v694
        %719 = vmatpush.bf16.msra.mxu0 %v693
        %720 = vmatpush.bf16.msra.mxu0 %v692
        %721 = vmatpush.bf16.msra.mxu0 %v691
        %722 = vmatmul.bf16.gmra.mxu0 %v700
        %v723 = vpop.f32.mrf.mxu0
        %v724 = vadd.f32 0.0, %v723
        %v725 = vpop.f32.mrf.mxu0
        %v726 = vadd.f32 0.0, %v725
        %727 = vmatmul.bf16.gmra.mxu0 %v703
        %v728 = vpop.f32.mrf.mxu0
        %v729 = vadd.f32 0.0, %v728
        %v730 = vpop.f32.mrf.mxu0
        %v731 = vadd.f32 0.0, %v730
        %732 = vmatmul.bf16.gmra.mxu0 %v706
        %v733 = vpop.f32.mrf.mxu0
        %v734 = vadd.f32 0.0, %v733
        %v735 = vpop.f32.mrf.mxu0
        %v736 = vadd.f32 0.0, %v735
        %737 = vmatmul.bf16.gmra.mxu0 %v709
        %v738 = vpop.f32.mrf.mxu0
        %v739 = vadd.f32 0.0, %v738
        %v740 = vpop.f32.mrf.mxu0
        %v741 = vadd.f32 0.0, %v740
        %742 = vmatmul.bf16.gmra.mxu0 %v712
        %v743 = vpop.f32.mrf.mxu0
        %v744 = vadd.f32 0.0, %v743
        %v745 = vpop.f32.mrf.mxu0
        %v746 = vadd.f32 0.0, %v745
        %747 = vdwg.mxu0
        %v748 = vadd.f32 %v641, %v724
        %v749 = vadd.f32 %v642, %v726
        %v750 = vadd.f32 %v643, %v729
        %v751 = vadd.f32 %v644, %v731
        %v752 = vadd.f32 %v645, %v734
        %v753 = vadd.f32 %v646, %v736
        %v754 = vadd.f32 %v647, %v739
        %v755 = vadd.f32 %v648, %v741
        %v756 = vadd.f32 %v649, %v744
        %v757 = vadd.f32 %v650, %v746
        %v758 = vld [vmem:[%s236 + $0xc] sm:$0xff]
        %v759 = vld [vmem:[%s236 + $0x14] sm:$0xff]
        %v760 = vld [vmem:[%s236 + $0x1c] sm:$0xff]
        %v761 = vld [vmem:[%s236 + $0x24] sm:$0xff]
        %v762 = vld [vmem:[%s236 + $0x2c] sm:$0xff]
        %v763 = vld [vmem:[%s236 + $0x34] sm:$0xff]
        %v764 = vld [vmem:[%s236 + $0x3c] sm:$0xff]
        %v765 = vld [vmem:[%s236 + $0x44] sm:$0xff]
        %v766 = vld [vmem:[%s236 + $0x4c] sm:$0xff]
        %v767 = vld [vmem:[%s236 + $0x54] sm:$0x3f]
        %v768 = vpack.c.bf16 %v759, %v758
        %v769 = vpack.c.bf16 %v761, %v760
        %v770 = vpack.c.bf16 %v763, %v762
        %v771 = vpack.c.bf16 %v765, %v764
        %v772 = vpack.c.bf16 %v767, %v766
        %s773 = scalar_lea.vmem %s1, 160
        %v774 = vld [vmem:[%s773] sm:$0xf]
        %v775 = vld [vmem:[%s773 + $0x4] sm:$0xf]
        %v776 = vld [vmem:[%s773 + $0x8] sm:$0xf]
        %v777 = vld [vmem:[%s773 + $0xc] sm:$0xf]
        %v778 = vld [vmem:[%s773 + $0x10] sm:$0xf]
        %v779 = vld [vmem:[%s773 + $0x14] sm:$0xf]
        %v780 = vld [vmem:[%s773 + $0x18] sm:$0xf]
        %v781 = vld [vmem:[%s773 + $0x1c] sm:$0xf]
        %v790 = vunpack.c.l.b16 %v774
        %v791 = vunpack.c.l.b16 %v775
        %v792 = vunpack.c.l.b16 %v776
        %v793 = vunpack.c.l.b16 %v777
        %v794 = vunpack.c.l.b16 %v778
        %v795 = vunpack.c.l.b16 %v779
        %v796 = vunpack.c.l.b16 %v780
        %v797 = vunpack.c.l.b16 %v781
        %v798 = vpack.c.b16 %v791, %v790
        %v799 = vpack.c.b16 %v793, %v792
        %v800 = vpack.c.b16 %v795, %v794
        %v801 = vpack.c.b16 %v797, %v796
        %v807 = vsel %vm314, %v768, 0
        %v810 = vsel %vm314, %v769, 0
        %v813 = vsel %vm314, %v770, 0
        %v816 = vsel %vm314, %v771, 0
        %v819 = vsel %vm314, %v772, 0
        %821 = vmatpush.bf16.msra.mxu0 0
        %822 = vmatpush.bf16.msra.mxu0 0
        %823 = vmatpush.bf16.msra.mxu0 0
        %824 = vmatpush.bf16.msra.mxu0 0
        %825 = vmatpush.bf16.msra.mxu0 %v801
        %826 = vmatpush.bf16.msra.mxu0 %v800
        %827 = vmatpush.bf16.msra.mxu0 %v799
        %828 = vmatpush.bf16.msra.mxu0 %v798
        %829 = vmatmul.bf16.gmra.mxu0 %v807
        %v830 = vpop.f32.mrf.mxu0
        %v831 = vadd.f32 0.0, %v830
        %v832 = vpop.f32.mrf.mxu0
        %v833 = vadd.f32 0.0, %v832
        %834 = vmatmul.bf16.gmra.mxu0 %v810
        %v835 = vpop.f32.mrf.mxu0
        %v836 = vadd.f32 0.0, %v835
        %v837 = vpop.f32.mrf.mxu0
        %v838 = vadd.f32 0.0, %v837
        %839 = vmatmul.bf16.gmra.mxu0 %v813
        %v840 = vpop.f32.mrf.mxu0
        %v841 = vadd.f32 0.0, %v840
        %v842 = vpop.f32.mrf.mxu0
        %v843 = vadd.f32 0.0, %v842
        %844 = vmatmul.bf16.gmra.mxu0 %v816
        %v845 = vpop.f32.mrf.mxu0
        %v846 = vadd.f32 0.0, %v845
        %v847 = vpop.f32.mrf.mxu0
        %v848 = vadd.f32 0.0, %v847
        %849 = vmatmul.bf16.gmra.mxu0 %v819
        %v850 = vpop.f32.mrf.mxu0
        %v851 = vadd.f32 0.0, %v850
        %v852 = vpop.f32.mrf.mxu0
        %v853 = vadd.f32 0.0, %v852
        %854 = vdwg.mxu0
        %v855 = vadd.f32 %v748, %v831
        %v856 = vadd.f32 %v749, %v833
        %v857 = vadd.f32 %v750, %v836
        %v858 = vadd.f32 %v751, %v838
        %v859 = vadd.f32 %v752, %v841
        %v860 = vadd.f32 %v753, %v843
        %v861 = vadd.f32 %v754, %v846
        %v862 = vadd.f32 %v755, %v848
        %v863 = vadd.f32 %v756, %v851
        %v864 = vadd.f32 %v757, %v853
        %v865 = vld [vmem:[%s236 + $0x14] sm:$0xff]
        %v866 = vld [vmem:[%s236 + $0x1c] sm:$0xff]
        %v867 = vld [vmem:[%s236 + $0x24] sm:$0xff]
        %v868 = vld [vmem:[%s236 + $0x2c] sm:$0xff]
        %v869 = vld [vmem:[%s236 + $0x34] sm:$0xff]
        %v870 = vld [vmem:[%s236 + $0x3c] sm:$0xff]
        %v871 = vld [vmem:[%s236 + $0x44] sm:$0xff]
        %v872 = vld [vmem:[%s236 + $0x4c] sm:$0xff]
        %v873 = vld [vmem:[%s236 + $0x54] sm:$0xff]
        %v874 = vld [vmem:[%s236 + $0x5c] sm:$0x3f]
        %v875 = vpack.c.bf16 %v866, %v865
        %v876 = vpack.c.bf16 %v868, %v867
        %v877 = vpack.c.bf16 %v870, %v869
        %v878 = vpack.c.bf16 %v872, %v871
        %v879 = vpack.c.bf16 %v874, %v873
        %s880 = scalar_lea.vmem %s1, 192
        %v881 = vld [vmem:[%s880] sm:$0xf]
        %v882 = vld [vmem:[%s880 + $0x4] sm:$0xf]
        %v883 = vld [vmem:[%s880 + $0x8] sm:$0xf]
        %v884 = vld [vmem:[%s880 + $0xc] sm:$0xf]
        %v885 = vld [vmem:[%s880 + $0x10] sm:$0xf]
        %v886 = vld [vmem:[%s880 + $0x14] sm:$0xf]
        %v887 = vld [vmem:[%s880 + $0x18] sm:$0xf]
        %v888 = vld [vmem:[%s880 + $0x1c] sm:$0xf]
        %v897 = vunpack.c.l.b16 %v881
        %v898 = vunpack.c.l.b16 %v882
        %v899 = vunpack.c.l.b16 %v883
        %v900 = vunpack.c.l.b16 %v884
        %v901 = vunpack.c.l.b16 %v885
        %v902 = vunpack.c.l.b16 %v886
        %v903 = vunpack.c.l.b16 %v887
        %v904 = vunpack.c.l.b16 %v888
        %v905 = vpack.c.b16 %v898, %v897
        %v906 = vpack.c.b16 %v900, %v899
        %v907 = vpack.c.b16 %v902, %v901
        %v908 = vpack.c.b16 %v904, %v903
        %v914 = vsel %vm314, %v875, 0
        %v917 = vsel %vm314, %v876, 0
        %v920 = vsel %vm314, %v877, 0
        %v923 = vsel %vm314, %v878, 0
        %v926 = vsel %vm314, %v879, 0
        %928 = vmatpush.bf16.msra.mxu0 0
        %929 = vmatpush.bf16.msra.mxu0 0
        %930 = vmatpush.bf16.msra.mxu0 0
        %931 = vmatpush.bf16.msra.mxu0 0
        %932 = vmatpush.bf16.msra.mxu0 %v908
        %933 = vmatpush.bf16.msra.mxu0 %v907
        %934 = vmatpush.bf16.msra.mxu0 %v906
        %935 = vmatpush.bf16.msra.mxu0 %v905
        %936 = vmatmul.bf16.gmra.mxu0 %v914
        %v937 = vpop.f32.mrf.mxu0
        %v938 = vadd.f32 0.0, %v937
        %v939 = vpop.f32.mrf.mxu0
        %v940 = vadd.f32 0.0, %v939
        %941 = vmatmul.bf16.gmra.mxu0 %v917
        %v942 = vpop.f32.mrf.mxu0
        %v943 = vadd.f32 0.0, %v942
        %v944 = vpop.f32.mrf.mxu0
        %v945 = vadd.f32 0.0, %v944
        %946 = vmatmul.bf16.gmra.mxu0 %v920
        %v947 = vpop.f32.mrf.mxu0
        %v948 = vadd.f32 0.0, %v947
        %v949 = vpop.f32.mrf.mxu0
        %v950 = vadd.f32 0.0, %v949
        %951 = vmatmul.bf16.gmra.mxu0 %v923
        %v952 = vpop.f32.mrf.mxu0
        %v953 = vadd.f32 0.0, %v952
        %v954 = vpop.f32.mrf.mxu0
        %v955 = vadd.f32 0.0, %v954
        %956 = vmatmul.bf16.gmra.mxu0 %v926
        %v957 = vpop.f32.mrf.mxu0
        %v958 = vadd.f32 0.0, %v957
        %v959 = vpop.f32.mrf.mxu0
        %v960 = vadd.f32 0.0, %v959
        %961 = vdwg.mxu0
        %v962 = vadd.f32 %v855, %v938
        %v963 = vadd.f32 %v856, %v940
        %v964 = vadd.f32 %v857, %v943
        %v965 = vadd.f32 %v858, %v945
        %v966 = vadd.f32 %v859, %v948
        %v967 = vadd.f32 %v860, %v950
        %v968 = vadd.f32 %v861, %v953
        %v969 = vadd.f32 %v862, %v955
        %v970 = vadd.f32 %v863, %v958
        %v971 = vadd.f32 %v864, %v960
        %v972 = vld [vmem:[%s236 + $0x15] sm:$0xff]
        %v973 = vld [vmem:[%s236 + $0x1d] sm:$0xff]
        %v974 = vld [vmem:[%s236 + $0x25] sm:$0xff]
        %v975 = vld [vmem:[%s236 + $0x2d] sm:$0xff]
        %v976 = vld [vmem:[%s236 + $0x35] sm:$0xff]
        %v977 = vld [vmem:[%s236 + $0x3d] sm:$0xff]
        %v978 = vld [vmem:[%s236 + $0x45] sm:$0xff]
        %v979 = vld [vmem:[%s236 + $0x4d] sm:$0xff]
        %v980 = vld [vmem:[%s236 + $0x55] sm:$0xff]
        %v981 = vld [vmem:[%s236 + $0x5d] sm:$0x3f]
        %v982 = vpack.c.bf16 %v973, %v972
        %v983 = vpack.c.bf16 %v975, %v974
        %v984 = vpack.c.bf16 %v977, %v976
        %v985 = vpack.c.bf16 %v979, %v978
        %v986 = vpack.c.bf16 %v981, %v980
        %s987 = scalar_lea.vmem %s1, 224
        %v988 = vld [vmem:[%s987] sm:$0xf]
        %v989 = vld [vmem:[%s987 + $0x4] sm:$0xf]
        %v990 = vld [vmem:[%s987 + $0x8] sm:$0xf]
        %v991 = vld [vmem:[%s987 + $0xc] sm:$0xf]
        %v992 = vld [vmem:[%s987 + $0x10] sm:$0xf]
        %v993 = vld [vmem:[%s987 + $0x14] sm:$0xf]
        %v994 = vld [vmem:[%s987 + $0x18] sm:$0xf]
        %v995 = vld [vmem:[%s987 + $0x1c] sm:$0xf]
        %v1004 = vunpack.c.l.b16 %v988
        %v1005 = vunpack.c.l.b16 %v989
        %v1006 = vunpack.c.l.b16 %v990
        %v1007 = vunpack.c.l.b16 %v991
        %v1008 = vunpack.c.l.b16 %v992
        %v1009 = vunpack.c.l.b16 %v993
        %v1010 = vunpack.c.l.b16 %v994
        %v1011 = vunpack.c.l.b16 %v995
        %v1012 = vpack.c.b16 %v1005, %v1004
        %v1013 = vpack.c.b16 %v1007, %v1006
        %v1014 = vpack.c.b16 %v1009, %v1008
        %v1015 = vpack.c.b16 %v1011, %v1010
        %v1021 = vsel %vm314, %v982, 0
        %v1024 = vsel %vm314, %v983, 0
        %v1027 = vsel %vm314, %v984, 0
        %v1030 = vsel %vm314, %v985, 0
        %v1033 = vsel %vm314, %v986, 0
        %1035 = vmatpush.bf16.msra.mxu0 0
        %1036 = vmatpush.bf16.msra.mxu0 0
        %1037 = vmatpush.bf16.msra.mxu0 0
        %1038 = vmatpush.bf16.msra.mxu0 0
        %1039 = vmatpush.bf16.msra.mxu0 %v1015
        %1040 = vmatpush.bf16.msra.mxu0 %v1014
        %1041 = vmatpush.bf16.msra.mxu0 %v1013
        %1042 = vmatpush.bf16.msra.mxu0 %v1012
        %1043 = vmatmul.bf16.gmra.mxu0 %v1021
        %v1044 = vpop.f32.mrf.mxu0
        %v1045 = vadd.f32 0.0, %v1044
        %v1046 = vpop.f32.mrf.mxu0
        %v1047 = vadd.f32 0.0, %v1046
        %1048 = vmatmul.bf16.gmra.mxu0 %v1024
        %v1049 = vpop.f32.mrf.mxu0
        %v1050 = vadd.f32 0.0, %v1049
        %v1051 = vpop.f32.mrf.mxu0
        %v1052 = vadd.f32 0.0, %v1051
        %1053 = vmatmul.bf16.gmra.mxu0 %v1027
        %v1054 = vpop.f32.mrf.mxu0
        %v1055 = vadd.f32 0.0, %v1054
        %v1056 = vpop.f32.mrf.mxu0
        %v1057 = vadd.f32 0.0, %v1056
        %1058 = vmatmul.bf16.gmra.mxu0 %v1030
        %v1059 = vpop.f32.mrf.mxu0
        %v1060 = vadd.f32 0.0, %v1059
        %v1061 = vpop.f32.mrf.mxu0
        %v1062 = vadd.f32 0.0, %v1061
        %1063 = vmatmul.bf16.gmra.mxu0 %v1033
        %v1064 = vpop.f32.mrf.mxu0
        %v1065 = vadd.f32 0.0, %v1064
        %v1066 = vpop.f32.mrf.mxu0
        %v1067 = vadd.f32 0.0, %v1066
        %1068 = vdwg.mxu0
        %v1069 = vadd.f32 %v962, %v1045
        %v1070 = vadd.f32 %v963, %v1047
        %v1071 = vadd.f32 %v964, %v1050
        %v1072 = vadd.f32 %v965, %v1052
        %v1073 = vadd.f32 %v966, %v1055
        %v1074 = vadd.f32 %v967, %v1057
        %v1075 = vadd.f32 %v968, %v1060
        %v1076 = vadd.f32 %v969, %v1062
        %v1077 = vadd.f32 %v970, %v1065
        %v1078 = vadd.f32 %v971, %v1067
        %v1079 = vld [vmem:[%s236 + $0x16] sm:$0xff]
        %v1080 = vld [vmem:[%s236 + $0x1e] sm:$0xff]
        %v1081 = vld [vmem:[%s236 + $0x26] sm:$0xff]
        %v1082 = vld [vmem:[%s236 + $0x2e] sm:$0xff]
        %v1083 = vld [vmem:[%s236 + $0x36] sm:$0xff]
        %v1084 = vld [vmem:[%s236 + $0x3e] sm:$0xff]
        %v1085 = vld [vmem:[%s236 + $0x46] sm:$0xff]
        %v1086 = vld [vmem:[%s236 + $0x4e] sm:$0xff]
        %v1087 = vld [vmem:[%s236 + $0x56] sm:$0xff]
        %v1088 = vld [vmem:[%s236 + $0x5e] sm:$0x3f]
        %v1089 = vpack.c.bf16 %v1080, %v1079
        %v1090 = vpack.c.bf16 %v1082, %v1081
        %v1091 = vpack.c.bf16 %v1084, %v1083
        %v1092 = vpack.c.bf16 %v1086, %v1085
        %v1093 = vpack.c.bf16 %v1088, %v1087
        %s1094 = scalar_lea.vmem %s1, 256
        %v1095 = vld [vmem:[%s1094] sm:$0xf]
        %v1096 = vld [vmem:[%s1094 + $0x4] sm:$0xf]
        %v1097 = vld [vmem:[%s1094 + $0x8] sm:$0xf]
        %v1098 = vld [vmem:[%s1094 + $0xc] sm:$0xf]
        %v1099 = vld [vmem:[%s1094 + $0x10] sm:$0xf]
        %v1100 = vld [vmem:[%s1094 + $0x14] sm:$0xf]
        %v1101 = vld [vmem:[%s1094 + $0x18] sm:$0xf]
        %v1102 = vld [vmem:[%s1094 + $0x1c] sm:$0xf]
        %v1111 = vunpack.c.l.b16 %v1095
        %v1112 = vunpack.c.l.b16 %v1096
        %v1113 = vunpack.c.l.b16 %v1097
        %v1114 = vunpack.c.l.b16 %v1098
        %v1115 = vunpack.c.l.b16 %v1099
        %v1116 = vunpack.c.l.b16 %v1100
        %v1117 = vunpack.c.l.b16 %v1101
        %v1118 = vunpack.c.l.b16 %v1102
        %v1119 = vpack.c.b16 %v1112, %v1111
        %v1120 = vpack.c.b16 %v1114, %v1113
        %v1121 = vpack.c.b16 %v1116, %v1115
        %v1122 = vpack.c.b16 %v1118, %v1117
        %v1128 = vsel %vm314, %v1089, 0
        %v1131 = vsel %vm314, %v1090, 0
        %v1134 = vsel %vm314, %v1091, 0
        %v1137 = vsel %vm314, %v1092, 0
        %v1140 = vsel %vm314, %v1093, 0
        %1142 = vmatpush.bf16.msra.mxu0 0
        %1143 = vmatpush.bf16.msra.mxu0 0
        %1144 = vmatpush.bf16.msra.mxu0 0
        %1145 = vmatpush.bf16.msra.mxu0 0
        %1146 = vmatpush.bf16.msra.mxu0 %v1122
        %1147 = vmatpush.bf16.msra.mxu0 %v1121
        %1148 = vmatpush.bf16.msra.mxu0 %v1120
        %1149 = vmatpush.bf16.msra.mxu0 %v1119
        %1150 = vmatmul.bf16.gmra.mxu0 %v1128
        %v1151 = vpop.f32.mrf.mxu0
        %v1152 = vadd.f32 0.0, %v1151
        %v1153 = vpop.f32.mrf.mxu0
        %v1154 = vadd.f32 0.0, %v1153
        %1155 = vmatmul.bf16.gmra.mxu0 %v1131
        %v1156 = vpop.f32.mrf.mxu0
        %v1157 = vadd.f32 0.0, %v1156
        %v1158 = vpop.f32.mrf.mxu0
        %v1159 = vadd.f32 0.0, %v1158
        %1160 = vmatmul.bf16.gmra.mxu0 %v1134
        %v1161 = vpop.f32.mrf.mxu0
        %v1162 = vadd.f32 0.0, %v1161
        %v1163 = vpop.f32.mrf.mxu0
        %v1164 = vadd.f32 0.0, %v1163
        %1165 = vmatmul.bf16.gmra.mxu0 %v1137
        %v1166 = vpop.f32.mrf.mxu0
        %v1167 = vadd.f32 0.0, %v1166
        %v1168 = vpop.f32.mrf.mxu0
        %v1169 = vadd.f32 0.0, %v1168
        %1170 = vmatmul.bf16.gmra.mxu0 %v1140
        %v1171 = vpop.f32.mrf.mxu0
        %v1172 = vadd.f32 0.0, %v1171
        %v1173 = vpop.f32.mrf.mxu0
        %v1174 = vadd.f32 0.0, %v1173
        %1175 = vdwg.mxu0
        %v1176 = vadd.f32 %v1069, %v1152
        %v1177 = vadd.f32 %v1070, %v1154
        %v1178 = vadd.f32 %v1071, %v1157
        %v1179 = vadd.f32 %v1072, %v1159
        %v1180 = vadd.f32 %v1073, %v1162
        %v1181 = vadd.f32 %v1074, %v1164
        %v1182 = vadd.f32 %v1075, %v1167
        %v1183 = vadd.f32 %v1076, %v1169
        %v1184 = vadd.f32 %v1077, %v1172
        %v1185 = vadd.f32 %v1078, %v1174
        %v1186 = vld [vmem:[%s2] sm:$0x1]
        %v1188 = vperm.slane %v1186, 0
        %v1190 = vmul.f32 %v1176, %v1188
        %v1191 = vmul.f32 %v1177, %v1188
        %v1192 = vmul.f32 %v1178, %v1188
        %v1193 = vmul.f32 %v1179, %v1188
        %v1194 = vmul.f32 %v1180, %v1188
        %v1195 = vmul.f32 %v1181, %v1188
        %v1196 = vmul.f32 %v1182, %v1188
        %v1197 = vmul.f32 %v1183, %v1188
        %v1198 = vmul.f32 %v1184, %v1188
        %v1199 = vmul.f32 %v1185, %v1188
        %v1200 = vld [vmem:[%s3] sm:$0x1]
        %v1202 = vperm.slane %v1200, 0
        %v1204 = vadd.f32 %v1190, %v1202
        %v1205 = vadd.f32 %v1191, %v1202
        %v1206 = vadd.f32 %v1192, %v1202
        %v1207 = vadd.f32 %v1193, %v1202
        %v1208 = vadd.f32 %v1194, %v1202
        %v1209 = vadd.f32 %v1195, %v1202
        %v1210 = vadd.f32 %v1196, %v1202
        %v1211 = vadd.f32 %v1197, %v1202
        %v1212 = vadd.f32 %v1198, %v1202
        %v1213 = vadd.f32 %v1199, %v1202
        %v1214 = vmax.f32 %v1204, 0.0
        %v1215 = vmax.f32 %v1205, 0.0
        %v1216 = vmax.f32 %v1206, 0.0
        %v1217 = vmax.f32 %v1207, 0.0
        %v1218 = vmax.f32 %v1208, 0.0
        %v1219 = vmax.f32 %v1209, 0.0
        %v1220 = vmax.f32 %v1210, 0.0
        %v1221 = vmax.f32 %v1211, 0.0
        %v1222 = vmax.f32 %v1212, 0.0
        %v1223 = vmax.f32 %v1213, 0.0
        %vm1234 = vcmask 1046528
        %v1235 = vrot.slane %v1214, 1
        %v1236 = vrot.slane %v1215, 1
        %v1237 = vsel %vm1234, %v1235, %v1236
        %v1238 = vrot.slane %v1216, 1
        %v1239 = vsel %vm1234, %v1236, %v1238
        %v1240 = vrot.slane %v1217, 1
        %v1241 = vsel %vm1234, %v1238, %v1240
        %v1242 = vrot.slane %v1218, 1
        %v1243 = vsel %vm1234, %v1240, %v1242
        %v1244 = vrot.slane %v1219, 1
        %v1245 = vsel %vm1234, %v1242, %v1244
        %v1246 = vrot.slane %v1220, 1
        %v1247 = vsel %vm1234, %v1244, %v1246
        %v1248 = vrot.slane %v1221, 1
        %v1249 = vsel %vm1234, %v1246, %v1248
        %v1250 = vrot.slane %v1222, 1
        %v1251 = vsel %vm1234, %v1248, %v1250
        %v1252 = vrot.slane %v1223, 1
        %v1253 = vsel %vm1234, %v1250, %v1252
        %v1264 = vmax.f32 %v1214, %v1237
        %v1265 = vmax.f32 %v1215, %v1239
        %v1266 = vmax.f32 %v1216, %v1241
        %v1267 = vmax.f32 %v1217, %v1243
        %v1268 = vmax.f32 %v1218, %v1245
        %v1269 = vmax.f32 %v1219, %v1247
        %v1270 = vmax.f32 %v1220, %v1249
        %v1271 = vmax.f32 %v1221, %v1251
        %v1272 = vmax.f32 %v1222, %v1253
        %v1273 = vmax.f32 %v1223, %v1252
        %vm1283 = vcmask 1045504
        %v1284 = vrot.slane %v1265, 2
        %v1285 = vrot.slane %v1266, 2
        %v1286 = vsel %vm1283, %v1284, %v1285
        %v1287 = vrot.slane %v1267, 2
        %v1288 = vsel %vm1283, %v1285, %v1287
        %v1289 = vrot.slane %v1268, 2
        %v1290 = vsel %vm1283, %v1287, %v1289
        %v1291 = vrot.slane %v1269, 2
        %v1292 = vsel %vm1283, %v1289, %v1291
        %v1293 = vrot.slane %v1270, 2
        %v1294 = vsel %vm1283, %v1291, %v1293
        %v1295 = vrot.slane %v1271, 2
        %v1296 = vsel %vm1283, %v1293, %v1295
        %v1297 = vrot.slane %v1272, 2
        %v1298 = vsel %vm1283, %v1295, %v1297
        %v1299 = vrot.slane %v1273, 2
        %v1300 = vsel %vm1283, %v1297, %v1299
        %v1310 = vmax.f32 %v1264, %v1286
        %v1311 = vmax.f32 %v1265, %v1288
        %v1312 = vmax.f32 %v1266, %v1290
        %v1313 = vmax.f32 %v1267, %v1292
        %v1314 = vmax.f32 %v1268, %v1294
        %v1315 = vmax.f32 %v1269, %v1296
        %v1316 = vmax.f32 %v1270, %v1298
        %v1317 = vmax.f32 %v1271, %v1300
        %v1318 = vmax.f32 %v1272, %v1299
        %v1319 = vld [vmem:[#allocation2] sm:$0xff]
        %v1320 = vld [vmem:[#allocation2 + $0x8] sm:$0xff]
        %v1321 = vld [vmem:[#allocation2 + $0x10] sm:$0xff]
        %v1322 = vld [vmem:[#allocation2 + $0x18] sm:$0xff]
        %v1323 = vld [vmem:[#allocation2 + $0x20] sm:$0xf]
        %vm1324 = vcmask 547840
        %v1326 = vsel %vm1324, %v1319, 0
        %v1329 = vsel %vm1324, %v1320, 0
        %v1332 = vsel %vm1324, %v1321, 0
        %v1335 = vsel %vm1324, %v1322, 0
        %v1338 = vsel %vm1324, %v1323, 0
        %vm1340 = vcmask 1042432
        %v1342 = vsel %vm1340, %v1318, 0
        %1344 = vmatpush.msra.mxu0 0.0
        %1345 = vmatpush.msra.mxu0 0.0
        %1346 = vmatpush.msra.mxu0 0.0
        %1347 = vmatpush.msra.mxu0 0.0
        %1348 = vmatpush.msra.mxu0 0.0
        %1349 = vmatpush.msra.mxu0 0.0
        %1350 = vmatpush.msra.mxu0 0.0
        %1351 = vmatpush.msra.mxu0 %v1342
        %1352 = vmatpush.msra.mxu0 %v1317
        %1353 = vmatpush.msra.mxu0 %v1316
        %1354 = vmatpush.msra.mxu0 %v1315
        %1355 = vmatpush.msra.mxu0 %v1314
        %1356 = vmatpush.msra.mxu0 %v1313
        %1357 = vmatpush.msra.mxu0 %v1312
        %1358 = vmatpush.msra.mxu0 %v1311
        %1359 = vmatpush.msra.mxu0 %v1310
        %1360 = vmatmul.f32.gmra.mxu0 %v1326
        %v1361 = vpop.f32.mrf.mxu0
        %v1362 = vadd.f32 0.0, %v1361
        %1363 = vmatmul.f32.gmra.mxu0 %v1329
        %v1364 = vpop.f32.mrf.mxu0
        %v1365 = vadd.f32 0.0, %v1364
        %1366 = vmatmul.f32.gmra.mxu0 %v1332
        %v1367 = vpop.f32.mrf.mxu0
        %v1368 = vadd.f32 0.0, %v1367
        %1369 = vmatmul.f32.gmra.mxu0 %v1335
        %v1370 = vpop.f32.mrf.mxu0
        %v1371 = vadd.f32 0.0, %v1370
        %1372 = vmatmul.f32.gmra.mxu0 %v1338
        %v1373 = vpop.f32.mrf.mxu0
        %v1374 = vadd.f32 0.0, %v1373
        %1375 = vdwg.mxu0
        %1376 = vst [vmem:[%s241] sm:$0xff] %v1362
        %1377 = vst [vmem:[%s241 + $0x8] sm:$0xff] %v1365
        %1378 = vst [vmem:[%s241 + $0x10] sm:$0xff] %v1368
        %1379 = vst [vmem:[%s241 + $0x18] sm:$0xff] %v1371
        %1380 = vst [vmem:[%s241 + $0x20] sm:$0xf] %v1374
        %p1381 = scmp.lt.s32.totalorder %s17, 1
        %s1382 = scalar_select %p1381, %s17, 1
        %s1383 = smul.addr %s1382, 5
        %s1384 = smul.addr %s1383, 8
        %s1385 = scalar_lea.vmem %s5, %s1384
        // Predicated region
        $region45: #{toy_model_forward.4} parent=39 // pred_check
          %p1386 = pneg %p145
        $region46: #{toy_model_forward.4} parent=39 // pred_check_branch
          %1388 = sbr.rel (%p1386) target = $region48
        $region47: #{toy_model_forward.4} parent=39 // pred_region
          _
        $region48: #{toy_model_forward.4} parent=39 // pred_fallthru
          _
      $region40: #{toy_model_forward.4} parent=5 // pred_fallthru
        _
      %p1389 = scmp.le.s32.totalorder 2, %s12
      // Predicated region
      $region49: #{toy_model_forward.4} parent=5 // pred_check
        %p1390 = pneg %p1389
      $region50: #{toy_model_forward.4} parent=5 // pred_check_branch
        %1392 = sbr.rel (%p1390) target = $region52
      $region51: #{toy_model_forward.4} parent=5 // pred_region
        %s1393 = ssub.s32 %s12, 2
        // Predicated region
        $region53: #{toy_model_forward.4} parent=51 // pred_check
          %p1394 = pneg %p151
        $region54: #{toy_model_forward.4} parent=51 // pred_check_branch
          %1396 = sbr.rel (%p1394) target = $region56
        $region55: #{toy_model_forward.4} parent=51 // pred_region
          %p1397 = scmp.lt.s32.totalorder %s18, 1
          %s1398 = scalar_select %p1397, %s18, 1
          %s1399 = smul.addr %s1398, 5
          %s1400 = smul.addr %s1399, 8
          %s1401 = scalar_lea.vmem %s5, %s1400
        $region56: #{toy_model_forward.4} parent=51 // pred_fallthru
          _
      $region52: #{toy_model_forward.4} parent=5 // pred_fallthru
        _
    $region6: #{toy_model_forward.4} parent=1 // loop_footer
      %s16 = sadd.s32 1, %s12
    $region7: #{toy_model_forward.4} parent=1 // loop_footer_branch
      %11 = sbr.rel target = $region3
    $region8: #{toy_model_forward.4} parent=1 // loop_exit
      _
    %1402 = vsyncpa [#allocation3], 1
    %s1403 = scalar_lea.sflag [#allocation3], 1
    %1404 = vsyncpa %s1403, 1

// kernel: toy_model_forward.5
$region0: #{toy_model_forward.5}
  #allocation0 [shape = 'u32[]', space=smem, size = 0x4, offset = 0x4, fixed_abs, tag = 'smem constant byte address 0x4 - core index']
  #allocation1 [shape = 'u32[72,128]{1,0:T(1,128)}', space=vmem, size = 0x9000, scoped, tag = 'internal scratch']
  %s0 = inlined_call_operand.vmem [shape: f32[2,36,128], index: 0, kind: input, shape index: {}]
  %s1 = inlined_call_operand.vmem [shape: bf16[9,128,256], index: 1, kind: input, shape index: {}]
  %s2 = inlined_call_operand.vmem [shape: f32[1,256], index: 2, kind: input, shape index: {}]
  %s3 = inlined_call_operand.vmem [shape: f32[1,256], index: 3, kind: input, shape index: {}]
  %s4 = inlined_call_operand.vmem [shape: f32[1,15], index: 4, kind: input, shape index: {}]
  %s5 = inlined_call_operand.vmem [shape: f32[256,10], index: 5, kind: input, shape index: {}]
  %s6 = inlined_call_operand.vmem [shape: f32[1,10], index: 6, kind: input, shape index: {}]
  %s7 = inlined_call_operand.hbm [shape: f32[2,1,10], index: 7, kind: output, shape index: {}]
  %s8 = sld [smem:[#allocation0]]
  $region61: #{toy_model_forward.5} parent=0
    _
  %s10 = ssub.s32 1, %s8
  %s11 = scalar_select 0, %s10, %s8
  $region1: #{toy_model_forward.5} parent=0
    #allocation2 [shape = 'u8[1024]{0}', space=vmem, size = 0x400, scoped, tag = 'output window, operand 0']
    #allocation3 [shape = 's32[2]{0}', space=sflag, size = 0x8, scoped, tag = 'scoped memory for toy_model_forward.5']
    %12 = vsyncpa [#allocation3], 0
    %s13 = scalar_lea.sflag [#allocation3], 1
    %14 = vsyncpa %s13, 0
    loop: start=0, step=1, limit=4
    $region2: #{toy_model_forward.5} parent=1 // loop_pre_header
      _
    $region3: #{toy_model_forward.5} parent=1 // loop_header
      %s16 = sphi 0, %s20
      %p17 = scmp.ge.s32.totalorder %s16, 4
      %s26 = sphi 0, %s28
      %s29 = sphi 0, %s26
      %s30 = sphi 0, %s29
      %s46 = sphi 0, %s30
      %s50 = sphi 0, %s50
      %s52 = sphi 0, %s50
      %s53 = sphi 0, %s52
      %s67 = sphi 0, %s53
      %s71 = sphi 0, %s71
      %s73 = sphi 0, %s71
      %s74 = sphi 0, %s73
      %s88 = sphi 0, %s74
      %s92 = sphi 0, %s92
      %s94 = sphi 0, %s92
      %s95 = sphi 0, %s94
      %s109 = sphi 0, %s95
      %s113 = sphi 0, %s113
      %s115 = sphi 0, %s113
      %s116 = sphi 0, %s115
      %s130 = sphi 0, %s116
      %s134 = sphi 0, %s134
      %s136 = sphi 0, %s134
      %s137 = sphi 0, %s136
      %s151 = sphi 0, %s137
      %s155 = sphi 0, %s155
      %s157 = sphi 0, %s155
      %s158 = sphi 0, %s157
      %s172 = sphi 0, %s158
      %s178 = sphi 0, %s180
      %s181 = sphi 0, %s178
      %s182 = sphi 0, %s181
      %s198 = sphi 0, %s182
    $region4: #{toy_model_forward.5} parent=1 // loop_header_branch
      %19 = sbr.rel (%p17) target = $region8
    $region5: #{toy_model_forward.5} parent=1 // loop_body
      %s21 = ssub.s32 %s16, 1
      %s22 = ssub.s32 %s16, 2
      %s23 = sadd.s32 %s16, 1
      %s24 = ssub.s32 %s16, %s23
      %p25 = scmp.eq.s32.totalorder %s24, 0
      %s27 = sadd.s32 %s26, 1
      %s28 = scalar_select %p25, %s26, %s27
      %p31 = pneg %p25
      %p32 = scmp.eq.s32.totalorder %s16, 1
      %p33 = por %p31, %p32
      %p34 = scmp.ne.s32.totalorder %s26, %s29
      %p35 = scmp.eq.s32.totalorder %s16, 0
      %p36 = por %p34, %p35
      %p37 = scmp.ne.s32.totalorder %s26, %s29
      %p38 = scmp.eq.s32.totalorder %s21, 1
      %p39 = por %p37, %p38
      %p40 = scmp.ne.s32.totalorder %s29, %s30
      %p41 = scmp.eq.s32.totalorder %s21, 0
      %p42 = por %p40, %p41
      %p43 = scmp.ne.s32.totalorder %s29, %s30
      %p44 = scmp.eq.s32.totalorder %s22, 1
      %p45 = por %p43, %p44
      %p47 = scmp.ne.s32.totalorder %s30, %s46
      %p48 = scmp.eq.s32.totalorder %s22, 0
      %p49 = por %p47, %p48
      %s51 = sadd.s32 %s50, 1
      %p54 = scmp.eq.s32.totalorder %s16, 1
      %p55 = scmp.ne.s32.totalorder %s50, %s52
      %p56 = scmp.eq.s32.totalorder %s16, 0
      %p57 = por %p55, %p56
      %p58 = scmp.ne.s32.totalorder %s50, %s52
      %p59 = scmp.eq.s32.totalorder %s21, 1
      %p60 = por %p58, %p59
      %p61 = scmp.ne.s32.totalorder %s52, %s53
      %p62 = scmp.eq.s32.totalorder %s21, 0
      %p63 = por %p61, %p62
      %p64 = scmp.ne.s32.totalorder %s52, %s53
      %p65 = scmp.eq.s32.totalorder %s22, 1
      %p66 = por %p64, %p65
      %p68 = scmp.ne.s32.totalorder %s53, %s67
      %p69 = scmp.eq.s32.totalorder %s22, 0
      %p70 = por %p68, %p69
      %s72 = sadd.s32 %s71, 1
      %p75 = scmp.eq.s32.totalorder %s16, 1
      %p76 = scmp.ne.s32.totalorder %s71, %s73
      %p77 = scmp.eq.s32.totalorder %s16, 0
      %p78 = por %p76, %p77
      %p79 = scmp.ne.s32.totalorder %s71, %s73
      %p80 = scmp.eq.s32.totalorder %s21, 1
      %p81 = por %p79, %p80
      %p82 = scmp.ne.s32.totalorder %s73, %s74
      %p83 = scmp.eq.s32.totalorder %s21, 0
      %p84 = por %p82, %p83
      %p85 = scmp.ne.s32.totalorder %s73, %s74
      %p86 = scmp.eq.s32.totalorder %s22, 1
      %p87 = por %p85, %p86
      %p89 = scmp.ne.s32.totalorder %s74, %s88
      %p90 = scmp.eq.s32.totalorder %s22, 0
      %p91 = por %p89, %p90
      %s93 = sadd.s32 %s92, 1
      %p96 = scmp.eq.s32.totalorder %s16, 1
      %p97 = scmp.ne.s32.totalorder %s92, %s94
      %p98 = scmp.eq.s32.totalorder %s16, 0
      %p99 = por %p97, %p98
      %p100 = scmp.ne.s32.totalorder %s92, %s94
      %p101 = scmp.eq.s32.totalorder %s21, 1
      %p102 = por %p100, %p101
      %p103 = scmp.ne.s32.totalorder %s94, %s95
      %p104 = scmp.eq.s32.totalorder %s21, 0
      %p105 = por %p103, %p104
      %p106 = scmp.ne.s32.totalorder %s94, %s95
      %p107 = scmp.eq.s32.totalorder %s22, 1
      %p108 = por %p106, %p107
      %p110 = scmp.ne.s32.totalorder %s95, %s109
      %p111 = scmp.eq.s32.totalorder %s22, 0
      %p112 = por %p110, %p111
      %s114 = sadd.s32 %s113, 1
      %p117 = scmp.eq.s32.totalorder %s16, 1
      %p118 = scmp.ne.s32.totalorder %s113, %s115
      %p119 = scmp.eq.s32.totalorder %s16, 0
      %p120 = por %p118, %p119
      %p121 = scmp.ne.s32.totalorder %s113, %s115
      %p122 = scmp.eq.s32.totalorder %s21, 1
      %p123 = por %p121, %p122
      %p124 = scmp.ne.s32.totalorder %s115, %s116
      %p125 = scmp.eq.s32.totalorder %s21, 0
      %p126 = por %p124, %p125
      %p127 = scmp.ne.s32.totalorder %s115, %s116
      %p128 = scmp.eq.s32.totalorder %s22, 1
      %p129 = por %p127, %p128
      %p131 = scmp.ne.s32.totalorder %s116, %s130
      %p132 = scmp.eq.s32.totalorder %s22, 0
      %p133 = por %p131, %p132
      %s135 = sadd.s32 %s134, 1
      %p138 = scmp.eq.s32.totalorder %s16, 1
      %p139 = scmp.ne.s32.totalorder %s134, %s136
      %p140 = scmp.eq.s32.totalorder %s16, 0
      %p141 = por %p139, %p140
      %p142 = scmp.ne.s32.totalorder %s134, %s136
      %p143 = scmp.eq.s32.totalorder %s21, 1
      %p144 = por %p142, %p143
      %p145 = scmp.ne.s32.totalorder %s136, %s137
      %p146 = scmp.eq.s32.totalorder %s21, 0
      %p147 = por %p145, %p146
      %p148 = scmp.ne.s32.totalorder %s136, %s137
      %p149 = scmp.eq.s32.totalorder %s22, 1
      %p150 = por %p148, %p149
      %p152 = scmp.ne.s32.totalorder %s137, %s151
      %p153 = scmp.eq.s32.totalorder %s22, 0
      %p154 = por %p152, %p153
      %s156 = sadd.s32 %s155, 1
      %p159 = scmp.eq.s32.totalorder %s16, 1
      %p160 = scmp.ne.s32.totalorder %s155, %s157
      %p161 = scmp.eq.s32.totalorder %s16, 0
      %p162 = por %p160, %p161
      %p163 = scmp.ne.s32.totalorder %s155, %s157
      %p164 = scmp.eq.s32.totalorder %s21, 1
      %p165 = por %p163, %p164
      %p166 = scmp.ne.s32.totalorder %s157, %s158
      %p167 = scmp.eq.s32.totalorder %s21, 0
      %p168 = por %p166, %p167
      %p169 = scmp.ne.s32.totalorder %s157, %s158
      %p170 = scmp.eq.s32.totalorder %s22, 1
      %p171 = por %p169, %p170
      %p173 = scmp.ne.s32.totalorder %s158, %s172
      %p174 = scmp.eq.s32.totalorder %s22, 0
      %p175 = por %p173, %p174
      %s176 = ssub.s32 %s16, %s23
      %p177 = scmp.eq.s32.totalorder %s176, 0
      %s179 = sadd.s32 %s178, 1
      %s180 = scalar_select %p177, %s178, %s179
      %p183 = pneg %p177
      %p184 = scmp.eq.s32.totalorder %s16, 1
      %p185 = por %p183, %p184
      %p186 = scmp.ne.s32.totalorder %s178, %s181
      %p187 = scmp.eq.s32.totalorder %s16, 0
      %p188 = por %p186, %p187
      %p189 = scmp.ne.s32.totalorder %s178, %s181
      %p190 = scmp.eq.s32.totalorder %s21, 1
      %p191 = por %p189, %p190
      %p192 = scmp.ne.s32.totalorder %s181, %s182
      %p193 = scmp.eq.s32.totalorder %s21, 0
      %p194 = por %p192, %p193
      %p195 = scmp.ne.s32.totalorder %s181, %s182
      %p196 = scmp.eq.s32.totalorder %s22, 1
      %p197 = por %p195, %p196
      %p199 = scmp.ne.s32.totalorder %s182, %s198
      %p200 = scmp.eq.s32.totalorder %s22, 0
      %p201 = por %p199, %p200
      %p202 = scmp.le.s32.totalorder 1, %s16
      %p203 = scmp.lt.s32.totalorder %s16, 3
      %p204 = pnand %p202, %p203
      %p205 = pneg %p204
      // Predicated region
      $region9: #{toy_model_forward.5} parent=5 // pred_check
        _
      $region10: #{toy_model_forward.5} parent=5 // pred_check_branch
        %207 = sbr.rel (%p204) target = $region12
      $region11: #{toy_model_forward.5} parent=5 // pred_region
        %s208 = ssub.s32 %s16, 1
        // Predicated region
        $region13: #{toy_model_forward.5} parent=11 // pred_check
          %p209 = pneg %p63
        $region14: #{toy_model_forward.5} parent=11 // pred_check_branch
          %211 = sbr.rel (%p209) target = $region16
        $region15: #{toy_model_forward.5} parent=11 // pred_region
          _
        $region16: #{toy_model_forward.5} parent=11 // pred_fallthru
          _
        // Predicated region
        $region17: #{toy_model_forward.5} parent=11 // pred_check
          %p212 = pneg %p84
        $region18: #{toy_model_forward.5} parent=11 // pred_check_branch
          %214 = sbr.rel (%p212) target = $region20
        $region19: #{toy_model_forward.5} parent=11 // pred_region
          _
        $region20: #{toy_model_forward.5} parent=11 // pred_fallthru
          _
        // Predicated region
        $region21: #{toy_model_forward.5} parent=11 // pred_check
          %p215 = pneg %p105
        $region22: #{toy_model_forward.5} parent=11 // pred_check_branch
          %217 = sbr.rel (%p215) target = $region24
        $region23: #{toy_model_forward.5} parent=11 // pred_region
          _
        $region24: #{toy_model_forward.5} parent=11 // pred_fallthru
          _
        // Predicated region
        $region25: #{toy_model_forward.5} parent=11 // pred_check
          %p218 = pneg %p126
        $region26: #{toy_model_forward.5} parent=11 // pred_check_branch
          %220 = sbr.rel (%p218) target = $region28
        $region27: #{toy_model_forward.5} parent=11 // pred_region
          _
        $region28: #{toy_model_forward.5} parent=11 // pred_fallthru
          _
        // Predicated region
        $region29: #{toy_model_forward.5} parent=11 // pred_check
          %p221 = pneg %p147
        $region30: #{toy_model_forward.5} parent=11 // pred_check_branch
          %223 = sbr.rel (%p221) target = $region32
        $region31: #{toy_model_forward.5} parent=11 // pred_region
          _
        $region32: #{toy_model_forward.5} parent=11 // pred_fallthru
          _
        // Predicated region
        $region33: #{toy_model_forward.5} parent=11 // pred_check
          %p224 = pneg %p168
        $region34: #{toy_model_forward.5} parent=11 // pred_check_branch
          %226 = sbr.rel (%p224) target = $region36
        $region35: #{toy_model_forward.5} parent=11 // pred_region
          _
        $region36: #{toy_model_forward.5} parent=11 // pred_fallthru
          _
      $region12: #{toy_model_forward.5} parent=5 // pred_fallthru
        _
      %p227 = scmp.lt.s32.totalorder %s16, 2
      // Predicated region
      $region37: #{toy_model_forward.5} parent=5 // pred_check
        %p228 = pneg %p227
      $region38: #{toy_model_forward.5} parent=5 // pred_check_branch
        %230 = sbr.rel (%p228) target = $region40
      $region39: #{toy_model_forward.5} parent=5 // pred_region
        // Predicated region
        $region41: #{toy_model_forward.5} parent=39 // pred_check
          %p231 = pneg %p36
        $region42: #{toy_model_forward.5} parent=39 // pred_check_branch
          %233 = sbr.rel (%p231) target = $region44
        $region43: #{toy_model_forward.5} parent=39 // pred_region
          %p234 = scmp.lt.s32.totalorder %s16, 1
          %s235 = scalar_select %p234, %s16, 1
          %s236 = smul.addr %s235, 5
          %s237 = smul.addr %s236, 8
          %s238 = scalar_lea.vmem %s0, %s237
        $region44: #{toy_model_forward.5} parent=39 // pred_fallthru
          _
      $region40: #{toy_model_forward.5} parent=5 // pred_fallthru
        _
      %p239 = scmp.le.s32.totalorder 1, %s16
      %p240 = scmp.lt.s32.totalorder %s16, 3
      %p241 = pnand %p239, %p240
      %p242 = pneg %p241
      // Predicated region
      $region45: #{toy_model_forward.5} parent=5 // pred_check
        _
      $region46: #{toy_model_forward.5} parent=5 // pred_check_branch
        %244 = sbr.rel (%p241) target = $region48
      $region47: #{toy_model_forward.5} parent=5 // pred_region
        %s245 = ssub.s32 %s16, 1
        %p246 = scmp.lt.s32.totalorder %s21, 1
        %s247 = scalar_select %p246, %s21, 1
        %s248 = smul.addr %s247, 5
        %s249 = smul.addr %s248, 8
        %s250 = scalar_lea.vmem %s0, %s249
        %p251 = pneg %p42
        %p252 = pneg %p39
        %p253 = pneg %p63
        %p254 = pneg %p60
        %p255 = pneg %p84
        %p256 = pneg %p81
        %p257 = pneg %p105
        %p258 = pneg %p102
        %p259 = pneg %p126
        %p260 = pneg %p123
        %p261 = pneg %p147
        %p262 = pneg %p144
        %p263 = pneg %p168
        %p264 = pneg %p165
        %p265 = pneg %p194
        %p266 = pneg %p191
        %s267 = sand.u32 %s181, 1
        %s268 = scalar_lea.sflag [#allocation3], %s267
        %s269 = sand.u32 %s181, 1
        %s270 = scalar_lea.vmem [#allocation2], %s269
        %p271 = scmp.lt.s32.totalorder %s21, 1
        %s272 = scalar_select %p271, %s21, 1
        %s273 = smul.addr %s272, 5
        %s274 = smul.addr %s273, 8
        %s275 = scalar_lea.vmem %s0, %s274
        %v276 = vld [vmem:[%s275] sm:$0xff]
        %v277 = vld [vmem:[%s275 + $0x8] sm:$0xff]
        %v278 = vld [vmem:[%s275 + $0x10] sm:$0x3f]
        %v279 = vpack.c.bf16 %v277, %v276
        %v280 = vpack.c.bf16 %v278, %v278
        %v281 = vld [vmem:[%s1] sm:$0xff]
        %v282 = vld [vmem:[%s1 + $0x8] sm:$0xff]
        %v283 = vld [vmem:[%s1 + $0x10] sm:$0xff]
        %v284 = vld [vmem:[%s1 + $0x18] sm:$0xff]
        %v285 = vld [vmem:[%s1 + $0x20] sm:$0xff]
        %v286 = vld [vmem:[%s1 + $0x28] sm:$0xff]
        %v287 = vld [vmem:[%s1 + $0x30] sm:$0xff]
        %v288 = vld [vmem:[%s1 + $0x38] sm:$0xff]
        %v289 = vld [vmem:[%s1 + $0x40] sm:$0xff]
        %v290 = vld [vmem:[%s1 + $0x48] sm:$0xff]
        %v291 = vld [vmem:[%s1 + $0x50] sm:$0xff]
        %v292 = vld [vmem:[%s1 + $0x58] sm:$0xff]
        %v293 = vld [vmem:[%s1 + $0x60] sm:$0xff]
        %v294 = vld [vmem:[%s1 + $0x68] sm:$0xff]
        %v295 = vld [vmem:[%s1 + $0x70] sm:$0xff]
        %v296 = vld [vmem:[%s1 + $0x78] sm:$0xff]
        %v297 = vld [vmem:[%s275 + $0x1] sm:$0xff]
        %v298 = vld [vmem:[%s275 + $0x9] sm:$0xff]
        %v299 = vld [vmem:[%s275 + $0x11] sm:$0x3f]
        %v300 = vpack.c.bf16 %v298, %v297
        %v301 = vpack.c.bf16 %v299, %v299
        %s302 = scalar_lea.vmem %s1, 128
        %v303 = vld [vmem:[%s302] sm:$0xff]
        %v304 = vld [vmem:[%s302 + $0x8] sm:$0xff]
        %v305 = vld [vmem:[%s302 + $0x10] sm:$0xff]
        %v306 = vld [vmem:[%s302 + $0x18] sm:$0xff]
        %v307 = vld [vmem:[%s302 + $0x20] sm:$0xff]
        %v308 = vld [vmem:[%s302 + $0x28] sm:$0xff]
        %v309 = vld [vmem:[%s302 + $0x30] sm:$0xff]
        %v310 = vld [vmem:[%s302 + $0x38] sm:$0xff]
        %v311 = vld [vmem:[%s302 + $0x40] sm:$0xff]
        %v312 = vld [vmem:[%s302 + $0x48] sm:$0xff]
        %v313 = vld [vmem:[%s302 + $0x50] sm:$0xff]
        %v314 = vld [vmem:[%s302 + $0x58] sm:$0xff]
        %v315 = vld [vmem:[%s302 + $0x60] sm:$0xff]
        %v316 = vld [vmem:[%s302 + $0x68] sm:$0xff]
        %v317 = vld [vmem:[%s302 + $0x70] sm:$0xff]
        %v318 = vld [vmem:[%s302 + $0x78] sm:$0xff]
        %v335 = vunpack.c.l.b16 %v303
        %v336 = vunpack.c.h.b16 %v303
        %v337 = vunpack.c.l.b16 %v304
        %v338 = vunpack.c.h.b16 %v304
        %v339 = vunpack.c.l.b16 %v305
        %v340 = vunpack.c.h.b16 %v305
        %v341 = vunpack.c.l.b16 %v306
        %v342 = vunpack.c.h.b16 %v306
        %v343 = vunpack.c.l.b16 %v307
        %v344 = vunpack.c.h.b16 %v307
        %v345 = vunpack.c.l.b16 %v308
        %v346 = vunpack.c.h.b16 %v308
        %v347 = vunpack.c.l.b16 %v309
        %v348 = vunpack.c.h.b16 %v309
        %v349 = vunpack.c.l.b16 %v310
        %v350 = vunpack.c.h.b16 %v310
        %v351 = vunpack.c.l.b16 %v311
        %v352 = vunpack.c.h.b16 %v311
        %v353 = vunpack.c.l.b16 %v312
        %v354 = vunpack.c.h.b16 %v312
        %v355 = vunpack.c.l.b16 %v313
        %v356 = vunpack.c.h.b16 %v313
        %v357 = vunpack.c.l.b16 %v314
        %v358 = vunpack.c.h.b16 %v314
        %v359 = vunpack.c.l.b16 %v315
        %v360 = vunpack.c.h.b16 %v315
        %v361 = vunpack.c.l.b16 %v316
        %v362 = vunpack.c.h.b16 %v316
        %v363 = vunpack.c.l.b16 %v317
        %v364 = vunpack.c.h.b16 %v317
        %v365 = vunpack.c.l.b16 %v318
        %v366 = vunpack.c.h.b16 %v318
        %v367 = vpack.c.b16 %v337, %v335
        %v368 = vpack.c.b16 %v338, %v336
        %v369 = vpack.c.b16 %v341, %v339
        %v370 = vpack.c.b16 %v342, %v340
        %v371 = vpack.c.b16 %v345, %v343
        %v372 = vpack.c.b16 %v346, %v344
        %v373 = vpack.c.b16 %v349, %v347
        %v374 = vpack.c.b16 %v350, %v348
        %v375 = vpack.c.b16 %v353, %v351
        %v376 = vpack.c.b16 %v354, %v352
        %v377 = vpack.c.b16 %v357, %v355
        %v378 = vpack.c.b16 %v358, %v356
        %v379 = vpack.c.b16 %v361, %v359
        %v380 = vpack.c.b16 %v362, %v360
        %v381 = vpack.c.b16 %v365, %v363
        %v382 = vpack.c.b16 %v366, %v364
        %399 = vmatpush.bf16.msra.mxu0 %v381
        %400 = vmatpush.bf16.msra.mxu0 %v379
        %401 = vmatpush.bf16.msra.mxu0 %v377
        %402 = vmatpush.bf16.msra.mxu0 %v375
        %403 = vmatpush.bf16.msra.mxu0 %v373
        %404 = vmatpush.bf16.msra.mxu0 %v371
        %405 = vmatpush.bf16.msra.mxu0 %v369
        %406 = vmatpush.bf16.msra.mxu0 %v367
        %407 = vmatmul.bf16.gmra.mxu0 %v300
        %v408 = vpop.f32.mrf.mxu0
        %v409 = vadd.f32 0.0, %v408
        %v410 = vpop.f32.mrf.mxu0
        %v411 = vadd.f32 0.0, %v410
        %412 = vmatmul.bf16.gmra.mxu0 %v301
        %v413 = vpop.f32.mrf.mxu0
        %v414 = vadd.f32 0.0, %v413
        %v415 = vpop.f32.mrf.mxu0
        %416 = vdwg.mxu0
        %417 = vmatpush.bf16.msra.mxu0 %v382
        %418 = vmatpush.bf16.msra.mxu0 %v380
        %419 = vmatpush.bf16.msra.mxu0 %v378
        %420 = vmatpush.bf16.msra.mxu0 %v376
        %421 = vmatpush.bf16.msra.mxu0 %v374
        %422 = vmatpush.bf16.msra.mxu0 %v372
        %423 = vmatpush.bf16.msra.mxu0 %v370
        %424 = vmatpush.bf16.msra.mxu0 %v368
        %425 = vmatmul.bf16.gmra.mxu0 %v300
        %v426 = vpop.f32.mrf.mxu0
        %v427 = vadd.f32 0.0, %v426
        %v428 = vpop.f32.mrf.mxu0
        %v429 = vadd.f32 0.0, %v428
        %430 = vmatmul.bf16.gmra.mxu0 %v301
        %v431 = vpop.f32.mrf.mxu0
        %v432 = vadd.f32 0.0, %v431
        %v433 = vpop.f32.mrf.mxu0
        %434 = vdwg.mxu0
        %v451 = vunpack.c.l.b16 %v281
        %v452 = vunpack.c.h.b16 %v281
        %v453 = vunpack.c.l.b16 %v282
        %v454 = vunpack.c.h.b16 %v282
        %v455 = vunpack.c.l.b16 %v283
        %v456 = vunpack.c.h.b16 %v283
        %v457 = vunpack.c.l.b16 %v284
        %v458 = vunpack.c.h.b16 %v284
        %v459 = vunpack.c.l.b16 %v285
        %v460 = vunpack.c.h.b16 %v285
        %v461 = vunpack.c.l.b16 %v286
        %v462 = vunpack.c.h.b16 %v286
        %v463 = vunpack.c.l.b16 %v287
        %v464 = vunpack.c.h.b16 %v287
        %v465 = vunpack.c.l.b16 %v288
        %v466 = vunpack.c.h.b16 %v288
        %v467 = vunpack.c.l.b16 %v289
        %v468 = vunpack.c.h.b16 %v289
        %v469 = vunpack.c.l.b16 %v290
        %v470 = vunpack.c.h.b16 %v290
        %v471 = vunpack.c.l.b16 %v291
        %v472 = vunpack.c.h.b16 %v291
        %v473 = vunpack.c.l.b16 %v292
        %v474 = vunpack.c.h.b16 %v292
        %v475 = vunpack.c.l.b16 %v293
        %v476 = vunpack.c.h.b16 %v293
        %v477 = vunpack.c.l.b16 %v294
        %v478 = vunpack.c.h.b16 %v294
        %v479 = vunpack.c.l.b16 %v295
        %v480 = vunpack.c.h.b16 %v295
        %v481 = vunpack.c.l.b16 %v296
        %v482 = vunpack.c.h.b16 %v296
        %v483 = vpack.c.b16 %v453, %v451
        %v484 = vpack.c.b16 %v454, %v452
        %v485 = vpack.c.b16 %v457, %v455
        %v486 = vpack.c.b16 %v458, %v456
        %v487 = vpack.c.b16 %v461, %v459
        %v488 = vpack.c.b16 %v462, %v460
        %v489 = vpack.c.b16 %v465, %v463
        %v490 = vpack.c.b16 %v466, %v464
        %v491 = vpack.c.b16 %v469, %v467
        %v492 = vpack.c.b16 %v470, %v468
        %v493 = vpack.c.b16 %v473, %v471
        %v494 = vpack.c.b16 %v474, %v472
        %v495 = vpack.c.b16 %v477, %v475
        %v496 = vpack.c.b16 %v478, %v476
        %v497 = vpack.c.b16 %v481, %v479
        %v498 = vpack.c.b16 %v482, %v480
        %515 = vmatpush.bf16.msra.mxu0 %v497
        %516 = vmatpush.bf16.msra.mxu0 %v495
        %517 = vmatpush.bf16.msra.mxu0 %v493
        %518 = vmatpush.bf16.msra.mxu0 %v491
        %519 = vmatpush.bf16.msra.mxu0 %v489
        %520 = vmatpush.bf16.msra.mxu0 %v487
        %521 = vmatpush.bf16.msra.mxu0 %v485
        %522 = vmatpush.bf16.msra.mxu0 %v483
        %523 = vmatmul.bf16.gmra.mxu0 %v279
        %v524 = vpop.f32.mrf.mxu0
        %v525 = vadd.f32 %v409, %v524
        %v526 = vpop.f32.mrf.mxu0
        %v527 = vadd.f32 %v411, %v526
        %528 = vmatmul.bf16.gmra.mxu0 %v280
        %v529 = vpop.f32.mrf.mxu0
        %v530 = vadd.f32 %v414, %v529
        %v531 = vpop.f32.mrf.mxu0
        %532 = vdwg.mxu0
        %533 = vmatpush.bf16.msra.mxu0 %v498
        %534 = vmatpush.bf16.msra.mxu0 %v496
        %535 = vmatpush.bf16.msra.mxu0 %v494
        %536 = vmatpush.bf16.msra.mxu0 %v492
        %537 = vmatpush.bf16.msra.mxu0 %v490
        %538 = vmatpush.bf16.msra.mxu0 %v488
        %539 = vmatpush.bf16.msra.mxu0 %v486
        %540 = vmatpush.bf16.msra.mxu0 %v484
        %541 = vmatmul.bf16.gmra.mxu0 %v279
        %v542 = vpop.f32.mrf.mxu0
        %v543 = vadd.f32 %v427, %v542
        %v544 = vpop.f32.mrf.mxu0
        %v545 = vadd.f32 %v429, %v544
        %546 = vmatmul.bf16.gmra.mxu0 %v280
        %v547 = vpop.f32.mrf.mxu0
        %v548 = vadd.f32 %v432, %v547
        %v549 = vpop.f32.mrf.mxu0
        %550 = vdwg.mxu0
        %v551 = vld [vmem:[%s275 + $0x2] sm:$0xff]
        %v552 = vld [vmem:[%s275 + $0xa] sm:$0xff]
        %v553 = vld [vmem:[%s275 + $0x12] sm:$0x3f]
        %v554 = vpack.c.bf16 %v552, %v551
        %v555 = vpack.c.bf16 %v553, %v553
        %s556 = scalar_lea.vmem %s1, 256
        %v557 = vld [vmem:[%s556] sm:$0xff]
        %v558 = vld [vmem:[%s556 + $0x8] sm:$0xff]
        %v559 = vld [vmem:[%s556 + $0x10] sm:$0xff]
        %v560 = vld [vmem:[%s556 + $0x18] sm:$0xff]
        %v561 = vld [vmem:[%s556 + $0x20] sm:$0xff]
        %v562 = vld [vmem:[%s556 + $0x28] sm:$0xff]
        %v563 = vld [vmem:[%s556 + $0x30] sm:$0xff]
        %v564 = vld [vmem:[%s556 + $0x38] sm:$0xff]
        %v565 = vld [vmem:[%s556 + $0x40] sm:$0xff]
        %v566 = vld [vmem:[%s556 + $0x48] sm:$0xff]
        %v567 = vld [vmem:[%s556 + $0x50] sm:$0xff]
        %v568 = vld [vmem:[%s556 + $0x58] sm:$0xff]
        %v569 = vld [vmem:[%s556 + $0x60] sm:$0xff]
        %v570 = vld [vmem:[%s556 + $0x68] sm:$0xff]
        %v571 = vld [vmem:[%s556 + $0x70] sm:$0xff]
        %v572 = vld [vmem:[%s556 + $0x78] sm:$0xff]
        %v589 = vunpack.c.l.b16 %v557
        %v590 = vunpack.c.h.b16 %v557
        %v591 = vunpack.c.l.b16 %v558
        %v592 = vunpack.c.h.b16 %v558
        %v593 = vunpack.c.l.b16 %v559
        %v594 = vunpack.c.h.b16 %v559
        %v595 = vunpack.c.l.b16 %v560
        %v596 = vunpack.c.h.b16 %v560
        %v597 = vunpack.c.l.b16 %v561
        %v598 = vunpack.c.h.b16 %v561
        %v599 = vunpack.c.l.b16 %v562
        %v600 = vunpack.c.h.b16 %v562
        %v601 = vunpack.c.l.b16 %v563
        %v602 = vunpack.c.h.b16 %v563
        %v603 = vunpack.c.l.b16 %v564
        %v604 = vunpack.c.h.b16 %v564
        %v605 = vunpack.c.l.b16 %v565
        %v606 = vunpack.c.h.b16 %v565
        %v607 = vunpack.c.l.b16 %v566
        %v608 = vunpack.c.h.b16 %v566
        %v609 = vunpack.c.l.b16 %v567
        %v610 = vunpack.c.h.b16 %v567
        %v611 = vunpack.c.l.b16 %v568
        %v612 = vunpack.c.h.b16 %v568
        %v613 = vunpack.c.l.b16 %v569
        %v614 = vunpack.c.h.b16 %v569
        %v615 = vunpack.c.l.b16 %v570
        %v616 = vunpack.c.h.b16 %v570
        %v617 = vunpack.c.l.b16 %v571
        %v618 = vunpack.c.h.b16 %v571
        %v619 = vunpack.c.l.b16 %v572
        %v620 = vunpack.c.h.b16 %v572
        %v621 = vpack.c.b16 %v591, %v589
        %v622 = vpack.c.b16 %v592, %v590
        %v623 = vpack.c.b16 %v595, %v593
        %v624 = vpack.c.b16 %v596, %v594
        %v625 = vpack.c.b16 %v599, %v597
        %v626 = vpack.c.b16 %v600, %v598
        %v627 = vpack.c.b16 %v603, %v601
        %v628 = vpack.c.b16 %v604, %v602
        %v629 = vpack.c.b16 %v607, %v605
        %v630 = vpack.c.b16 %v608, %v606
        %v631 = vpack.c.b16 %v611, %v609
        %v632 = vpack.c.b16 %v612, %v610
        %v633 = vpack.c.b16 %v615, %v613
        %v634 = vpack.c.b16 %v616, %v614
        %v635 = vpack.c.b16 %v619, %v617
        %v636 = vpack.c.b16 %v620, %v618
        %653 = vmatpush.bf16.msra.mxu0 %v635
        %654 = vmatpush.bf16.msra.mxu0 %v633
        %655 = vmatpush.bf16.msra.mxu0 %v631
        %656 = vmatpush.bf16.msra.mxu0 %v629
        %657 = vmatpush.bf16.msra.mxu0 %v627
        %658 = vmatpush.bf16.msra.mxu0 %v625
        %659 = vmatpush.bf16.msra.mxu0 %v623
        %660 = vmatpush.bf16.msra.mxu0 %v621
        %661 = vmatmul.bf16.gmra.mxu0 %v554
        %v662 = vpop.f32.mrf.mxu0
        %v663 = vadd.f32 0.0, %v662
        %v664 = vpop.f32.mrf.mxu0
        %v665 = vadd.f32 0.0, %v664
        %666 = vmatmul.bf16.gmra.mxu0 %v555
        %v667 = vpop.f32.mrf.mxu0
        %v668 = vadd.f32 0.0, %v667
        %v669 = vpop.f32.mrf.mxu0
        %670 = vdwg.mxu0
        %671 = vmatpush.bf16.msra.mxu0 %v636
        %672 = vmatpush.bf16.msra.mxu0 %v634
        %673 = vmatpush.bf16.msra.mxu0 %v632
        %674 = vmatpush.bf16.msra.mxu0 %v630
        %675 = vmatpush.bf16.msra.mxu0 %v628
        %676 = vmatpush.bf16.msra.mxu0 %v626
        %677 = vmatpush.bf16.msra.mxu0 %v624
        %678 = vmatpush.bf16.msra.mxu0 %v622
        %679 = vmatmul.bf16.gmra.mxu0 %v554
        %v680 = vpop.f32.mrf.mxu0
        %v681 = vadd.f32 0.0, %v680
        %v682 = vpop.f32.mrf.mxu0
        %v683 = vadd.f32 0.0, %v682
        %684 = vmatmul.bf16.gmra.mxu0 %v555
        %v685 = vpop.f32.mrf.mxu0
        %v686 = vadd.f32 0.0, %v685
        %v687 = vpop.f32.mrf.mxu0
        %688 = vdwg.mxu0
        %v689 = vadd.f32 %v525, %v663
        %v690 = vadd.f32 %v543, %v681
        %v691 = vadd.f32 %v527, %v665
        %v692 = vadd.f32 %v545, %v683
        %v693 = vadd.f32 %v530, %v668
        %v694 = vadd.f32 %v548, %v686
        %v695 = vld [vmem:[%s275 + $0x6] sm:$0xff]
        %v696 = vld [vmem:[%s275 + $0xe] sm:$0xff]
        %v697 = vld [vmem:[%s275 + $0x16] sm:$0x3f]
        %v698 = vpack.c.bf16 %v696, %v695
        %v699 = vpack.c.bf16 %v697, %v697
        %s700 = scalar_lea.vmem %s1, 384
        %v701 = vld [vmem:[%s700] sm:$0xff]
        %v702 = vld [vmem:[%s700 + $0x8] sm:$0xff]
        %v703 = vld [vmem:[%s700 + $0x10] sm:$0xff]
        %v704 = vld [vmem:[%s700 + $0x18] sm:$0xff]
        %v705 = vld [vmem:[%s700 + $0x20] sm:$0xff]
        %v706 = vld [vmem:[%s700 + $0x28] sm:$0xff]
        %v707 = vld [vmem:[%s700 + $0x30] sm:$0xff]
        %v708 = vld [vmem:[%s700 + $0x38] sm:$0xff]
        %v709 = vld [vmem:[%s700 + $0x40] sm:$0xff]
        %v710 = vld [vmem:[%s700 + $0x48] sm:$0xff]
        %v711 = vld [vmem:[%s700 + $0x50] sm:$0xff]
        %v712 = vld [vmem:[%s700 + $0x58] sm:$0xff]
        %v713 = vld [vmem:[%s700 + $0x60] sm:$0xff]
        %v714 = vld [vmem:[%s700 + $0x68] sm:$0xff]
        %v715 = vld [vmem:[%s700 + $0x70] sm:$0xff]
        %v716 = vld [vmem:[%s700 + $0x78] sm:$0xff]
        %v733 = vunpack.c.l.b16 %v701
        %v734 = vunpack.c.h.b16 %v701
        %v735 = vunpack.c.l.b16 %v702
        %v736 = vunpack.c.h.b16 %v702
        %v737 = vunpack.c.l.b16 %v703
        %v738 = vunpack.c.h.b16 %v703
        %v739 = vunpack.c.l.b16 %v704
        %v740 = vunpack.c.h.b16 %v704
        %v741 = vunpack.c.l.b16 %v705
        %v742 = vunpack.c.h.b16 %v705
        %v743 = vunpack.c.l.b16 %v706
        %v744 = vunpack.c.h.b16 %v706
        %v745 = vunpack.c.l.b16 %v707
        %v746 = vunpack.c.h.b16 %v707
        %v747 = vunpack.c.l.b16 %v708
        %v748 = vunpack.c.h.b16 %v708
        %v749 = vunpack.c.l.b16 %v709
        %v750 = vunpack.c.h.b16 %v709
        %v751 = vunpack.c.l.b16 %v710
        %v752 = vunpack.c.h.b16 %v710
        %v753 = vunpack.c.l.b16 %v711
        %v754 = vunpack.c.h.b16 %v711
        %v755 = vunpack.c.l.b16 %v712
        %v756 = vunpack.c.h.b16 %v712
        %v757 = vunpack.c.l.b16 %v713
        %v758 = vunpack.c.h.b16 %v713
        %v759 = vunpack.c.l.b16 %v714
        %v760 = vunpack.c.h.b16 %v714
        %v761 = vunpack.c.l.b16 %v715
        %v762 = vunpack.c.h.b16 %v715
        %v763 = vunpack.c.l.b16 %v716
        %v764 = vunpack.c.h.b16 %v716
        %v765 = vpack.c.b16 %v735, %v733
        %v766 = vpack.c.b16 %v736, %v734
        %v767 = vpack.c.b16 %v739, %v737
        %v768 = vpack.c.b16 %v740, %v738
        %v769 = vpack.c.b16 %v743, %v741
        %v770 = vpack.c.b16 %v744, %v742
        %v771 = vpack.c.b16 %v747, %v745
        %v772 = vpack.c.b16 %v748, %v746
        %v773 = vpack.c.b16 %v751, %v749
        %v774 = vpack.c.b16 %v752, %v750
        %v775 = vpack.c.b16 %v755, %v753
        %v776 = vpack.c.b16 %v756, %v754
        %v777 = vpack.c.b16 %v759, %v757
        %v778 = vpack.c.b16 %v760, %v758
        %v779 = vpack.c.b16 %v763, %v761
        %v780 = vpack.c.b16 %v764, %v762
        %797 = vmatpush.bf16.msra.mxu0 %v779
        %798 = vmatpush.bf16.msra.mxu0 %v777
        %799 = vmatpush.bf16.msra.mxu0 %v775
        %800 = vmatpush.bf16.msra.mxu0 %v773
        %801 = vmatpush.bf16.msra.mxu0 %v771
        %802 = vmatpush.bf16.msra.mxu0 %v769
        %803 = vmatpush.bf16.msra.mxu0 %v767
        %804 = vmatpush.bf16.msra.mxu0 %v765
        %805 = vmatmul.bf16.gmra.mxu0 %v698
        %v806 = vpop.f32.mrf.mxu0
        %v807 = vadd.f32 0.0, %v806
        %v808 = vpop.f32.mrf.mxu0
        %v809 = vadd.f32 0.0, %v808
        %810 = vmatmul.bf16.gmra.mxu0 %v699
        %v811 = vpop.f32.mrf.mxu0
        %v812 = vadd.f32 0.0, %v811
        %v813 = vpop.f32.mrf.mxu0
        %814 = vdwg.mxu0
        %815 = vmatpush.bf16.msra.mxu0 %v780
        %816 = vmatpush.bf16.msra.mxu0 %v778
        %817 = vmatpush.bf16.msra.mxu0 %v776
        %818 = vmatpush.bf16.msra.mxu0 %v774
        %819 = vmatpush.bf16.msra.mxu0 %v772
        %820 = vmatpush.bf16.msra.mxu0 %v770
        %821 = vmatpush.bf16.msra.mxu0 %v768
        %822 = vmatpush.bf16.msra.mxu0 %v766
        %823 = vmatmul.bf16.gmra.mxu0 %v698
        %v824 = vpop.f32.mrf.mxu0
        %v825 = vadd.f32 0.0, %v824
        %v826 = vpop.f32.mrf.mxu0
        %v827 = vadd.f32 0.0, %v826
        %828 = vmatmul.bf16.gmra.mxu0 %v699
        %v829 = vpop.f32.mrf.mxu0
        %v830 = vadd.f32 0.0, %v829
        %v831 = vpop.f32.mrf.mxu0
        %832 = vdwg.mxu0
        %v833 = vadd.f32 %v689, %v807
        %v834 = vadd.f32 %v690, %v825
        %v835 = vadd.f32 %v691, %v809
        %v836 = vadd.f32 %v692, %v827
        %v837 = vadd.f32 %v693, %v812
        %v838 = vadd.f32 %v694, %v830
        %v839 = vld [vmem:[%s275 + $0x7] sm:$0xff]
        %v840 = vld [vmem:[%s275 + $0xf] sm:$0xff]
        %v841 = vld [vmem:[%s275 + $0x17] sm:$0x3f]
        %v842 = vpack.c.bf16 %v840, %v839
        %v843 = vpack.c.bf16 %v841, %v841
        %s844 = scalar_lea.vmem %s1, 512
        %v845 = vld [vmem:[%s844] sm:$0xff]
        %v846 = vld [vmem:[%s844 + $0x8] sm:$0xff]
        %v847 = vld [vmem:[%s844 + $0x10] sm:$0xff]
        %v848 = vld [vmem:[%s844 + $0x18] sm:$0xff]
        %v849 = vld [vmem:[%s844 + $0x20] sm:$0xff]
        %v850 = vld [vmem:[%s844 + $0x28] sm:$0xff]
        %v851 = vld [vmem:[%s844 + $0x30] sm:$0xff]
        %v852 = vld [vmem:[%s844 + $0x38] sm:$0xff]
        %v853 = vld [vmem:[%s844 + $0x40] sm:$0xff]
        %v854 = vld [vmem:[%s844 + $0x48] sm:$0xff]
        %v855 = vld [vmem:[%s844 + $0x50] sm:$0xff]
        %v856 = vld [vmem:[%s844 + $0x58] sm:$0xff]
        %v857 = vld [vmem:[%s844 + $0x60] sm:$0xff]
        %v858 = vld [vmem:[%s844 + $0x68] sm:$0xff]
        %v859 = vld [vmem:[%s844 + $0x70] sm:$0xff]
        %v860 = vld [vmem:[%s844 + $0x78] sm:$0xff]
        %v877 = vunpack.c.l.b16 %v845
        %v878 = vunpack.c.h.b16 %v845
        %v879 = vunpack.c.l.b16 %v846
        %v880 = vunpack.c.h.b16 %v846
        %v881 = vunpack.c.l.b16 %v847
        %v882 = vunpack.c.h.b16 %v847
        %v883 = vunpack.c.l.b16 %v848
        %v884 = vunpack.c.h.b16 %v848
        %v885 = vunpack.c.l.b16 %v849
        %v886 = vunpack.c.h.b16 %v849
        %v887 = vunpack.c.l.b16 %v850
        %v888 = vunpack.c.h.b16 %v850
        %v889 = vunpack.c.l.b16 %v851
        %v890 = vunpack.c.h.b16 %v851
        %v891 = vunpack.c.l.b16 %v852
        %v892 = vunpack.c.h.b16 %v852
        %v893 = vunpack.c.l.b16 %v853
        %v894 = vunpack.c.h.b16 %v853
        %v895 = vunpack.c.l.b16 %v854
        %v896 = vunpack.c.h.b16 %v854
        %v897 = vunpack.c.l.b16 %v855
        %v898 = vunpack.c.h.b16 %v855
        %v899 = vunpack.c.l.b16 %v856
        %v900 = vunpack.c.h.b16 %v856
        %v901 = vunpack.c.l.b16 %v857
        %v902 = vunpack.c.h.b16 %v857
        %v903 = vunpack.c.l.b16 %v858
        %v904 = vunpack.c.h.b16 %v858
        %v905 = vunpack.c.l.b16 %v859
        %v906 = vunpack.c.h.b16 %v859
        %v907 = vunpack.c.l.b16 %v860
        %v908 = vunpack.c.h.b16 %v860
        %v909 = vpack.c.b16 %v879, %v877
        %v910 = vpack.c.b16 %v880, %v878
        %v911 = vpack.c.b16 %v883, %v881
        %v912 = vpack.c.b16 %v884, %v882
        %v913 = vpack.c.b16 %v887, %v885
        %v914 = vpack.c.b16 %v888, %v886
        %v915 = vpack.c.b16 %v891, %v889
        %v916 = vpack.c.b16 %v892, %v890
        %v917 = vpack.c.b16 %v895, %v893
        %v918 = vpack.c.b16 %v896, %v894
        %v919 = vpack.c.b16 %v899, %v897
        %v920 = vpack.c.b16 %v900, %v898
        %v921 = vpack.c.b16 %v903, %v901
        %v922 = vpack.c.b16 %v904, %v902
        %v923 = vpack.c.b16 %v907, %v905
        %v924 = vpack.c.b16 %v908, %v906
        %941 = vmatpush.bf16.msra.mxu0 %v923
        %942 = vmatpush.bf16.msra.mxu0 %v921
        %943 = vmatpush.bf16.msra.mxu0 %v919
        %944 = vmatpush.bf16.msra.mxu0 %v917
        %945 = vmatpush.bf16.msra.mxu0 %v915
        %946 = vmatpush.bf16.msra.mxu0 %v913
        %947 = vmatpush.bf16.msra.mxu0 %v911
        %948 = vmatpush.bf16.msra.mxu0 %v909
        %949 = vmatmul.bf16.gmra.mxu0 %v842
        %v950 = vpop.f32.mrf.mxu0
        %v951 = vadd.f32 0.0, %v950
        %v952 = vpop.f32.mrf.mxu0
        %v953 = vadd.f32 0.0, %v952
        %954 = vmatmul.bf16.gmra.mxu0 %v843
        %v955 = vpop.f32.mrf.mxu0
        %v956 = vadd.f32 0.0, %v955
        %v957 = vpop.f32.mrf.mxu0
        %958 = vdwg.mxu0
        %959 = vmatpush.bf16.msra.mxu0 %v924
        %960 = vmatpush.bf16.msra.mxu0 %v922
        %961 = vmatpush.bf16.msra.mxu0 %v920
        %962 = vmatpush.bf16.msra.mxu0 %v918
        %963 = vmatpush.bf16.msra.mxu0 %v916
        %964 = vmatpush.bf16.msra.mxu0 %v914
        %965 = vmatpush.bf16.msra.mxu0 %v912
        %966 = vmatpush.bf16.msra.mxu0 %v910
        %967 = vmatmul.bf16.gmra.mxu0 %v842
        %v968 = vpop.f32.mrf.mxu0
        %v969 = vadd.f32 0.0, %v968
        %v970 = vpop.f32.mrf.mxu0
        %v971 = vadd.f32 0.0, %v970
        %972 = vmatmul.bf16.gmra.mxu0 %v843
        %v973 = vpop.f32.mrf.mxu0
        %v974 = vadd.f32 0.0, %v973
        %v975 = vpop.f32.mrf.mxu0
        %976 = vdwg.mxu0
        %v977 = vadd.f32 %v833, %v951
        %v978 = vadd.f32 %v834, %v969
        %v979 = vadd.f32 %v835, %v953
        %v980 = vadd.f32 %v836, %v971
        %v981 = vadd.f32 %v837, %v956
        %v982 = vadd.f32 %v838, %v974
        %v983 = vld [vmem:[%s275 + $0x8] sm:$0xff]
        %v984 = vld [vmem:[%s275 + $0x10] sm:$0xff]
        %v985 = vld [vmem:[%s275 + $0x18] sm:$0x3f]
        %v986 = vpack.c.bf16 %v984, %v983
        %v987 = vpack.c.bf16 %v985, %v985
        %s988 = scalar_lea.vmem %s1, 640
        %v989 = vld [vmem:[%s988] sm:$0xff]
        %v990 = vld [vmem:[%s988 + $0x8] sm:$0xff]
        %v991 = vld [vmem:[%s988 + $0x10] sm:$0xff]
        %v992 = vld [vmem:[%s988 + $0x18] sm:$0xff]
        %v993 = vld [vmem:[%s988 + $0x20] sm:$0xff]
        %v994 = vld [vmem:[%s988 + $0x28] sm:$0xff]
        %v995 = vld [vmem:[%s988 + $0x30] sm:$0xff]
        %v996 = vld [vmem:[%s988 + $0x38] sm:$0xff]
        %v997 = vld [vmem:[%s988 + $0x40] sm:$0xff]
        %v998 = vld [vmem:[%s988 + $0x48] sm:$0xff]
        %v999 = vld [vmem:[%s988 + $0x50] sm:$0xff]
        %v1000 = vld [vmem:[%s988 + $0x58] sm:$0xff]
        %v1001 = vld [vmem:[%s988 + $0x60] sm:$0xff]
        %v1002 = vld [vmem:[%s988 + $0x68] sm:$0xff]
        %v1003 = vld [vmem:[%s988 + $0x70] sm:$0xff]
        %v1004 = vld [vmem:[%s988 + $0x78] sm:$0xff]
        %v1021 = vunpack.c.l.b16 %v989
        %v1022 = vunpack.c.h.b16 %v989
        %v1023 = vunpack.c.l.b16 %v990
        %v1024 = vunpack.c.h.b16 %v990
        %v1025 = vunpack.c.l.b16 %v991
        %v1026 = vunpack.c.h.b16 %v991
        %v1027 = vunpack.c.l.b16 %v992
        %v1028 = vunpack.c.h.b16 %v992
        %v1029 = vunpack.c.l.b16 %v993
        %v1030 = vunpack.c.h.b16 %v993
        %v1031 = vunpack.c.l.b16 %v994
        %v1032 = vunpack.c.h.b16 %v994
        %v1033 = vunpack.c.l.b16 %v995
        %v1034 = vunpack.c.h.b16 %v995
        %v1035 = vunpack.c.l.b16 %v996
        %v1036 = vunpack.c.h.b16 %v996
        %v1037 = vunpack.c.l.b16 %v997
        %v1038 = vunpack.c.h.b16 %v997
        %v1039 = vunpack.c.l.b16 %v998
        %v1040 = vunpack.c.h.b16 %v998
        %v1041 = vunpack.c.l.b16 %v999
        %v1042 = vunpack.c.h.b16 %v999
        %v1043 = vunpack.c.l.b16 %v1000
        %v1044 = vunpack.c.h.b16 %v1000
        %v1045 = vunpack.c.l.b16 %v1001
        %v1046 = vunpack.c.h.b16 %v1001
        %v1047 = vunpack.c.l.b16 %v1002
        %v1048 = vunpack.c.h.b16 %v1002
        %v1049 = vunpack.c.l.b16 %v1003
        %v1050 = vunpack.c.h.b16 %v1003
        %v1051 = vunpack.c.l.b16 %v1004
        %v1052 = vunpack.c.h.b16 %v1004
        %v1053 = vpack.c.b16 %v1023, %v1021
        %v1054 = vpack.c.b16 %v1024, %v1022
        %v1055 = vpack.c.b16 %v1027, %v1025
        %v1056 = vpack.c.b16 %v1028, %v1026
        %v1057 = vpack.c.b16 %v1031, %v1029
        %v1058 = vpack.c.b16 %v1032, %v1030
        %v1059 = vpack.c.b16 %v1035, %v1033
        %v1060 = vpack.c.b16 %v1036, %v1034
        %v1061 = vpack.c.b16 %v1039, %v1037
        %v1062 = vpack.c.b16 %v1040, %v1038
        %v1063 = vpack.c.b16 %v1043, %v1041
        %v1064 = vpack.c.b16 %v1044, %v1042
        %v1065 = vpack.c.b16 %v1047, %v1045
        %v1066 = vpack.c.b16 %v1048, %v1046
        %v1067 = vpack.c.b16 %v1051, %v1049
        %v1068 = vpack.c.b16 %v1052, %v1050
        %1085 = vmatpush.bf16.msra.mxu0 %v1067
        %1086 = vmatpush.bf16.msra.mxu0 %v1065
        %1087 = vmatpush.bf16.msra.mxu0 %v1063
        %1088 = vmatpush.bf16.msra.mxu0 %v1061
        %1089 = vmatpush.bf16.msra.mxu0 %v1059
        %1090 = vmatpush.bf16.msra.mxu0 %v1057
        %1091 = vmatpush.bf16.msra.mxu0 %v1055
        %1092 = vmatpush.bf16.msra.mxu0 %v1053
        %1093 = vmatmul.bf16.gmra.mxu0 %v986
        %v1094 = vpop.f32.mrf.mxu0
        %v1095 = vadd.f32 0.0, %v1094
        %v1096 = vpop.f32.mrf.mxu0
        %v1097 = vadd.f32 0.0, %v1096
        %1098 = vmatmul.bf16.gmra.mxu0 %v987
        %v1099 = vpop.f32.mrf.mxu0
        %v1100 = vadd.f32 0.0, %v1099
        %v1101 = vpop.f32.mrf.mxu0
        %1102 = vdwg.mxu0
        %1103 = vmatpush.bf16.msra.mxu0 %v1068
        %1104 = vmatpush.bf16.msra.mxu0 %v1066
        %1105 = vmatpush.bf16.msra.mxu0 %v1064
        %1106 = vmatpush.bf16.msra.mxu0 %v1062
        %1107 = vmatpush.bf16.msra.mxu0 %v1060
        %1108 = vmatpush.bf16.msra.mxu0 %v1058
        %1109 = vmatpush.bf16.msra.mxu0 %v1056
        %1110 = vmatpush.bf16.msra.mxu0 %v1054
        %1111 = vmatmul.bf16.gmra.mxu0 %v986
        %v1112 = vpop.f32.mrf.mxu0
        %v1113 = vadd.f32 0.0, %v1112
        %v1114 = vpop.f32.mrf.mxu0
        %v1115 = vadd.f32 0.0, %v1114
        %1116 = vmatmul.bf16.gmra.mxu0 %v987
        %v1117 = vpop.f32.mrf.mxu0
        %v1118 = vadd.f32 0.0, %v1117
        %v1119 = vpop.f32.mrf.mxu0
        %1120 = vdwg.mxu0
        %v1121 = vadd.f32 %v977, %v1095
        %v1122 = vadd.f32 %v978, %v1113
        %v1123 = vadd.f32 %v979, %v1097
        %v1124 = vadd.f32 %v980, %v1115
        %v1125 = vadd.f32 %v981, %v1100
        %v1126 = vadd.f32 %v982, %v1118
        %v1127 = vld [vmem:[%s275 + $0xc] sm:$0xff]
        %v1128 = vld [vmem:[%s275 + $0x14] sm:$0xff]
        %v1129 = vld [vmem:[%s275 + $0x1c] sm:$0x3f]
        %v1130 = vpack.c.bf16 %v1128, %v1127
        %v1131 = vpack.c.bf16 %v1129, %v1129
        %s1132 = scalar_lea.vmem %s1, 768
        %v1133 = vld [vmem:[%s1132] sm:$0xff]
        %v1134 = vld [vmem:[%s1132 + $0x8] sm:$0xff]
        %v1135 = vld [vmem:[%s1132 + $0x10] sm:$0xff]
        %v1136 = vld [vmem:[%s1132 + $0x18] sm:$0xff]
        %v1137 = vld [vmem:[%s1132 + $0x20] sm:$0xff]
        %v1138 = vld [vmem:[%s1132 + $0x28] sm:$0xff]
        %v1139 = vld [vmem:[%s1132 + $0x30] sm:$0xff]
        %v1140 = vld [vmem:[%s1132 + $0x38] sm:$0xff]
        %v1141 = vld [vmem:[%s1132 + $0x40] sm:$0xff]
        %v1142 = vld [vmem:[%s1132 + $0x48] sm:$0xff]
        %v1143 = vld [vmem:[%s1132 + $0x50] sm:$0xff]
        %v1144 = vld [vmem:[%s1132 + $0x58] sm:$0xff]
        %v1145 = vld [vmem:[%s1132 + $0x60] sm:$0xff]
        %v1146 = vld [vmem:[%s1132 + $0x68] sm:$0xff]
        %v1147 = vld [vmem:[%s1132 + $0x70] sm:$0xff]
        %v1148 = vld [vmem:[%s1132 + $0x78] sm:$0xff]
        %v1165 = vunpack.c.l.b16 %v1133
        %v1166 = vunpack.c.h.b16 %v1133
        %v1167 = vunpack.c.l.b16 %v1134
        %v1168 = vunpack.c.h.b16 %v1134
        %v1169 = vunpack.c.l.b16 %v1135
        %v1170 = vunpack.c.h.b16 %v1135
        %v1171 = vunpack.c.l.b16 %v1136
        %v1172 = vunpack.c.h.b16 %v1136
        %v1173 = vunpack.c.l.b16 %v1137
        %v1174 = vunpack.c.h.b16 %v1137
        %v1175 = vunpack.c.l.b16 %v1138
        %v1176 = vunpack.c.h.b16 %v1138
        %v1177 = vunpack.c.l.b16 %v1139
        %v1178 = vunpack.c.h.b16 %v1139
        %v1179 = vunpack.c.l.b16 %v1140
        %v1180 = vunpack.c.h.b16 %v1140
        %v1181 = vunpack.c.l.b16 %v1141
        %v1182 = vunpack.c.h.b16 %v1141
        %v1183 = vunpack.c.l.b16 %v1142
        %v1184 = vunpack.c.h.b16 %v1142
        %v1185 = vunpack.c.l.b16 %v1143
        %v1186 = vunpack.c.h.b16 %v1143
        %v1187 = vunpack.c.l.b16 %v1144
        %v1188 = vunpack.c.h.b16 %v1144
        %v1189 = vunpack.c.l.b16 %v1145
        %v1190 = vunpack.c.h.b16 %v1145
        %v1191 = vunpack.c.l.b16 %v1146
        %v1192 = vunpack.c.h.b16 %v1146
        %v1193 = vunpack.c.l.b16 %v1147
        %v1194 = vunpack.c.h.b16 %v1147
        %v1195 = vunpack.c.l.b16 %v1148
        %v1196 = vunpack.c.h.b16 %v1148
        %v1197 = vpack.c.b16 %v1167, %v1165
        %v1198 = vpack.c.b16 %v1168, %v1166
        %v1199 = vpack.c.b16 %v1171, %v1169
        %v1200 = vpack.c.b16 %v1172, %v1170
        %v1201 = vpack.c.b16 %v1175, %v1173
        %v1202 = vpack.c.b16 %v1176, %v1174
        %v1203 = vpack.c.b16 %v1179, %v1177
        %v1204 = vpack.c.b16 %v1180, %v1178
        %v1205 = vpack.c.b16 %v1183, %v1181
        %v1206 = vpack.c.b16 %v1184, %v1182
        %v1207 = vpack.c.b16 %v1187, %v1185
        %v1208 = vpack.c.b16 %v1188, %v1186
        %v1209 = vpack.c.b16 %v1191, %v1189
        %v1210 = vpack.c.b16 %v1192, %v1190
        %v1211 = vpack.c.b16 %v1195, %v1193
        %v1212 = vpack.c.b16 %v1196, %v1194
        %1229 = vmatpush.bf16.msra.mxu0 %v1211
        %1230 = vmatpush.bf16.msra.mxu0 %v1209
        %1231 = vmatpush.bf16.msra.mxu0 %v1207
        %1232 = vmatpush.bf16.msra.mxu0 %v1205
        %1233 = vmatpush.bf16.msra.mxu0 %v1203
        %1234 = vmatpush.bf16.msra.mxu0 %v1201
        %1235 = vmatpush.bf16.msra.mxu0 %v1199
        %1236 = vmatpush.bf16.msra.mxu0 %v1197
        %1237 = vmatmul.bf16.gmra.mxu0 %v1130
        %v1238 = vpop.f32.mrf.mxu0
        %v1239 = vadd.f32 0.0, %v1238
        %v1240 = vpop.f32.mrf.mxu0
        %v1241 = vadd.f32 0.0, %v1240
        %1242 = vmatmul.bf16.gmra.mxu0 %v1131
        %v1243 = vpop.f32.mrf.mxu0
        %v1244 = vadd.f32 0.0, %v1243
        %v1245 = vpop.f32.mrf.mxu0
        %1246 = vdwg.mxu0
        %1247 = vmatpush.bf16.msra.mxu0 %v1212
        %1248 = vmatpush.bf16.msra.mxu0 %v1210
        %1249 = vmatpush.bf16.msra.mxu0 %v1208
        %1250 = vmatpush.bf16.msra.mxu0 %v1206
        %1251 = vmatpush.bf16.msra.mxu0 %v1204
        %1252 = vmatpush.bf16.msra.mxu0 %v1202
        %1253 = vmatpush.bf16.msra.mxu0 %v1200
        %1254 = vmatpush.bf16.msra.mxu0 %v1198
        %1255 = vmatmul.bf16.gmra.mxu0 %v1130
        %v1256 = vpop.f32.mrf.mxu0
        %v1257 = vadd.f32 0.0, %v1256
        %v1258 = vpop.f32.mrf.mxu0
        %v1259 = vadd.f32 0.0, %v1258
        %1260 = vmatmul.bf16.gmra.mxu0 %v1131
        %v1261 = vpop.f32.mrf.mxu0
        %v1262 = vadd.f32 0.0, %v1261
        %v1263 = vpop.f32.mrf.mxu0
        %1264 = vdwg.mxu0
        %v1265 = vadd.f32 %v1121, %v1239
        %v1266 = vadd.f32 %v1122, %v1257
        %v1267 = vadd.f32 %v1123, %v1241
        %v1268 = vadd.f32 %v1124, %v1259
        %v1269 = vadd.f32 %v1125, %v1244
        %v1270 = vadd.f32 %v1126, %v1262
        %v1271 = vld [vmem:[%s275 + $0xd] sm:$0xff]
        %v1272 = vld [vmem:[%s275 + $0x15] sm:$0xff]
        %v1273 = vld [vmem:[%s275 + $0x1d] sm:$0x3f]
        %v1274 = vpack.c.bf16 %v1272, %v1271
        %v1275 = vpack.c.bf16 %v1273, %v1273
        %s1276 = scalar_lea.vmem %s1, 896
        %v1277 = vld [vmem:[%s1276] sm:$0xff]
        %v1278 = vld [vmem:[%s1276 + $0x8] sm:$0xff]
        %v1279 = vld [vmem:[%s1276 + $0x10] sm:$0xff]
        %v1280 = vld [vmem:[%s1276 + $0x18] sm:$0xff]
        %v1281 = vld [vmem:[%s1276 + $0x20] sm:$0xff]
        %v1282 = vld [vmem:[%s1276 + $0x28] sm:$0xff]
        %v1283 = vld [vmem:[%s1276 + $0x30] sm:$0xff]
        %v1284 = vld [vmem:[%s1276 + $0x38] sm:$0xff]
        %v1285 = vld [vmem:[%s1276 + $0x40] sm:$0xff]
        %v1286 = vld [vmem:[%s1276 + $0x48] sm:$0xff]
        %v1287 = vld [vmem:[%s1276 + $0x50] sm:$0xff]
        %v1288 = vld [vmem:[%s1276 + $0x58] sm:$0xff]
        %v1289 = vld [vmem:[%s1276 + $0x60] sm:$0xff]
        %v1290 = vld [vmem:[%s1276 + $0x68] sm:$0xff]
        %v1291 = vld [vmem:[%s1276 + $0x70] sm:$0xff]
        %v1292 = vld [vmem:[%s1276 + $0x78] sm:$0xff]
        %v1309 = vunpack.c.l.b16 %v1277
        %v1310 = vunpack.c.h.b16 %v1277
        %v1311 = vunpack.c.l.b16 %v1278
        %v1312 = vunpack.c.h.b16 %v1278
        %v1313 = vunpack.c.l.b16 %v1279
        %v1314 = vunpack.c.h.b16 %v1279
        %v1315 = vunpack.c.l.b16 %v1280
        %v1316 = vunpack.c.h.b16 %v1280
        %v1317 = vunpack.c.l.b16 %v1281
        %v1318 = vunpack.c.h.b16 %v1281
        %v1319 = vunpack.c.l.b16 %v1282
        %v1320 = vunpack.c.h.b16 %v1282
        %v1321 = vunpack.c.l.b16 %v1283
        %v1322 = vunpack.c.h.b16 %v1283
        %v1323 = vunpack.c.l.b16 %v1284
        %v1324 = vunpack.c.h.b16 %v1284
        %v1325 = vunpack.c.l.b16 %v1285
        %v1326 = vunpack.c.h.b16 %v1285
        %v1327 = vunpack.c.l.b16 %v1286
        %v1328 = vunpack.c.h.b16 %v1286
        %v1329 = vunpack.c.l.b16 %v1287
        %v1330 = vunpack.c.h.b16 %v1287
        %v1331 = vunpack.c.l.b16 %v1288
        %v1332 = vunpack.c.h.b16 %v1288
        %v1333 = vunpack.c.l.b16 %v1289
        %v1334 = vunpack.c.h.b16 %v1289
        %v1335 = vunpack.c.l.b16 %v1290
        %v1336 = vunpack.c.h.b16 %v1290
        %v1337 = vunpack.c.l.b16 %v1291
        %v1338 = vunpack.c.h.b16 %v1291
        %v1339 = vunpack.c.l.b16 %v1292
        %v1340 = vunpack.c.h.b16 %v1292
        %v1341 = vpack.c.b16 %v1311, %v1309
        %v1342 = vpack.c.b16 %v1312, %v1310
        %v1343 = vpack.c.b16 %v1315, %v1313
        %v1344 = vpack.c.b16 %v1316, %v1314
        %v1345 = vpack.c.b16 %v1319, %v1317
        %v1346 = vpack.c.b16 %v1320, %v1318
        %v1347 = vpack.c.b16 %v1323, %v1321
        %v1348 = vpack.c.b16 %v1324, %v1322
        %v1349 = vpack.c.b16 %v1327, %v1325
        %v1350 = vpack.c.b16 %v1328, %v1326
        %v1351 = vpack.c.b16 %v1331, %v1329
        %v1352 = vpack.c.b16 %v1332, %v1330
        %v1353 = vpack.c.b16 %v1335, %v1333
        %v1354 = vpack.c.b16 %v1336, %v1334
        %v1355 = vpack.c.b16 %v1339, %v1337
        %v1356 = vpack.c.b16 %v1340, %v1338
        %1373 = vmatpush.bf16.msra.mxu0 %v1355
        %1374 = vmatpush.bf16.msra.mxu0 %v1353
        %1375 = vmatpush.bf16.msra.mxu0 %v1351
        %1376 = vmatpush.bf16.msra.mxu0 %v1349
        %1377 = vmatpush.bf16.msra.mxu0 %v1347
        %1378 = vmatpush.bf16.msra.mxu0 %v1345
        %1379 = vmatpush.bf16.msra.mxu0 %v1343
        %1380 = vmatpush.bf16.msra.mxu0 %v1341
        %1381 = vmatmul.bf16.gmra.mxu0 %v1274
        %v1382 = vpop.f32.mrf.mxu0
        %v1383 = vadd.f32 0.0, %v1382
        %v1384 = vpop.f32.mrf.mxu0
        %v1385 = vadd.f32 0.0, %v1384
        %1386 = vmatmul.bf16.gmra.mxu0 %v1275
        %v1387 = vpop.f32.mrf.mxu0
        %v1388 = vadd.f32 0.0, %v1387
        %v1389 = vpop.f32.mrf.mxu0
        %1390 = vdwg.mxu0
        %1391 = vmatpush.bf16.msra.mxu0 %v1356
        %1392 = vmatpush.bf16.msra.mxu0 %v1354
        %1393 = vmatpush.bf16.msra.mxu0 %v1352
        %1394 = vmatpush.bf16.msra.mxu0 %v1350
        %1395 = vmatpush.bf16.msra.mxu0 %v1348
        %1396 = vmatpush.bf16.msra.mxu0 %v1346
        %1397 = vmatpush.bf16.msra.mxu0 %v1344
        %1398 = vmatpush.bf16.msra.mxu0 %v1342
        %1399 = vmatmul.bf16.gmra.mxu0 %v1274
        %v1400 = vpop.f32.mrf.mxu0
        %v1401 = vadd.f32 0.0, %v1400
        %v1402 = vpop.f32.mrf.mxu0
        %v1403 = vadd.f32 0.0, %v1402
        %1404 = vmatmul.bf16.gmra.mxu0 %v1275
        %v1405 = vpop.f32.mrf.mxu0
        %v1406 = vadd.f32 0.0, %v1405
        %v1407 = vpop.f32.mrf.mxu0
        %1408 = vdwg.mxu0
        %v1409 = vadd.f32 %v1265, %v1383
        %v1410 = vadd.f32 %v1266, %v1401
        %v1411 = vadd.f32 %v1267, %v1385
        %v1412 = vadd.f32 %v1268, %v1403
        %v1413 = vadd.f32 %v1269, %v1388
        %v1414 = vadd.f32 %v1270, %v1406
        %v1415 = vld [vmem:[%s275 + $0xe] sm:$0xff]
        %v1416 = vld [vmem:[%s275 + $0x16] sm:$0xff]
        %v1417 = vld [vmem:[%s275 + $0x1e] sm:$0x3f]
        %v1418 = vpack.c.bf16 %v1416, %v1415
        %v1419 = vpack.c.bf16 %v1417, %v1417
        %s1420 = scalar_lea.vmem %s1, 1024
        %v1421 = vld [vmem:[%s1420] sm:$0xff]
        %v1422 = vld [vmem:[%s1420 + $0x8] sm:$0xff]
        %v1423 = vld [vmem:[%s1420 + $0x10] sm:$0xff]
        %v1424 = vld [vmem:[%s1420 + $0x18] sm:$0xff]
        %v1425 = vld [vmem:[%s1420 + $0x20] sm:$0xff]
        %v1426 = vld [vmem:[%s1420 + $0x28] sm:$0xff]
        %v1427 = vld [vmem:[%s1420 + $0x30] sm:$0xff]
        %v1428 = vld [vmem:[%s1420 + $0x38] sm:$0xff]
        %v1429 = vld [vmem:[%s1420 + $0x40] sm:$0xff]
        %v1430 = vld [vmem:[%s1420 + $0x48] sm:$0xff]
        %v1431 = vld [vmem:[%s1420 + $0x50] sm:$0xff]
        %v1432 = vld [vmem:[%s1420 + $0x58] sm:$0xff]
        %v1433 = vld [vmem:[%s1420 + $0x60] sm:$0xff]
        %v1434 = vld [vmem:[%s1420 + $0x68] sm:$0xff]
        %v1435 = vld [vmem:[%s1420 + $0x70] sm:$0xff]
        %v1436 = vld [vmem:[%s1420 + $0x78] sm:$0xff]
        %v1453 = vunpack.c.l.b16 %v1421
        %v1454 = vunpack.c.h.b16 %v1421
        %v1455 = vunpack.c.l.b16 %v1422
        %v1456 = vunpack.c.h.b16 %v1422
        %v1457 = vunpack.c.l.b16 %v1423
        %v1458 = vunpack.c.h.b16 %v1423
        %v1459 = vunpack.c.l.b16 %v1424
        %v1460 = vunpack.c.h.b16 %v1424
        %v1461 = vunpack.c.l.b16 %v1425
        %v1462 = vunpack.c.h.b16 %v1425
        %v1463 = vunpack.c.l.b16 %v1426
        %v1464 = vunpack.c.h.b16 %v1426
        %v1465 = vunpack.c.l.b16 %v1427
        %v1466 = vunpack.c.h.b16 %v1427
        %v1467 = vunpack.c.l.b16 %v1428
        %v1468 = vunpack.c.h.b16 %v1428
        %v1469 = vunpack.c.l.b16 %v1429
        %v1470 = vunpack.c.h.b16 %v1429
        %v1471 = vunpack.c.l.b16 %v1430
        %v1472 = vunpack.c.h.b16 %v1430
        %v1473 = vunpack.c.l.b16 %v1431
        %v1474 = vunpack.c.h.b16 %v1431
        %v1475 = vunpack.c.l.b16 %v1432
        %v1476 = vunpack.c.h.b16 %v1432
        %v1477 = vunpack.c.l.b16 %v1433
        %v1478 = vunpack.c.h.b16 %v1433
        %v1479 = vunpack.c.l.b16 %v1434
        %v1480 = vunpack.c.h.b16 %v1434
        %v1481 = vunpack.c.l.b16 %v1435
        %v1482 = vunpack.c.h.b16 %v1435
        %v1483 = vunpack.c.l.b16 %v1436
        %v1484 = vunpack.c.h.b16 %v1436
        %v1485 = vpack.c.b16 %v1455, %v1453
        %v1486 = vpack.c.b16 %v1456, %v1454
        %v1487 = vpack.c.b16 %v1459, %v1457
        %v1488 = vpack.c.b16 %v1460, %v1458
        %v1489 = vpack.c.b16 %v1463, %v1461
        %v1490 = vpack.c.b16 %v1464, %v1462
        %v1491 = vpack.c.b16 %v1467, %v1465
        %v1492 = vpack.c.b16 %v1468, %v1466
        %v1493 = vpack.c.b16 %v1471, %v1469
        %v1494 = vpack.c.b16 %v1472, %v1470
        %v1495 = vpack.c.b16 %v1475, %v1473
        %v1496 = vpack.c.b16 %v1476, %v1474
        %v1497 = vpack.c.b16 %v1479, %v1477
        %v1498 = vpack.c.b16 %v1480, %v1478
        %v1499 = vpack.c.b16 %v1483, %v1481
        %v1500 = vpack.c.b16 %v1484, %v1482
        %1517 = vmatpush.bf16.msra.mxu0 %v1499
        %1518 = vmatpush.bf16.msra.mxu0 %v1497
        %1519 = vmatpush.bf16.msra.mxu0 %v1495
        %1520 = vmatpush.bf16.msra.mxu0 %v1493
        %1521 = vmatpush.bf16.msra.mxu0 %v1491
        %1522 = vmatpush.bf16.msra.mxu0 %v1489
        %1523 = vmatpush.bf16.msra.mxu0 %v1487
        %1524 = vmatpush.bf16.msra.mxu0 %v1485
        %1525 = vmatmul.bf16.gmra.mxu0 %v1418
        %v1526 = vpop.f32.mrf.mxu0
        %v1527 = vadd.f32 0.0, %v1526
        %v1528 = vpop.f32.mrf.mxu0
        %v1529 = vadd.f32 0.0, %v1528
        %1530 = vmatmul.bf16.gmra.mxu0 %v1419
        %v1531 = vpop.f32.mrf.mxu0
        %v1532 = vadd.f32 0.0, %v1531
        %v1533 = vpop.f32.mrf.mxu0
        %1534 = vdwg.mxu0
        %1535 = vmatpush.bf16.msra.mxu0 %v1500
        %1536 = vmatpush.bf16.msra.mxu0 %v1498
        %1537 = vmatpush.bf16.msra.mxu0 %v1496
        %1538 = vmatpush.bf16.msra.mxu0 %v1494
        %1539 = vmatpush.bf16.msra.mxu0 %v1492
        %1540 = vmatpush.bf16.msra.mxu0 %v1490
        %1541 = vmatpush.bf16.msra.mxu0 %v1488
        %1542 = vmatpush.bf16.msra.mxu0 %v1486
        %1543 = vmatmul.bf16.gmra.mxu0 %v1418
        %v1544 = vpop.f32.mrf.mxu0
        %v1545 = vadd.f32 0.0, %v1544
        %v1546 = vpop.f32.mrf.mxu0
        %v1547 = vadd.f32 0.0, %v1546
        %1548 = vmatmul.bf16.gmra.mxu0 %v1419
        %v1549 = vpop.f32.mrf.mxu0
        %v1550 = vadd.f32 0.0, %v1549
        %v1551 = vpop.f32.mrf.mxu0
        %1552 = vdwg.mxu0
        %v1553 = vadd.f32 %v1409, %v1527
        %v1554 = vadd.f32 %v1410, %v1545
        %v1555 = vadd.f32 %v1411, %v1529
        %v1556 = vadd.f32 %v1412, %v1547
        %v1557 = vadd.f32 %v1413, %v1532
        %v1558 = vadd.f32 %v1414, %v1550
        %v1559 = vld [vmem:[%s2] sm:$0x3]
        %v1561 = vperm.slane %v1559, 0
        %v1562 = vperm.slane %v1559, 1
        %v1565 = vmul.f32 %v1553, %v1561
        %v1566 = vmul.f32 %v1554, %v1562
        %v1567 = vmul.f32 %v1555, %v1561
        %v1568 = vmul.f32 %v1556, %v1562
        %v1569 = vmul.f32 %v1557, %v1561
        %v1570 = vmul.f32 %v1558, %v1562
        %v1571 = vld [vmem:[%s3] sm:$0x3]
        %v1573 = vperm.slane %v1571, 0
        %v1574 = vperm.slane %v1571, 1
        %v1577 = vadd.f32 %v1565, %v1573
        %v1578 = vadd.f32 %v1566, %v1574
        %v1579 = vadd.f32 %v1567, %v1573
        %v1580 = vadd.f32 %v1568, %v1574
        %v1581 = vadd.f32 %v1569, %v1573
        %v1582 = vadd.f32 %v1570, %v1574
        %v1583 = vmax.f32 %v1577, 0.0
        %v1584 = vmax.f32 %v1578, 0.0
        %v1585 = vmax.f32 %v1579, 0.0
        %v1586 = vmax.f32 %v1580, 0.0
        %v1587 = vmax.f32 %v1581, 0.0
        %v1588 = vmax.f32 %v1582, 0.0
        %vm1595 = vcmask 1046528
        %v1596 = vrot.slane %v1583, 1
        %v1597 = vrot.slane %v1585, 1
        %v1598 = vsel %vm1595, %v1596, %v1597
        %v1599 = vrot.slane %v1584, 1
        %v1600 = vrot.slane %v1586, 1
        %v1601 = vsel %vm1595, %v1599, %v1600
        %v1602 = vrot.slane %v1587, 1
        %v1603 = vsel %vm1595, %v1597, %v1602
        %v1604 = vrot.slane %v1588, 1
        %v1605 = vsel %vm1595, %v1600, %v1604
        %v1612 = vmax.f32 %v1583, %v1598
        %v1613 = vmax.f32 %v1584, %v1601
        %v1614 = vmax.f32 %v1585, %v1603
        %v1615 = vmax.f32 %v1586, %v1605
        %v1616 = vmax.f32 %v1587, %v1602
        %v1617 = vmax.f32 %v1588, %v1604
        %vm1624 = vcmask 1041408
        %v1625 = vrot.slane %v1612, 6
        %v1626 = vrot.slane %v1614, 6
        %v1627 = vsel %vm1624, %v1625, %v1626
        %v1628 = vrot.slane %v1613, 6
        %v1629 = vrot.slane %v1615, 6
        %v1630 = vsel %vm1624, %v1628, %v1629
        %v1631 = vrot.slane %v1616, 6
        %v1632 = vsel %vm1624, %v1626, %v1631
        %v1633 = vrot.slane %v1617, 6
        %v1634 = vsel %vm1624, %v1629, %v1633
        %v1639 = vmax.f32 %v1612, %v1627
        %v1640 = vmax.f32 %v1613, %v1630
        %v1641 = vmax.f32 %v1614, %v1632
        %v1642 = vmax.f32 %v1615, %v1634
        %v1643 = vld [vmem:[%s4] sm:$0x1]
        %vm1644 = vcmask 121856
        %v1646 = vsel %vm1644, %v1643, 0
        %v1649 = vsel %vm1595, %v1641, 0
        %v1652 = vsel %vm1595, %v1642, 0
        %1654 = vmatpush.msra.mxu0 0.0
        %1655 = vmatpush.msra.mxu0 0.0
        %1656 = vmatpush.msra.mxu0 0.0
        %1657 = vmatpush.msra.mxu0 0.0
        %1658 = vmatpush.msra.mxu0 0.0
        %1659 = vmatpush.msra.mxu0 0.0
        %1660 = vmatpush.msra.mxu0 0.0
        %1661 = vmatpush.msra.mxu0 0.0
        %1662 = vmatpush.msra.mxu0 0.0
        %1663 = vmatpush.msra.mxu0 0.0
        %1664 = vmatpush.msra.mxu0 0.0
        %1665 = vmatpush.msra.mxu0 0.0
        %1666 = vmatpush.msra.mxu0 0.0
        %1667 = vmatpush.msra.mxu0 0.0
        %1668 = vmatpush.msra.mxu0 %v1649
        %1669 = vmatpush.msra.mxu0 %v1639
        %1670 = vmatmul.f32.gmra.mxu0 %v1646
        %v1671 = vpop.f32.mrf.mxu0
        %v1672 = vadd.f32 0.0, %v1671
        %1673 = vdwg.mxu0
        %1674 = vmatpush.msra.mxu0 0.0
        %1675 = vmatpush.msra.mxu0 0.0
        %1676 = vmatpush.msra.mxu0 0.0
        %1677 = vmatpush.msra.mxu0 0.0
        %1678 = vmatpush.msra.mxu0 0.0
        %1679 = vmatpush.msra.mxu0 0.0
        %1680 = vmatpush.msra.mxu0 0.0
        %1681 = vmatpush.msra.mxu0 0.0
        %1682 = vmatpush.msra.mxu0 0.0
        %1683 = vmatpush.msra.mxu0 0.0
        %1684 = vmatpush.msra.mxu0 0.0
        %1685 = vmatpush.msra.mxu0 0.0
        %1686 = vmatpush.msra.mxu0 0.0
        %1687 = vmatpush.msra.mxu0 0.0
        %1688 = vmatpush.msra.mxu0 %v1652
        %1689 = vmatpush.msra.mxu0 %v1640
        %1690 = vmatmul.f32.gmra.mxu0 %v1646
        %v1691 = vpop.f32.mrf.mxu0
        %v1692 = vadd.f32 0.0, %v1691
        %1693 = vdwg.mxu0
        %v1694 = vld [vmem:[%s5] sm:$0xff]
        %v1695 = vld [vmem:[%s5 + $0x8] sm:$0xff]
        %v1696 = vld [vmem:[%s5 + $0x10] sm:$0xff]
        %v1697 = vld [vmem:[%s5 + $0x18] sm:$0xff]
        %v1698 = vld [vmem:[%s5 + $0x20] sm:$0xff]
        %v1699 = vld [vmem:[%s5 + $0x28] sm:$0xff]
        %v1700 = vld [vmem:[%s5 + $0x30] sm:$0xff]
        %v1701 = vld [vmem:[%s5 + $0x38] sm:$0xff]
        %v1702 = vld [vmem:[%s5 + $0x40] sm:$0xff]
        %v1703 = vld [vmem:[%s5 + $0x48] sm:$0xff]
        %v1704 = vld [vmem:[%s5 + $0x50] sm:$0xff]
        %v1705 = vld [vmem:[%s5 + $0x58] sm:$0xff]
        %v1706 = vld [vmem:[%s5 + $0x60] sm:$0xff]
        %v1707 = vld [vmem:[%s5 + $0x68] sm:$0xff]
        %v1708 = vld [vmem:[%s5 + $0x70] sm:$0xff]
        %v1709 = vld [vmem:[%s5 + $0x78] sm:$0xff]
        %v1710 = vld [vmem:[%s5 + $0x80] sm:$0xff]
        %v1711 = vld [vmem:[%s5 + $0x88] sm:$0xff]
        %v1712 = vld [vmem:[%s5 + $0x90] sm:$0xff]
        %v1713 = vld [vmem:[%s5 + $0x98] sm:$0xff]
        %v1714 = vld [vmem:[%s5 + $0xa0] sm:$0xff]
        %v1715 = vld [vmem:[%s5 + $0xa8] sm:$0xff]
        %v1716 = vld [vmem:[%s5 + $0xb0] sm:$0xff]
        %v1717 = vld [vmem:[%s5 + $0xb8] sm:$0xff]
        %v1718 = vld [vmem:[%s5 + $0xc0] sm:$0xff]
        %v1719 = vld [vmem:[%s5 + $0xc8] sm:$0xff]
        %v1720 = vld [vmem:[%s5 + $0xd0] sm:$0xff]
        %v1721 = vld [vmem:[%s5 + $0xd8] sm:$0xff]
        %v1722 = vld [vmem:[%s5 + $0xe0] sm:$0xff]
        %v1723 = vld [vmem:[%s5 + $0xe8] sm:$0xff]
        %v1724 = vld [vmem:[%s5 + $0xf0] sm:$0xff]
        %v1725 = vld [vmem:[%s5 + $0xf8] sm:$0xff]
        %v1726 = vld [vmem:[%s6] sm:$0x1]
        %1727 = vmatpush.msra.mxu0 %v1709
        %1728 = vmatpush.msra.mxu0 %v1708
        %1729 = vmatpush.msra.mxu0 %v1707
        %1730 = vmatpush.msra.mxu0 %v1706
        %1731 = vmatpush.msra.mxu0 %v1705
        %1732 = vmatpush.msra.mxu0 %v1704
        %1733 = vmatpush.msra.mxu0 %v1703
        %1734 = vmatpush.msra.mxu0 %v1702
        %1735 = vmatpush.msra.mxu0 %v1701
        %1736 = vmatpush.msra.mxu0 %v1700
        %1737 = vmatpush.msra.mxu0 %v1699
        %1738 = vmatpush.msra.mxu0 %v1698
        %1739 = vmatpush.msra.mxu0 %v1697
        %1740 = vmatpush.msra.mxu0 %v1696
        %1741 = vmatpush.msra.mxu0 %v1695
        %1742 = vmatpush.msra.mxu0 %v1694
        %1743 = vmatmul.f32.gmra.mxu0 %v1672
        %v1744 = vpop.f32.mrf.mxu0
        %v1745 = vadd.f32 %v1726, %v1744
        %1746 = vdwg.mxu0
        %1747 = vmatpush.msra.mxu0 %v1725
        %1748 = vmatpush.msra.mxu0 %v1724
        %1749 = vmatpush.msra.mxu0 %v1723
        %1750 = vmatpush.msra.mxu0 %v1722
        %1751 = vmatpush.msra.mxu0 %v1721
        %1752 = vmatpush.msra.mxu0 %v1720
        %1753 = vmatpush.msra.mxu0 %v1719
        %1754 = vmatpush.msra.mxu0 %v1718
        %1755 = vmatpush.msra.mxu0 %v1717
        %1756 = vmatpush.msra.mxu0 %v1716
        %1757 = vmatpush.msra.mxu0 %v1715
        %1758 = vmatpush.msra.mxu0 %v1714
        %1759 = vmatpush.msra.mxu0 %v1713
        %1760 = vmatpush.msra.mxu0 %v1712
        %1761 = vmatpush.msra.mxu0 %v1711
        %1762 = vmatpush.msra.mxu0 %v1710
        %1763 = vmatmul.f32.gmra.mxu0 %v1692
        %v1764 = vpop.f32.mrf.mxu0
        %v1765 = vadd.f32 %v1745, %v1764
        %1766 = vdwg.mxu0
        %vm1767 = vcmask 73728
        %1768 = vst.msk [vmem:[%s270] sm:$0x1] %vm1767, %v1765
        %s1769 = sand.u32 %s181, 1
        %s1770 = scalar_lea.sflag [#allocation3], %s1769
        %s1771 = sand.u32 %s181, 1
        %s1772 = scalar_lea.vmem [#allocation2], %s1771
        // Predicated region
        $region49: #{toy_model_forward.5} parent=47 // pred_check
          %p1773 = pneg %p191
        $region50: #{toy_model_forward.5} parent=47 // pred_check_branch
          %1775 = sbr.rel (%p1773) target = $region52
        $region51: #{toy_model_forward.5} parent=47 // pred_region
          %1777 = vsyncadd %s1770, 0
          %s1778 = scalar_lea.hbm %s7, %s21
          %s1780 = sshll.u32 %s1772, 4
          %s1781 = int_to_ptr.vmem [resolvable:$true] %s1780
          %s1782 = sshll.u32 %s1778, 4
          %s1783 = int_to_ptr.hbm [resolvable:$true] %s1782
          %1785 = dma.vmem_to_hbm [thread:$0]  %s1781, 16, %s1783, %s1770
        $region52: #{toy_model_forward.5} parent=47 // pred_fallthru
          _
      $region48: #{toy_model_forward.5} parent=5 // pred_fallthru
        _
      %p1786 = scmp.le.s32.totalorder 2, %s16
      // Predicated region
      $region53: #{toy_model_forward.5} parent=5 // pred_check
        %p1787 = pneg %p1786
      $region54: #{toy_model_forward.5} parent=5 // pred_check_branch
        %1789 = sbr.rel (%p1787) target = $region56
      $region55: #{toy_model_forward.5} parent=5 // pred_region
        %s1790 = ssub.s32 %s16, 2
        // Predicated region
        $region57: #{toy_model_forward.5} parent=55 // pred_check
          %p1791 = pneg %p197
        $region58: #{toy_model_forward.5} parent=55 // pred_check_branch
          %1793 = sbr.rel (%p1791) target = $region60
        $region59: #{toy_model_forward.5} parent=55 // pred_region
          %s1794 = sand.u32 %s182, 1
          %s1795 = scalar_lea.sflag [#allocation3], %s1794
          %s1796 = sand.u32 %s182, 1
          %s1797 = scalar_lea.vmem [#allocation2], %s1796
          %1799 = dma.done %s1795, 16
        $region60: #{toy_model_forward.5} parent=55 // pred_fallthru
          _
      $region56: #{toy_model_forward.5} parent=5 // pred_fallthru
        _
    $region6: #{toy_model_forward.5} parent=1 // loop_footer
      %s20 = sadd.s32 1, %s16
    $region7: #{toy_model_forward.5} parent=1 // loop_footer_branch
      %15 = sbr.rel target = $region3
    $region8: #{toy_model_forward.5} parent=1 // loop_exit
      _
    %1800 = vsyncpa [#allocation3], 1
    %s1801 = scalar_lea.sflag [#allocation3], 1
    %1802 = vsyncpa %s1801, 1

// kernel: toy_model_forward.3
$region0: #{toy_model_forward.3}
  #allocation0 [shape = 'u32[]', space=smem, size = 0x4, offset = 0x4, fixed_abs, tag = 'smem constant byte address 0x4 - core index']
  #allocation1 [shape = 'u32[72,128]{1,0:T(1,128)}', space=vmem, size = 0x9000, scoped, tag = 'internal scratch']
  %s0 = inlined_call_operand.vmem [shape: f32[2,324,3], index: 0, kind: input, shape index: {}]
  %s1 = inlined_call_operand.vmem [shape: bf16[9,3,64], index: 1, kind: input, shape index: {}]
  %s2 = inlined_call_operand.vmem [shape: f32[1,64], index: 2, kind: input, shape index: {}]
  %s3 = inlined_call_operand.vmem [shape: f32[1,64], index: 3, kind: input, shape index: {}]
  %s4 = inlined_call_operand.hbm [shape: f32[100,267], index: 4, kind: input, shape index: {}]
  %s5 = inlined_call_operand.vmem [shape: f32[2,100,64], index: 5, kind: output, shape index: {}]
  %s6 = sld [smem:[#allocation0]]
  $region57: #{toy_model_forward.3} parent=0
    _
  %s8 = ssub.s32 1, %s6
  %s9 = scalar_select 0, %s8, %s6
  $region1: #{toy_model_forward.3} parent=0
    #allocation2 [shape = 'u8[159744]{0}', space=vmem, size = 0x27000, scoped, tag = 'input window, operand 4, single buffered']
    #allocation3 [shape = 's32[2]{0}', space=sflag, size = 0x8, scoped, tag = 'scoped memory for toy_model_forward.3']
    %10 = vsyncpa [#allocation3], 0
    loop: start=0, step=1, limit=4
    $region2: #{toy_model_forward.3} parent=1 // loop_pre_header
      _
    $region3: #{toy_model_forward.3} parent=1 // loop_header
      %s12 = sphi 0, %s16
      %p13 = scmp.ge.s32.totalorder %s12, 4
      %s22 = sphi 0, %s24
      %s25 = sphi 0, %s22
      %s26 = sphi 0, %s25
      %s42 = sphi 0, %s26
      %s46 = sphi 0, %s46
      %s48 = sphi 0, %s46
      %s49 = sphi 0, %s48
      %s63 = sphi 0, %s49
      %s67 = sphi 0, %s67
      %s69 = sphi 0, %s67
      %s70 = sphi 0, %s69
      %s84 = sphi 0, %s70
      %s88 = sphi 0, %s88
      %s90 = sphi 0, %s88
      %s91 = sphi 0, %s90
      %s105 = sphi 0, %s91
      %s109 = sphi 0, %s109
      %s111 = sphi 0, %s109
      %s112 = sphi 0, %s111
      %s126 = sphi 0, %s112
      %s132 = sphi 0, %s134
      %s135 = sphi 0, %s132
      %s136 = sphi 0, %s135
      %s152 = sphi 0, %s136
    $region4: #{toy_model_forward.3} parent=1 // loop_header_branch
      %15 = sbr.rel (%p13) target = $region8
    $region5: #{toy_model_forward.3} parent=1 // loop_body
      %s17 = ssub.s32 %s12, 1
      %s18 = ssub.s32 %s12, 2
      %s19 = sadd.s32 %s12, 1
      %s20 = ssub.s32 %s12, %s19
      %p21 = scmp.eq.s32.totalorder %s20, 0
      %s23 = sadd.s32 %s22, 1
      %s24 = scalar_select %p21, %s22, %s23
      %p27 = pneg %p21
      %p28 = scmp.eq.s32.totalorder %s12, 1
      %p29 = por %p27, %p28
      %p30 = scmp.ne.s32.totalorder %s22, %s25
      %p31 = scmp.eq.s32.totalorder %s12, 0
      %p32 = por %p30, %p31
      %p33 = scmp.ne.s32.totalorder %s22, %s25
      %p34 = scmp.eq.s32.totalorder %s17, 1
      %p35 = por %p33, %p34
      %p36 = scmp.ne.s32.totalorder %s25, %s26
      %p37 = scmp.eq.s32.totalorder %s17, 0
      %p38 = por %p36, %p37
      %p39 = scmp.ne.s32.totalorder %s25, %s26
      %p40 = scmp.eq.s32.totalorder %s18, 1
      %p41 = por %p39, %p40
      %p43 = scmp.ne.s32.totalorder %s26, %s42
      %p44 = scmp.eq.s32.totalorder %s18, 0
      %p45 = por %p43, %p44
      %s47 = sadd.s32 %s46, 1
      %p50 = scmp.eq.s32.totalorder %s12, 1
      %p51 = scmp.ne.s32.totalorder %s46, %s48
      %p52 = scmp.eq.s32.totalorder %s12, 0
      %p53 = por %p51, %p52
      %p54 = scmp.ne.s32.totalorder %s46, %s48
      %p55 = scmp.eq.s32.totalorder %s17, 1
      %p56 = por %p54, %p55
      %p57 = scmp.ne.s32.totalorder %s48, %s49
      %p58 = scmp.eq.s32.totalorder %s17, 0
      %p59 = por %p57, %p58
      %p60 = scmp.ne.s32.totalorder %s48, %s49
      %p61 = scmp.eq.s32.totalorder %s18, 1
      %p62 = por %p60, %p61
      %p64 = scmp.ne.s32.totalorder %s49, %s63
      %p65 = scmp.eq.s32.totalorder %s18, 0
      %p66 = por %p64, %p65
      %s68 = sadd.s32 %s67, 1
      %p71 = scmp.eq.s32.totalorder %s12, 1
      %p72 = scmp.ne.s32.totalorder %s67, %s69
      %p73 = scmp.eq.s32.totalorder %s12, 0
      %p74 = por %p72, %p73
      %p75 = scmp.ne.s32.totalorder %s67, %s69
      %p76 = scmp.eq.s32.totalorder %s17, 1
      %p77 = por %p75, %p76
      %p78 = scmp.ne.s32.totalorder %s69, %s70
      %p79 = scmp.eq.s32.totalorder %s17, 0
      %p80 = por %p78, %p79
      %p81 = scmp.ne.s32.totalorder %s69, %s70
      %p82 = scmp.eq.s32.totalorder %s18, 1
      %p83 = por %p81, %p82
      %p85 = scmp.ne.s32.totalorder %s70, %s84
      %p86 = scmp.eq.s32.totalorder %s18, 0
      %p87 = por %p85, %p86
      %s89 = sadd.s32 %s88, 1
      %p92 = scmp.eq.s32.totalorder %s12, 1
      %p93 = scmp.ne.s32.totalorder %s88, %s90
      %p94 = scmp.eq.s32.totalorder %s12, 0
      %p95 = por %p93, %p94
      %p96 = scmp.ne.s32.totalorder %s88, %s90
      %p97 = scmp.eq.s32.totalorder %s17, 1
      %p98 = por %p96, %p97
      %p99 = scmp.ne.s32.totalorder %s90, %s91
      %p100 = scmp.eq.s32.totalorder %s17, 0
      %p101 = por %p99, %p100
      %p102 = scmp.ne.s32.totalorder %s90, %s91
      %p103 = scmp.eq.s32.totalorder %s18, 1
      %p104 = por %p102, %p103
      %p106 = scmp.ne.s32.totalorder %s91, %s105
      %p107 = scmp.eq.s32.totalorder %s18, 0
      %p108 = por %p106, %p107
      %s110 = sadd.s32 %s109, 1
      %p113 = scmp.eq.s32.totalorder %s12, 1
      %p114 = scmp.ne.s32.totalorder %s109, %s111
      %p115 = scmp.eq.s32.totalorder %s12, 0
      %p116 = por %p114, %p115
      %p117 = scmp.ne.s32.totalorder %s109, %s111
      %p118 = scmp.eq.s32.totalorder %s17, 1
      %p119 = por %p117, %p118
      %p120 = scmp.ne.s32.totalorder %s111, %s112
      %p121 = scmp.eq.s32.totalorder %s17, 0
      %p122 = por %p120, %p121
      %p123 = scmp.ne.s32.totalorder %s111, %s112
      %p124 = scmp.eq.s32.totalorder %s18, 1
      %p125 = por %p123, %p124
      %p127 = scmp.ne.s32.totalorder %s112, %s126
      %p128 = scmp.eq.s32.totalorder %s18, 0
      %p129 = por %p127, %p128
      %s130 = ssub.s32 %s12, %s19
      %p131 = scmp.eq.s32.totalorder %s130, 0
      %s133 = sadd.s32 %s132, 1
      %s134 = scalar_select %p131, %s132, %s133
      %p137 = pneg %p131
      %p138 = scmp.eq.s32.totalorder %s12, 1
      %p139 = por %p137, %p138
      %p140 = scmp.ne.s32.totalorder %s132, %s135
      %p141 = scmp.eq.s32.totalorder %s12, 0
      %p142 = por %p140, %p141
      %p143 = scmp.ne.s32.totalorder %s132, %s135
      %p144 = scmp.eq.s32.totalorder %s17, 1
      %p145 = por %p143, %p144
      %p146 = scmp.ne.s32.totalorder %s135, %s136
      %p147 = scmp.eq.s32.totalorder %s17, 0
      %p148 = por %p146, %p147
      %p149 = scmp.ne.s32.totalorder %s135, %s136
      %p150 = scmp.eq.s32.totalorder %s18, 1
      %p151 = por %p149, %p150
      %p153 = scmp.ne.s32.totalorder %s136, %s152
      %p154 = scmp.eq.s32.totalorder %s18, 0
      %p155 = por %p153, %p154
      %p156 = scmp.le.s32.totalorder 1, %s12
      %p157 = scmp.lt.s32.totalorder %s12, 3
      %p158 = pnand %p156, %p157
      %p159 = pneg %p158
      // Predicated region
      $region9: #{toy_model_forward.3} parent=5 // pred_check
        _
      $region10: #{toy_model_forward.3} parent=5 // pred_check_branch
        %161 = sbr.rel (%p158) target = $region12
      $region11: #{toy_model_forward.3} parent=5 // pred_region
        %s162 = ssub.s32 %s12, 1
        // Predicated region
        $region13: #{toy_model_forward.3} parent=11 // pred_check
          %p163 = pneg %p59
        $region14: #{toy_model_forward.3} parent=11 // pred_check_branch
          %165 = sbr.rel (%p163) target = $region16
        $region15: #{toy_model_forward.3} parent=11 // pred_region
          _
        $region16: #{toy_model_forward.3} parent=11 // pred_fallthru
          _
        // Predicated region
        $region17: #{toy_model_forward.3} parent=11 // pred_check
          %p166 = pneg %p80
        $region18: #{toy_model_forward.3} parent=11 // pred_check_branch
          %168 = sbr.rel (%p166) target = $region20
        $region19: #{toy_model_forward.3} parent=11 // pred_region
          _
        $region20: #{toy_model_forward.3} parent=11 // pred_fallthru
          _
        // Predicated region
        $region21: #{toy_model_forward.3} parent=11 // pred_check
          %p169 = pneg %p101
        $region22: #{toy_model_forward.3} parent=11 // pred_check_branch
          %171 = sbr.rel (%p169) target = $region24
        $region23: #{toy_model_forward.3} parent=11 // pred_region
          _
        $region24: #{toy_model_forward.3} parent=11 // pred_fallthru
          _
        // Predicated region
        $region25: #{toy_model_forward.3} parent=11 // pred_check
          %p172 = pneg %p122
        $region26: #{toy_model_forward.3} parent=11 // pred_check_branch
          %174 = sbr.rel (%p172) target = $region28
        $region27: #{toy_model_forward.3} parent=11 // pred_region
          %176 = vsyncadd [#allocation3], 0
          %s177 = sshll.u32 %s4, 4
          %s178 = int_to_ptr.hbm [resolvable:$true] %s177
          %s179 = sshll.u32 [#allocation2], 4
          %s180 = int_to_ptr.vmem [resolvable:$true] %s179
          %185 = dma.hbm_to_vmem [thread:$0]  %s178, 4992, %s180, [#allocation3], 384, 384, 24
        $region28: #{toy_model_forward.3} parent=11 // pred_fallthru
          _
      $region12: #{toy_model_forward.3} parent=5 // pred_fallthru
        _
      %p186 = scmp.lt.s32.totalorder %s12, 2
      // Predicated region
      $region29: #{toy_model_forward.3} parent=5 // pred_check
        %p187 = pneg %p186
      $region30: #{toy_model_forward.3} parent=5 // pred_check_branch
        %189 = sbr.rel (%p187) target = $region32
      $region31: #{toy_model_forward.3} parent=5 // pred_region
        // Predicated region
        $region33: #{toy_model_forward.3} parent=31 // pred_check
          %p190 = pneg %p32
        $region34: #{toy_model_forward.3} parent=31 // pred_check_branch
          %192 = sbr.rel (%p190) target = $region36
        $region35: #{toy_model_forward.3} parent=31 // pred_region
          %p193 = scmp.lt.s32.totalorder %s12, 1
          %s194 = scalar_select %p193, %s12, 1
          %s195 = smul.addr %s194, 41
          %s196 = smul.addr %s195, 8
          %s197 = scalar_lea.vmem %s0, %s196
        $region36: #{toy_model_forward.3} parent=31 // pred_fallthru
          _
      $region32: #{toy_model_forward.3} parent=5 // pred_fallthru
        _
      %p198 = scmp.le.s32.totalorder 1, %s12
      %p199 = scmp.lt.s32.totalorder %s12, 3
      %p200 = pnand %p198, %p199
      %p201 = pneg %p200
      // Predicated region
      $region37: #{toy_model_forward.3} parent=5 // pred_check
        _
      $region38: #{toy_model_forward.3} parent=5 // pred_check_branch
        %203 = sbr.rel (%p200) target = $region40
      $region39: #{toy_model_forward.3} parent=5 // pred_region
        %s204 = ssub.s32 %s12, 1
        // Predicated region
        $region41: #{toy_model_forward.3} parent=39 // pred_check
          %p205 = pneg %p122
        $region42: #{toy_model_forward.3} parent=39 // pred_check_branch
          %207 = sbr.rel (%p205) target = $region44
        $region43: #{toy_model_forward.3} parent=39 // pred_region
          %209 = dma.done [#allocation3], 4992
        $region44: #{toy_model_forward.3} parent=39 // pred_fallthru
          _
        %p210 = scmp.lt.s32.totalorder %s17, 1
        %s211 = scalar_select %p210, %s17, 1
        %s212 = smul.addr %s211, 41
        %s213 = smul.addr %s212, 8
        %s214 = scalar_lea.vmem %s0, %s213
        %p215 = pneg %p38
        %p216 = pneg %p35
        %p217 = pneg %p59
        %p218 = pneg %p56
        %p219 = pneg %p80
        %p220 = pneg %p77
        %p221 = pneg %p101
        %p222 = pneg %p98
        %p223 = pneg %p122
        %p224 = pneg %p119
        %p225 = pneg %p148
        %p226 = pneg %p145
        %p227 = scmp.lt.s32.totalorder %s17, 1
        %s228 = scalar_select %p227, %s17, 1
        %s229 = smul.addr %s228, 13
        %s230 = smul.addr %s229, 8
        %s231 = scalar_lea.vmem %s5, %s230
        %p232 = scmp.lt.s32.totalorder %s17, 1
        %s233 = scalar_select %p232, %s17, 1
        %s234 = smul.addr %s233, 41
        %s235 = smul.addr %s234, 8
        %s236 = scalar_lea.vmem %s0, %s235
        %p237 = scmp.lt.s32.totalorder %s17, 1
        %s238 = scalar_select %p237, %s17, 1
        %s239 = smul.addr %s238, 13
        %s240 = smul.addr %s239, 8
        %s241 = scalar_lea.vmem %s5, %s240
        %v243 = vld [vmem:[%s236] sm:$0xff]
        %v244 = vld [vmem:[%s236 + $0x8] sm:$0xff]
        %v245 = vld [vmem:[%s236 + $0x10] sm:$0xff]
        %v246 = vld [vmem:[%s236 + $0x18] sm:$0xff]
        %v247 = vld [vmem:[%s236 + $0x20] sm:$0xff]
        %v248 = vld [vmem:[%s236 + $0x28] sm:$0xff]
        %v249 = vld [vmem:[%s236 + $0x30] sm:$0xff]
        %v250 = vld [vmem:[%s236 + $0x38] sm:$0xff]
        %v251 = vld [vmem:[%s236 + $0x40] sm:$0xff]
        %v252 = vld [vmem:[%s236 + $0x48] sm:$0xff]
        %v253 = vld [vmem:[%s236 + $0x50] sm:$0xff]
        %v254 = vld [vmem:[%s236 + $0x58] sm:$0xff]
        %v255 = vld [vmem:[%s236 + $0x60] sm:$0xff]
        %v256 = vld [vmem:[%s236 + $0x68] sm:$0xff]
        %v257 = vld [vmem:[%s236 + $0x70] sm:$0xff]
        %v258 = vld [vmem:[%s236 + $0x78] sm:$0xff]
        %v259 = vld [vmem:[%s236 + $0x80] sm:$0xff]
        %v260 = vld [vmem:[%s236 + $0x88] sm:$0xff]
        %v261 = vld [vmem:[%s236 + $0x90] sm:$0xff]
        %v262 = vld [vmem:[%s236 + $0x98] sm:$0xff]
        %v263 = vld [vmem:[%s236 + $0xa0] sm:$0xff]
        %v264 = vld [vmem:[%s236 + $0xa8] sm:$0xff]
        %v265 = vld [vmem:[%s236 + $0xb0] sm:$0xff]
        %v266 = vld [vmem:[%s236 + $0xb8] sm:$0xff]
        %v267 = vld [vmem:[%s236 + $0xc0] sm:$0xff]
        %v268 = vld [vmem:[%s236 + $0xc8] sm:$0xff]
        %v269 = vld [vmem:[%s236 + $0xd0] sm:$0xff]
        %v270 = vld [vmem:[%s236 + $0xd8] sm:$0xff]
        %v271 = vld [vmem:[%s236 + $0xe0] sm:$0xff]
        %v272 = vld [vmem:[%s236 + $0xe8] sm:$0xff]
        %v273 = vld [vmem:[%s236 + $0xf0] sm:$0xff]
        %v274 = vld [vmem:[%s236 + $0xf8] sm:$0xff]
        %v275 = vld [vmem:[%s236 + $0x100] sm:$0xff]
        %v276 = vld [vmem:[%s236 + $0x108] sm:$0xff]
        %v277 = vld [vmem:[%s236 + $0x110] sm:$0xff]
        %v278 = vld [vmem:[%s236 + $0x118] sm:$0x3f]
        %v279 = vpack.c.bf16 %v244, %v243
        %v280 = vpack.c.bf16 %v246, %v245
        %v281 = vpack.c.bf16 %v248, %v247
        %v282 = vpack.c.bf16 %v250, %v249
        %v283 = vpack.c.bf16 %v252, %v251
        %v284 = vpack.c.bf16 %v254, %v253
        %v285 = vpack.c.bf16 %v256, %v255
        %v286 = vpack.c.bf16 %v258, %v257
        %v287 = vpack.c.bf16 %v260, %v259
        %v288 = vpack.c.bf16 %v262, %v261
        %v289 = vpack.c.bf16 %v264, %v263
        %v290 = vpack.c.bf16 %v266, %v265
        %v291 = vpack.c.bf16 %v268, %v267
        %v292 = vpack.c.bf16 %v270, %v269
        %v293 = vpack.c.bf16 %v272, %v271
        %v294 = vpack.c.bf16 %v274, %v273
        %v295 = vpack.c.bf16 %v276, %v275
        %v296 = vpack.c.bf16 %v278, %v277
        %v297 = vld [vmem:[%s1] sm:$0x3]
        %v298 = vld [vmem:[%s236 + $0x1] sm:$0xff]
        %v299 = vld [vmem:[%s236 + $0x9] sm:$0xff]
        %v300 = vld [vmem:[%s236 + $0x11] sm:$0xff]
        %v301 = vld [vmem:[%s236 + $0x19] sm:$0xff]
        %v302 = vld [vmem:[%s236 + $0x21] sm:$0xff]
        %v303 = vld [vmem:[%s236 + $0x29] sm:$0xff]
        %v304 = vld [vmem:[%s236 + $0x31] sm:$0xff]
        %v305 = vld [vmem:[%s236 + $0x39] sm:$0xff]
        %v306 = vld [vmem:[%s236 + $0x41] sm:$0xff]
        %v307 = vld [vmem:[%s236 + $0x49] sm:$0xff]
        %v308 = vld [vmem:[%s236 + $0x51] sm:$0xff]
        %v309 = vld [vmem:[%s236 + $0x59] sm:$0xff]
        %v310 = vld [vmem:[%s236 + $0x61] sm:$0xff]
        %v311 = vld [vmem:[%s236 + $0x69] sm:$0xff]
        %v312 = vld [vmem:[%s236 + $0x71] sm:$0xff]
        %v313 = vld [vmem:[%s236 + $0x79] sm:$0xff]
        %v314 = vld [vmem:[%s236 + $0x81] sm:$0xff]
        %v315 = vld [vmem:[%s236 + $0x89] sm:$0xff]
        %v316 = vld [vmem:[%s236 + $0x91] sm:$0xff]
        %v317 = vld [vmem:[%s236 + $0x99] sm:$0xff]
        %v318 = vld [vmem:[%s236 + $0xa1] sm:$0xff]
        %v319 = vld [vmem:[%s236 + $0xa9] sm:$0xff]
        %v320 = vld [vmem:[%s236 + $0xb1] sm:$0xff]
        %v321 = vld [vmem:[%s236 + $0xb9] sm:$0xff]
        %v322 = vld [vmem:[%s236 + $0xc1] sm:$0xff]
        %v323 = vld [vmem:[%s236 + $0xc9] sm:$0xff]
        %v324 = vld [vmem:[%s236 + $0xd1] sm:$0xff]
        %v325 = vld [vmem:[%s236 + $0xd9] sm:$0xff]
        %v326 = vld [vmem:[%s236 + $0xe1] sm:$0xff]
        %v327 = vld [vmem:[%s236 + $0xe9] sm:$0xff]
        %v328 = vld [vmem:[%s236 + $0xf1] sm:$0xff]
        %v329 = vld [vmem:[%s236 + $0xf9] sm:$0xff]
        %v330 = vld [vmem:[%s236 + $0x101] sm:$0xff]
        %v331 = vld [vmem:[%s236 + $0x109] sm:$0xff]
        %v332 = vld [vmem:[%s236 + $0x111] sm:$0xff]
        %v333 = vld [vmem:[%s236 + $0x119] sm:$0x3f]
        %v334 = vpack.c.bf16 %v299, %v298
        %v335 = vpack.c.bf16 %v301, %v300
        %v336 = vpack.c.bf16 %v303, %v302
        %v337 = vpack.c.bf16 %v305, %v304
        %v338 = vpack.c.bf16 %v307, %v306
        %v339 = vpack.c.bf16 %v309, %v308
        %v340 = vpack.c.bf16 %v311, %v310
        %v341 = vpack.c.bf16 %v313, %v312
        %v342 = vpack.c.bf16 %v315, %v314
        %v343 = vpack.c.bf16 %v317, %v316
        %v344 = vpack.c.bf16 %v319, %v318
        %v345 = vpack.c.bf16 %v321, %v320
        %v346 = vpack.c.bf16 %v323, %v322
        %v347 = vpack.c.bf16 %v325, %v324
        %v348 = vpack.c.bf16 %v327, %v326
        %v349 = vpack.c.bf16 %v329, %v328
        %v350 = vpack.c.bf16 %v331, %v330
        %v351 = vpack.c.bf16 %v333, %v332
        %s352 = scalar_lea.vmem %s1, 2
        %v353 = vld [vmem:[%s352] sm:$0x3]
        %vm354 = vcmask 23552
        %v356 = vsel %vm354, %v334, 0
        %v359 = vsel %vm354, %v335, 0
        %v362 = vsel %vm354, %v336, 0
        %v365 = vsel %vm354, %v337, 0
        %v368 = vsel %vm354, %v338, 0
        %v371 = vsel %vm354, %v339, 0
        %v374 = vsel %vm354, %v340, 0
        %v377 = vsel %vm354, %v341, 0
        %v380 = vsel %vm354, %v342, 0
        %v383 = vsel %vm354, %v343, 0
        %v386 = vsel %vm354, %v344, 0
        %v389 = vsel %vm354, %v345, 0
        %v392 = vsel %vm354, %v346, 0
        %v395 = vsel %vm354, %v347, 0
        %v398 = vsel %vm354, %v348, 0
        %v401 = vsel %vm354, %v349, 0
        %v404 = vsel %vm354, %v350, 0
        %v407 = vsel %vm354, %v351, 0
        %vm409 = vcmask 1040384
        %vm410 = vcmask 1041408
        %v411 = vsel %vm409, 4294967295, 65535
        %v412 = vsel %vm410, %v411, 0
        %v414 = vand.u32 %v353, %v412
        %416 = vmatpush.bf16.msra.mxu0 0
        %417 = vmatpush.bf16.msra.mxu0 0
        %418 = vmatpush.bf16.msra.mxu0 0
        %419 = vmatpush.bf16.msra.mxu0 0
        %420 = vmatpush.bf16.msra.mxu0 0
        %421 = vmatpush.bf16.msra.mxu0 0
        %422 = vmatpush.bf16.msra.mxu0 0
        %423 = vmatpush.bf16.msra.mxu0 %v414
        %424 = vmatmul.bf16.gmra.mxu0 %v356
        %v425 = vpop.f32.mrf.mxu0
        %v426 = vadd.f32 0.0, %v425
        %v427 = vpop.f32.mrf.mxu0
        %v428 = vadd.f32 0.0, %v427
        %429 = vmatmul.bf16.gmra.mxu0 %v359
        %v430 = vpop.f32.mrf.mxu0
        %v431 = vadd.f32 0.0, %v430
        %v432 = vpop.f32.mrf.mxu0
        %v433 = vadd.f32 0.0, %v432
        %434 = vmatmul.bf16.gmra.mxu0 %v362
        %v435 = vpop.f32.mrf.mxu0
        %v436 = vadd.f32 0.0, %v435
        %v437 = vpop.f32.mrf.mxu0
        %v438 = vadd.f32 0.0, %v437
        %439 = vmatmul.bf16.gmra.mxu0 %v365
        %v440 = vpop.f32.mrf.mxu0
        %v441 = vadd.f32 0.0, %v440
        %v442 = vpop.f32.mrf.mxu0
        %v443 = vadd.f32 0.0, %v442
        %444 = vmatmul.bf16.gmra.mxu0 %v368
        %v445 = vpop.f32.mrf.mxu0
        %v446 = vadd.f32 0.0, %v445
        %v447 = vpop.f32.mrf.mxu0
        %v448 = vadd.f32 0.0, %v447
        %449 = vmatmul.bf16.gmra.mxu0 %v371
        %v450 = vpop.f32.mrf.mxu0
        %v451 = vadd.f32 0.0, %v450
        %v452 = vpop.f32.mrf.mxu0
        %v453 = vadd.f32 0.0, %v452
        %454 = vmatmul.bf16.gmra.mxu0 %v374
        %v455 = vpop.f32.mrf.mxu0
        %v456 = vadd.f32 0.0, %v455
        %v457 = vpop.f32.mrf.mxu0
        %v458 = vadd.f32 0.0, %v457
        %459 = vmatmul.bf16.gmra.mxu0 %v377
        %v460 = vpop.f32.mrf.mxu0
        %v461 = vadd.f32 0.0, %v460
        %v462 = vpop.f32.mrf.mxu0
        %v463 = vadd.f32 0.0, %v462
        %464 = vmatmul.bf16.gmra.mxu0 %v380
        %v465 = vpop.f32.mrf.mxu0
        %v466 = vadd.f32 0.0, %v465
        %v467 = vpop.f32.mrf.mxu0
        %v468 = vadd.f32 0.0, %v467
        %469 = vmatmul.bf16.gmra.mxu0 %v383
        %v470 = vpop.f32.mrf.mxu0
        %v471 = vadd.f32 0.0, %v470
        %v472 = vpop.f32.mrf.mxu0
        %v473 = vadd.f32 0.0, %v472
        %474 = vmatmul.bf16.gmra.mxu0 %v386
        %v475 = vpop.f32.mrf.mxu0
        %v476 = vadd.f32 0.0, %v475
        %v477 = vpop.f32.mrf.mxu0
        %v478 = vadd.f32 0.0, %v477
        %479 = vmatmul.bf16.gmra.mxu0 %v389
        %v480 = vpop.f32.mrf.mxu0
        %v481 = vadd.f32 0.0, %v480
        %v482 = vpop.f32.mrf.mxu0
        %v483 = vadd.f32 0.0, %v482
        %484 = vmatmul.bf16.gmra.mxu0 %v392
        %v485 = vpop.f32.mrf.mxu0
        %v486 = vadd.f32 0.0, %v485
        %v487 = vpop.f32.mrf.mxu0
        %v488 = vadd.f32 0.0, %v487
        %489 = vmatmul.bf16.gmra.mxu0 %v395
        %v490 = vpop.f32.mrf.mxu0
        %v491 = vadd.f32 0.0, %v490
        %v492 = vpop.f32.mrf.mxu0
        %v493 = vadd.f32 0.0, %v492
        %494 = vmatmul.bf16.gmra.mxu0 %v398
        %v495 = vpop.f32.mrf.mxu0
        %v496 = vadd.f32 0.0, %v495
        %v497 = vpop.f32.mrf.mxu0
        %v498 = vadd.f32 0.0, %v497
        %499 = vmatmul.bf16.gmra.mxu0 %v401
        %v500 = vpop.f32.mrf.mxu0
        %v501 = vadd.f32 0.0, %v500
        %v502 = vpop.f32.mrf.mxu0
        %v503 = vadd.f32 0.0, %v502
        %504 = vmatmul.bf16.gmra.mxu0 %v404
        %v505 = vpop.f32.mrf.mxu0
        %v506 = vadd.f32 0.0, %v505
        %v507 = vpop.f32.mrf.mxu0
        %v508 = vadd.f32 0.0, %v507
        %509 = vmatmul.bf16.gmra.mxu0 %v407
        %v510 = vpop.f32.mrf.mxu0
        %v511 = vadd.f32 0.0, %v510
        %v512 = vpop.f32.mrf.mxu0
        %v513 = vadd.f32 0.0, %v512
        %514 = vdwg.mxu0
        %v516 = vsel %vm354, %v279, 0
        %v519 = vsel %vm354, %v280, 0
        %v522 = vsel %vm354, %v281, 0
        %v525 = vsel %vm354, %v282, 0
        %v528 = vsel %vm354, %v283, 0
        %v531 = vsel %vm354, %v284, 0
        %v534 = vsel %vm354, %v285, 0
        %v537 = vsel %vm354, %v286, 0
        %v540 = vsel %vm354, %v287, 0
        %v543 = vsel %vm354, %v288, 0
        %v546 = vsel %vm354, %v289, 0
        %v549 = vsel %vm354, %v290, 0
        %v552 = vsel %vm354, %v291, 0
        %v555 = vsel %vm354, %v292, 0
        %v558 = vsel %vm354, %v293, 0
        %v561 = vsel %vm354, %v294, 0
        %v564 = vsel %vm354, %v295, 0
        %v567 = vsel %vm354, %v296, 0
        %v570 = vand.u32 %v297, %v412
        %572 = vmatpush.bf16.msra.mxu0 0
        %573 = vmatpush.bf16.msra.mxu0 0
        %574 = vmatpush.bf16.msra.mxu0 0
        %575 = vmatpush.bf16.msra.mxu0 0
        %576 = vmatpush.bf16.msra.mxu0 0
        %577 = vmatpush.bf16.msra.mxu0 0
        %578 = vmatpush.bf16.msra.mxu0 0
        %579 = vmatpush.bf16.msra.mxu0 %v570
        %580 = vmatmul.bf16.gmra.mxu0 %v516
        %v581 = vpop.f32.mrf.mxu0
        %v582 = vadd.f32 %v426, %v581
        %v583 = vpop.f32.mrf.mxu0
        %v584 = vadd.f32 %v428, %v583
        %585 = vmatmul.bf16.gmra.mxu0 %v519
        %v586 = vpop.f32.mrf.mxu0
        %v587 = vadd.f32 %v431, %v586
        %v588 = vpop.f32.mrf.mxu0
        %v589 = vadd.f32 %v433, %v588
        %590 = vmatmul.bf16.gmra.mxu0 %v522
        %v591 = vpop.f32.mrf.mxu0
        %v592 = vadd.f32 %v436, %v591
        %v593 = vpop.f32.mrf.mxu0
        %v594 = vadd.f32 %v438, %v593
        %595 = vmatmul.bf16.gmra.mxu0 %v525
        %v596 = vpop.f32.mrf.mxu0
        %v597 = vadd.f32 %v441, %v596
        %v598 = vpop.f32.mrf.mxu0
        %v599 = vadd.f32 %v443, %v598
        %600 = vmatmul.bf16.gmra.mxu0 %v528
        %v601 = vpop.f32.mrf.mxu0
        %v602 = vadd.f32 %v446, %v601
        %v603 = vpop.f32.mrf.mxu0
        %v604 = vadd.f32 %v448, %v603
        %605 = vmatmul.bf16.gmra.mxu0 %v531
        %v606 = vpop.f32.mrf.mxu0
        %v607 = vadd.f32 %v451, %v606
        %v608 = vpop.f32.mrf.mxu0
        %v609 = vadd.f32 %v453, %v608
        %610 = vmatmul.bf16.gmra.mxu0 %v534
        %v611 = vpop.f32.mrf.mxu0
        %v612 = vadd.f32 %v456, %v611
        %v613 = vpop.f32.mrf.mxu0
        %v614 = vadd.f32 %v458, %v613
        %615 = vmatmul.bf16.gmra.mxu0 %v537
        %v616 = vpop.f32.mrf.mxu0
        %v617 = vadd.f32 %v461, %v616
        %v618 = vpop.f32.mrf.mxu0
        %v619 = vadd.f32 %v463, %v618
        %620 = vmatmul.bf16.gmra.mxu0 %v540
        %v621 = vpop.f32.mrf.mxu0
        %v622 = vadd.f32 %v466, %v621
        %v623 = vpop.f32.mrf.mxu0
        %v624 = vadd.f32 %v468, %v623
        %625 = vmatmul.bf16.gmra.mxu0 %v543
        %v626 = vpop.f32.mrf.mxu0
        %v627 = vadd.f32 %v471, %v626
        %v628 = vpop.f32.mrf.mxu0
        %v629 = vadd.f32 %v473, %v628
        %630 = vmatmul.bf16.gmra.mxu0 %v546
        %v631 = vpop.f32.mrf.mxu0
        %v632 = vadd.f32 %v476, %v631
        %v633 = vpop.f32.mrf.mxu0
        %v634 = vadd.f32 %v478, %v633
        %635 = vmatmul.bf16.gmra.mxu0 %v549
        %v636 = vpop.f32.mrf.mxu0
        %v637 = vadd.f32 %v481, %v636
        %v638 = vpop.f32.mrf.mxu0
        %v639 = vadd.f32 %v483, %v638
        %640 = vmatmul.bf16.gmra.mxu0 %v552
        %v641 = vpop.f32.mrf.mxu0
        %v642 = vadd.f32 %v486, %v641
        %v643 = vpop.f32.mrf.mxu0
        %v644 = vadd.f32 %v488, %v643
        %645 = vmatmul.bf16.gmra.mxu0 %v555
        %v646 = vpop.f32.mrf.mxu0
        %v647 = vadd.f32 %v491, %v646
        %v648 = vpop.f32.mrf.mxu0
        %v649 = vadd.f32 %v493, %v648
        %650 = vmatmul.bf16.gmra.mxu0 %v558
        %v651 = vpop.f32.mrf.mxu0
        %v652 = vadd.f32 %v496, %v651
        %v653 = vpop.f32.mrf.mxu0
        %v654 = vadd.f32 %v498, %v653
        %655 = vmatmul.bf16.gmra.mxu0 %v561
        %v656 = vpop.f32.mrf.mxu0
        %v657 = vadd.f32 %v501, %v656
        %v658 = vpop.f32.mrf.mxu0
        %v659 = vadd.f32 %v503, %v658
        %660 = vmatmul.bf16.gmra.mxu0 %v564
        %v661 = vpop.f32.mrf.mxu0
        %v662 = vadd.f32 %v506, %v661
        %v663 = vpop.f32.mrf.mxu0
        %v664 = vadd.f32 %v508, %v663
        %665 = vmatmul.bf16.gmra.mxu0 %v567
        %v666 = vpop.f32.mrf.mxu0
        %v667 = vadd.f32 %v511, %v666
        %v668 = vpop.f32.mrf.mxu0
        %v669 = vadd.f32 %v513, %v668
        %670 = vdwg.mxu0
        %v671 = vld [vmem:[%s236 + $0x2] sm:$0xff]
        %v672 = vld [vmem:[%s236 + $0xa] sm:$0xff]
        %v673 = vld [vmem:[%s236 + $0x12] sm:$0xff]
        %v674 = vld [vmem:[%s236 + $0x1a] sm:$0xff]
        %v675 = vld [vmem:[%s236 + $0x22] sm:$0xff]
        %v676 = vld [vmem:[%s236 + $0x2a] sm:$0xff]
        %v677 = vld [vmem:[%s236 + $0x32] sm:$0xff]
        %v678 = vld [vmem:[%s236 + $0x3a] sm:$0xff]
        %v679 = vld [vmem:[%s236 + $0x42] sm:$0xff]
        %v680 = vld [vmem:[%s236 + $0x4a] sm:$0xff]
        %v681 = vld [vmem:[%s236 + $0x52] sm:$0xff]
        %v682 = vld [vmem:[%s236 + $0x5a] sm:$0xff]
        %v683 = vld [vmem:[%s236 + $0x62] sm:$0xff]
        %v684 = vld [vmem:[%s236 + $0x6a] sm:$0xff]
        %v685 = vld [vmem:[%s236 + $0x72] sm:$0xff]
        %v686 = vld [vmem:[%s236 + $0x7a] sm:$0xff]
        %v687 = vld [vmem:[%s236 + $0x82] sm:$0xff]
        %v688 = vld [vmem:[%s236 + $0x8a] sm:$0xff]
        %v689 = vld [vmem:[%s236 + $0x92] sm:$0xff]
        %v690 = vld [vmem:[%s236 + $0x9a] sm:$0xff]
        %v691 = vld [vmem:[%s236 + $0xa2] sm:$0xff]
        %v692 = vld [vmem:[%s236 + $0xaa] sm:$0xff]
        %v693 = vld [vmem:[%s236 + $0xb2] sm:$0xff]
        %v694 = vld [vmem:[%s236 + $0xba] sm:$0xff]
        %v695 = vld [vmem:[%s236 + $0xc2] sm:$0xff]
        %v696 = vld [vmem:[%s236 + $0xca] sm:$0xff]
        %v697 = vld [vmem:[%s236 + $0xd2] sm:$0xff]
        %v698 = vld [vmem:[%s236 + $0xda] sm:$0xff]
        %v699 = vld [vmem:[%s236 + $0xe2] sm:$0xff]
        %v700 = vld [vmem:[%s236 + $0xea] sm:$0xff]
        %v701 = vld [vmem:[%s236 + $0xf2] sm:$0xff]
        %v702 = vld [vmem:[%s236 + $0xfa] sm:$0xff]
        %v703 = vld [vmem:[%s236 + $0x102] sm:$0xff]
        %v704 = vld [vmem:[%s236 + $0x10a] sm:$0xff]
        %v705 = vld [vmem:[%s236 + $0x112] sm:$0xff]
        %v706 = vld [vmem:[%s236 + $0x11a] sm:$0x3f]
        %v707 = vpack.c.bf16 %v672, %v671
        %v708 = vpack.c.bf16 %v674, %v673
        %v709 = vpack.c.bf16 %v676, %v675
        %v710 = vpack.c.bf16 %v678, %v677
        %v711 = vpack.c.bf16 %v680, %v679
        %v712 = vpack.c.bf16 %v682, %v681
        %v713 = vpack.c.bf16 %v684, %v683
        %v714 = vpack.c.bf16 %v686, %v685
        %v715 = vpack.c.bf16 %v688, %v687
        %v716 = vpack.c.bf16 %v690, %v689
        %v717 = vpack.c.bf16 %v692, %v691
        %v718 = vpack.c.bf16 %v694, %v693
        %v719 = vpack.c.bf16 %v696, %v695
        %v720 = vpack.c.bf16 %v698, %v697
        %v721 = vpack.c.bf16 %v700, %v699
        %v722 = vpack.c.bf16 %v702, %v701
        %v723 = vpack.c.bf16 %v704, %v703
        %v724 = vpack.c.bf16 %v706, %v705
        %s725 = scalar_lea.vmem %s1, 4
        %v726 = vld [vmem:[%s725] sm:$0x3]
        %v728 = vsel %vm354, %v707, 0
        %v731 = vsel %vm354, %v708, 0
        %v734 = vsel %vm354, %v709, 0
        %v737 = vsel %vm354, %v710, 0
        %v740 = vsel %vm354, %v711, 0
        %v743 = vsel %vm354, %v712, 0
        %v746 = vsel %vm354, %v713, 0
        %v749 = vsel %vm354, %v714, 0
        %v752 = vsel %vm354, %v715, 0
        %v755 = vsel %vm354, %v716, 0
        %v758 = vsel %vm354, %v717, 0
        %v761 = vsel %vm354, %v718, 0
        %v764 = vsel %vm354, %v719, 0
        %v767 = vsel %vm354, %v720, 0
        %v770 = vsel %vm354, %v721, 0
        %v773 = vsel %vm354, %v722, 0
        %v776 = vsel %vm354, %v723, 0
        %v779 = vsel %vm354, %v724, 0
        %v782 = vand.u32 %v726, %v412
        %784 = vmatpush.bf16.msra.mxu0 0
        %785 = vmatpush.bf16.msra.mxu0 0
        %786 = vmatpush.bf16.msra.mxu0 0
        %787 = vmatpush.bf16.msra.mxu0 0
        %788 = vmatpush.bf16.msra.mxu0 0
        %789 = vmatpush.bf16.msra.mxu0 0
        %790 = vmatpush.bf16.msra.mxu0 0
        %791 = vmatpush.bf16.msra.mxu0 %v782
        %792 = vmatmul.bf16.gmra.mxu0 %v728
        %v793 = vpop.f32.mrf.mxu0
        %v794 = vadd.f32 0.0, %v793
        %v795 = vpop.f32.mrf.mxu0
        %v796 = vadd.f32 0.0, %v795
        %797 = vmatmul.bf16.gmra.mxu0 %v731
        %v798 = vpop.f32.mrf.mxu0
        %v799 = vadd.f32 0.0, %v798
        %v800 = vpop.f32.mrf.mxu0
        %v801 = vadd.f32 0.0, %v800
        %802 = vmatmul.bf16.gmra.mxu0 %v734
        %v803 = vpop.f32.mrf.mxu0
        %v804 = vadd.f32 0.0, %v803
        %v805 = vpop.f32.mrf.mxu0
        %v806 = vadd.f32 0.0, %v805
        %807 = vmatmul.bf16.gmra.mxu0 %v737
        %v808 = vpop.f32.mrf.mxu0
        %v809 = vadd.f32 0.0, %v808
        %v810 = vpop.f32.mrf.mxu0
        %v811 = vadd.f32 0.0, %v810
        %812 = vmatmul.bf16.gmra.mxu0 %v740
        %v813 = vpop.f32.mrf.mxu0
        %v814 = vadd.f32 0.0, %v813
        %v815 = vpop.f32.mrf.mxu0
        %v816 = vadd.f32 0.0, %v815
        %817 = vmatmul.bf16.gmra.mxu0 %v743
        %v818 = vpop.f32.mrf.mxu0
        %v819 = vadd.f32 0.0, %v818
        %v820 = vpop.f32.mrf.mxu0
        %v821 = vadd.f32 0.0, %v820
        %822 = vmatmul.bf16.gmra.mxu0 %v746
        %v823 = vpop.f32.mrf.mxu0
        %v824 = vadd.f32 0.0, %v823
        %v825 = vpop.f32.mrf.mxu0
        %v826 = vadd.f32 0.0, %v825
        %827 = vmatmul.bf16.gmra.mxu0 %v749
        %v828 = vpop.f32.mrf.mxu0
        %v829 = vadd.f32 0.0, %v828
        %v830 = vpop.f32.mrf.mxu0
        %v831 = vadd.f32 0.0, %v830
        %832 = vmatmul.bf16.gmra.mxu0 %v752
        %v833 = vpop.f32.mrf.mxu0
        %v834 = vadd.f32 0.0, %v833
        %v835 = vpop.f32.mrf.mxu0
        %v836 = vadd.f32 0.0, %v835
        %837 = vmatmul.bf16.gmra.mxu0 %v755
        %v838 = vpop.f32.mrf.mxu0
        %v839 = vadd.f32 0.0, %v838
        %v840 = vpop.f32.mrf.mxu0
        %v841 = vadd.f32 0.0, %v840
        %842 = vmatmul.bf16.gmra.mxu0 %v758
        %v843 = vpop.f32.mrf.mxu0
        %v844 = vadd.f32 0.0, %v843
        %v845 = vpop.f32.mrf.mxu0
        %v846 = vadd.f32 0.0, %v845
        %847 = vmatmul.bf16.gmra.mxu0 %v761
        %v848 = vpop.f32.mrf.mxu0
        %v849 = vadd.f32 0.0, %v848
        %v850 = vpop.f32.mrf.mxu0
        %v851 = vadd.f32 0.0, %v850
        %852 = vmatmul.bf16.gmra.mxu0 %v764
        %v853 = vpop.f32.mrf.mxu0
        %v854 = vadd.f32 0.0, %v853
        %v855 = vpop.f32.mrf.mxu0
        %v856 = vadd.f32 0.0, %v855
        %857 = vmatmul.bf16.gmra.mxu0 %v767
        %v858 = vpop.f32.mrf.mxu0
        %v859 = vadd.f32 0.0, %v858
        %v860 = vpop.f32.mrf.mxu0
        %v861 = vadd.f32 0.0, %v860
        %862 = vmatmul.bf16.gmra.mxu0 %v770
        %v863 = vpop.f32.mrf.mxu0
        %v864 = vadd.f32 0.0, %v863
        %v865 = vpop.f32.mrf.mxu0
        %v866 = vadd.f32 0.0, %v865
        %867 = vmatmul.bf16.gmra.mxu0 %v773
        %v868 = vpop.f32.mrf.mxu0
        %v869 = vadd.f32 0.0, %v868
        %v870 = vpop.f32.mrf.mxu0
        %v871 = vadd.f32 0.0, %v870
        %872 = vmatmul.bf16.gmra.mxu0 %v776
        %v873 = vpop.f32.mrf.mxu0
        %v874 = vadd.f32 0.0, %v873
        %v875 = vpop.f32.mrf.mxu0
        %v876 = vadd.f32 0.0, %v875
        %877 = vmatmul.bf16.gmra.mxu0 %v779
        %v878 = vpop.f32.mrf.mxu0
        %v879 = vadd.f32 0.0, %v878
        %v880 = vpop.f32.mrf.mxu0
        %v881 = vadd.f32 0.0, %v880
        %882 = vdwg.mxu0
        %v883 = vadd.f32 %v582, %v794
        %v884 = vadd.f32 %v584, %v796
        %v885 = vadd.f32 %v587, %v799
        %v886 = vadd.f32 %v589, %v801
        %v887 = vadd.f32 %v592, %v804
        %v888 = vadd.f32 %v594, %v806
        %v889 = vadd.f32 %v597, %v809
        %v890 = vadd.f32 %v599, %v811
        %v891 = vadd.f32 %v602, %v814
        %v892 = vadd.f32 %v604, %v816
        %v893 = vadd.f32 %v607, %v819
        %v894 = vadd.f32 %v609, %v821
        %v895 = vadd.f32 %v612, %v824
        %v896 = vadd.f32 %v614, %v826
        %v897 = vadd.f32 %v617, %v829
        %v898 = vadd.f32 %v619, %v831
        %v899 = vadd.f32 %v622, %v834
        %v900 = vadd.f32 %v624, %v836
        %v901 = vadd.f32 %v627, %v839
        %v902 = vadd.f32 %v629, %v841
        %v903 = vadd.f32 %v632, %v844
        %v904 = vadd.f32 %v634, %v846
        %v905 = vadd.f32 %v637, %v849
        %v906 = vadd.f32 %v639, %v851
        %v907 = vadd.f32 %v642, %v854
        %v908 = vadd.f32 %v644, %v856
        %v909 = vadd.f32 %v647, %v859
        %v910 = vadd.f32 %v649, %v861
        %v911 = vadd.f32 %v652, %v864
        %v912 = vadd.f32 %v654, %v866
        %v913 = vadd.f32 %v657, %v869
        %v914 = vadd.f32 %v659, %v871
        %v915 = vadd.f32 %v662, %v874
        %v916 = vadd.f32 %v664, %v876
        %v917 = vadd.f32 %v667, %v879
        %v918 = vadd.f32 %v669, %v881
        %v919 = vld [vmem:[%s236 + $0x12] sm:$0xff]
        %v920 = vld [vmem:[%s236 + $0x1a] sm:$0xff]
        %v921 = vld [vmem:[%s236 + $0x22] sm:$0xff]
        %v922 = vld [vmem:[%s236 + $0x2a] sm:$0xff]
        %v923 = vld [vmem:[%s236 + $0x32] sm:$0xff]
        %v924 = vld [vmem:[%s236 + $0x3a] sm:$0xff]
        %v925 = vld [vmem:[%s236 + $0x42] sm:$0xff]
        %v926 = vld [vmem:[%s236 + $0x4a] sm:$0xff]
        %v927 = vld [vmem:[%s236 + $0x52] sm:$0xff]
        %v928 = vld [vmem:[%s236 + $0x5a] sm:$0xff]
        %v929 = vld [vmem:[%s236 + $0x62] sm:$0xff]
        %v930 = vld [vmem:[%s236 + $0x6a] sm:$0xff]
        %v931 = vld [vmem:[%s236 + $0x72] sm:$0xff]
        %v932 = vld [vmem:[%s236 + $0x7a] sm:$0xff]
        %v933 = vld [vmem:[%s236 + $0x82] sm:$0xff]
        %v934 = vld [vmem:[%s236 + $0x8a] sm:$0xff]
        %v935 = vld [vmem:[%s236 + $0x92] sm:$0xff]
        %v936 = vld [vmem:[%s236 + $0x9a] sm:$0xff]
        %v937 = vld [vmem:[%s236 + $0xa2] sm:$0xff]
        %v938 = vld [vmem:[%s236 + $0xaa] sm:$0xff]
        %v939 = vld [vmem:[%s236 + $0xb2] sm:$0xff]
        %v940 = vld [vmem:[%s236 + $0xba] sm:$0xff]
        %v941 = vld [vmem:[%s236 + $0xc2] sm:$0xff]
        %v942 = vld [vmem:[%s236 + $0xca] sm:$0xff]
        %v943 = vld [vmem:[%s236 + $0xd2] sm:$0xff]
        %v944 = vld [vmem:[%s236 + $0xda] sm:$0xff]
        %v945 = vld [vmem:[%s236 + $0xe2] sm:$0xff]
        %v946 = vld [vmem:[%s236 + $0xea] sm:$0xff]
        %v947 = vld [vmem:[%s236 + $0xf2] sm:$0xff]
        %v948 = vld [vmem:[%s236 + $0xfa] sm:$0xff]
        %v949 = vld [vmem:[%s236 + $0x102] sm:$0xff]
        %v950 = vld [vmem:[%s236 + $0x10a] sm:$0xff]
        %v951 = vld [vmem:[%s236 + $0x112] sm:$0xff]
        %v952 = vld [vmem:[%s236 + $0x11a] sm:$0xff]
        %v953 = vld [vmem:[%s236 + $0x122] sm:$0xff]
        %v954 = vld [vmem:[%s236 + $0x12a] sm:$0x3f]
        %v955 = vpack.c.bf16 %v920, %v919
        %v956 = vpack.c.bf16 %v922, %v921
        %v957 = vpack.c.bf16 %v924, %v923
        %v958 = vpack.c.bf16 %v926, %v925
        %v959 = vpack.c.bf16 %v928, %v927
        %v960 = vpack.c.bf16 %v930, %v929
        %v961 = vpack.c.bf16 %v932, %v931
        %v962 = vpack.c.bf16 %v934, %v933
        %v963 = vpack.c.bf16 %v936, %v935
        %v964 = vpack.c.bf16 %v938, %v937
        %v965 = vpack.c.bf16 %v940, %v939
        %v966 = vpack.c.bf16 %v942, %v941
        %v967 = vpack.c.bf16 %v944, %v943
        %v968 = vpack.c.bf16 %v946, %v945
        %v969 = vpack.c.bf16 %v948, %v947
        %v970 = vpack.c.bf16 %v950, %v949
        %v971 = vpack.c.bf16 %v952, %v951
        %v972 = vpack.c.bf16 %v954, %v953
        %s973 = scalar_lea.vmem %s1, 6
        %v974 = vld [vmem:[%s973] sm:$0x3]
        %v976 = vsel %vm354, %v955, 0
        %v979 = vsel %vm354, %v956, 0
        %v982 = vsel %vm354, %v957, 0
        %v985 = vsel %vm354, %v958, 0
        %v988 = vsel %vm354, %v959, 0
        %v991 = vsel %vm354, %v960, 0
        %v994 = vsel %vm354, %v961, 0
        %v997 = vsel %vm354, %v962, 0
        %v1000 = vsel %vm354, %v963, 0
        %v1003 = vsel %vm354, %v964, 0
        %v1006 = vsel %vm354, %v965, 0
        %v1009 = vsel %vm354, %v966, 0
        %v1012 = vsel %vm354, %v967, 0
        %v1015 = vsel %vm354, %v968, 0
        %v1018 = vsel %vm354, %v969, 0
        %v1021 = vsel %vm354, %v970, 0
        %v1024 = vsel %vm354, %v971, 0
        %v1027 = vsel %vm354, %v972, 0
        %v1030 = vand.u32 %v974, %v412
        %1032 = vmatpush.bf16.msra.mxu0 0
        %1033 = vmatpush.bf16.msra.mxu0 0
        %1034 = vmatpush.bf16.msra.mxu0 0
        %1035 = vmatpush.bf16.msra.mxu0 0
        %1036 = vmatpush.bf16.msra.mxu0 0
        %1037 = vmatpush.bf16.msra.mxu0 0
        %1038 = vmatpush.bf16.msra.mxu0 0
        %1039 = vmatpush.bf16.msra.mxu0 %v1030
        %1040 = vmatmul.bf16.gmra.mxu0 %v976
        %v1041 = vpop.f32.mrf.mxu0
        %v1042 = vadd.f32 0.0, %v1041
        %v1043 = vpop.f32.mrf.mxu0
        %v1044 = vadd.f32 0.0, %v1043
        %1045 = vmatmul.bf16.gmra.mxu0 %v979
        %v1046 = vpop.f32.mrf.mxu0
        %v1047 = vadd.f32 0.0, %v1046
        %v1048 = vpop.f32.mrf.mxu0
        %v1049 = vadd.f32 0.0, %v1048
        %1050 = vmatmul.bf16.gmra.mxu0 %v982
        %v1051 = vpop.f32.mrf.mxu0
        %v1052 = vadd.f32 0.0, %v1051
        %v1053 = vpop.f32.mrf.mxu0
        %v1054 = vadd.f32 0.0, %v1053
        %1055 = vmatmul.bf16.gmra.mxu0 %v985
        %v1056 = vpop.f32.mrf.mxu0
        %v1057 = vadd.f32 0.0, %v1056
        %v1058 = vpop.f32.mrf.mxu0
        %v1059 = vadd.f32 0.0, %v1058
        %1060 = vmatmul.bf16.gmra.mxu0 %v988
        %v1061 = vpop.f32.mrf.mxu0
        %v1062 = vadd.f32 0.0, %v1061
        %v1063 = vpop.f32.mrf.mxu0
        %v1064 = vadd.f32 0.0, %v1063
        %1065 = vmatmul.bf16.gmra.mxu0 %v991
        %v1066 = vpop.f32.mrf.mxu0
        %v1067 = vadd.f32 0.0, %v1066
        %v1068 = vpop.f32.mrf.mxu0
        %v1069 = vadd.f32 0.0, %v1068
        %1070 = vmatmul.bf16.gmra.mxu0 %v994
        %v1071 = vpop.f32.mrf.mxu0
        %v1072 = vadd.f32 0.0, %v1071
        %v1073 = vpop.f32.mrf.mxu0
        %v1074 = vadd.f32 0.0, %v1073
        %1075 = vmatmul.bf16.gmra.mxu0 %v997
        %v1076 = vpop.f32.mrf.mxu0
        %v1077 = vadd.f32 0.0, %v1076
        %v1078 = vpop.f32.mrf.mxu0
        %v1079 = vadd.f32 0.0, %v1078
        %1080 = vmatmul.bf16.gmra.mxu0 %v1000
        %v1081 = vpop.f32.mrf.mxu0
        %v1082 = vadd.f32 0.0, %v1081
        %v1083 = vpop.f32.mrf.mxu0
        %v1084 = vadd.f32 0.0, %v1083
        %1085 = vmatmul.bf16.gmra.mxu0 %v1003
        %v1086 = vpop.f32.mrf.mxu0
        %v1087 = vadd.f32 0.0, %v1086
        %v1088 = vpop.f32.mrf.mxu0
        %v1089 = vadd.f32 0.0, %v1088
        %1090 = vmatmul.bf16.gmra.mxu0 %v1006
        %v1091 = vpop.f32.mrf.mxu0
        %v1092 = vadd.f32 0.0, %v1091
        %v1093 = vpop.f32.mrf.mxu0
        %v1094 = vadd.f32 0.0, %v1093
        %1095 = vmatmul.bf16.gmra.mxu0 %v1009
        %v1096 = vpop.f32.mrf.mxu0
        %v1097 = vadd.f32 0.0, %v1096
        %v1098 = vpop.f32.mrf.mxu0
        %v1099 = vadd.f32 0.0, %v1098
        %1100 = vmatmul.bf16.gmra.mxu0 %v1012
        %v1101 = vpop.f32.mrf.mxu0
        %v1102 = vadd.f32 0.0, %v1101
        %v1103 = vpop.f32.mrf.mxu0
        %v1104 = vadd.f32 0.0, %v1103
        %1105 = vmatmul.bf16.gmra.mxu0 %v1015
        %v1106 = vpop.f32.mrf.mxu0
        %v1107 = vadd.f32 0.0, %v1106
        %v1108 = vpop.f32.mrf.mxu0
        %v1109 = vadd.f32 0.0, %v1108
        %1110 = vmatmul.bf16.gmra.mxu0 %v1018
        %v1111 = vpop.f32.mrf.mxu0
        %v1112 = vadd.f32 0.0, %v1111
        %v1113 = vpop.f32.mrf.mxu0
        %v1114 = vadd.f32 0.0, %v1113
        %1115 = vmatmul.bf16.gmra.mxu0 %v1021
        %v1116 = vpop.f32.mrf.mxu0
        %v1117 = vadd.f32 0.0, %v1116
        %v1118 = vpop.f32.mrf.mxu0
        %v1119 = vadd.f32 0.0, %v1118
        %1120 = vmatmul.bf16.gmra.mxu0 %v1024
        %v1121 = vpop.f32.mrf.mxu0
        %v1122 = vadd.f32 0.0, %v1121
        %v1123 = vpop.f32.mrf.mxu0
        %v1124 = vadd.f32 0.0, %v1123
        %1125 = vmatmul.bf16.gmra.mxu0 %v1027
        %v1126 = vpop.f32.mrf.mxu0
        %v1127 = vadd.f32 0.0, %v1126
        %v1128 = vpop.f32.mrf.mxu0
        %v1129 = vadd.f32 0.0, %v1128
        %1130 = vdwg.mxu0
        %v1131 = vadd.f32 %v883, %v1042
        %v1132 = vadd.f32 %v884, %v1044
        %v1133 = vadd.f32 %v885, %v1047
        %v1134 = vadd.f32 %v886, %v1049
        %v1135 = vadd.f32 %v887, %v1052
        %v1136 = vadd.f32 %v888, %v1054
        %v1137 = vadd.f32 %v889, %v1057
        %v1138 = vadd.f32 %v890, %v1059
        %v1139 = vadd.f32 %v891, %v1062
        %v1140 = vadd.f32 %v892, %v1064
        %v1141 = vadd.f32 %v893, %v1067
        %v1142 = vadd.f32 %v894, %v1069
        %v1143 = vadd.f32 %v895, %v1072
        %v1144 = vadd.f32 %v896, %v1074
        %v1145 = vadd.f32 %v897, %v1077
        %v1146 = vadd.f32 %v898, %v1079
        %v1147 = vadd.f32 %v899, %v1082
        %v1148 = vadd.f32 %v900, %v1084
        %v1149 = vadd.f32 %v901, %v1087
        %v1150 = vadd.f32 %v902, %v1089
        %v1151 = vadd.f32 %v903, %v1092
        %v1152 = vadd.f32 %v904, %v1094
        %v1153 = vadd.f32 %v905, %v1097
        %v1154 = vadd.f32 %v906, %v1099
        %v1155 = vadd.f32 %v907, %v1102
        %v1156 = vadd.f32 %v908, %v1104
        %v1157 = vadd.f32 %v909, %v1107
        %v1158 = vadd.f32 %v910, %v1109
        %v1159 = vadd.f32 %v911, %v1112
        %v1160 = vadd.f32 %v912, %v1114
        %v1161 = vadd.f32 %v913, %v1117
        %v1162 = vadd.f32 %v914, %v1119
        %v1163 = vadd.f32 %v915, %v1122
        %v1164 = vadd.f32 %v916, %v1124
        %v1165 = vadd.f32 %v917, %v1127
        %v1166 = vadd.f32 %v918, %v1129
        %v1167 = vld [vmem:[%s236 + $0x13] sm:$0xff]
        %v1168 = vld [vmem:[%s236 + $0x1b] sm:$0xff]
        %v1169 = vld [vmem:[%s236 + $0x23] sm:$0xff]
        %v1170 = vld [vmem:[%s236 + $0x2b] sm:$0xff]
        %v1171 = vld [vmem:[%s236 + $0x33] sm:$0xff]
        %v1172 = vld [vmem:[%s236 + $0x3b] sm:$0xff]
        %v1173 = vld [vmem:[%s236 + $0x43] sm:$0xff]
        %v1174 = vld [vmem:[%s236 + $0x4b] sm:$0xff]
        %v1175 = vld [vmem:[%s236 + $0x53] sm:$0xff]
        %v1176 = vld [vmem:[%s236 + $0x5b] sm:$0xff]
        %v1177 = vld [vmem:[%s236 + $0x63] sm:$0xff]
        %v1178 = vld [vmem:[%s236 + $0x6b] sm:$0xff]
        %v1179 = vld [vmem:[%s236 + $0x73] sm:$0xff]
        %v1180 = vld [vmem:[%s236 + $0x7b] sm:$0xff]
        %v1181 = vld [vmem:[%s236 + $0x83] sm:$0xff]
        %v1182 = vld [vmem:[%s236 + $0x8b] sm:$0xff]
        %v1183 = vld [vmem:[%s236 + $0x93] sm:$0xff]
        %v1184 = vld [vmem:[%s236 + $0x9b] sm:$0xff]
        %v1185 = vld [vmem:[%s236 + $0xa3] sm:$0xff]
        %v1186 = vld [vmem:[%s236 + $0xab] sm:$0xff]
        %v1187 = vld [vmem:[%s236 + $0xb3] sm:$0xff]
        %v1188 = vld [vmem:[%s236 + $0xbb] sm:$0xff]
        %v1189 = vld [vmem:[%s236 + $0xc3] sm:$0xff]
        %v1190 = vld [vmem:[%s236 + $0xcb] sm:$0xff]
        %v1191 = vld [vmem:[%s236 + $0xd3] sm:$0xff]
        %v1192 = vld [vmem:[%s236 + $0xdb] sm:$0xff]
        %v1193 = vld [vmem:[%s236 + $0xe3] sm:$0xff]
        %v1194 = vld [vmem:[%s236 + $0xeb] sm:$0xff]
        %v1195 = vld [vmem:[%s236 + $0xf3] sm:$0xff]
        %v1196 = vld [vmem:[%s236 + $0xfb] sm:$0xff]
        %v1197 = vld [vmem:[%s236 + $0x103] sm:$0xff]
        %v1198 = vld [vmem:[%s236 + $0x10b] sm:$0xff]
        %v1199 = vld [vmem:[%s236 + $0x113] sm:$0xff]
        %v1200 = vld [vmem:[%s236 + $0x11b] sm:$0xff]
        %v1201 = vld [vmem:[%s236 + $0x123] sm:$0xff]
        %v1202 = vld [vmem:[%s236 + $0x12b] sm:$0x3f]
        %v1203 = vpack.c.bf16 %v1168, %v1167
        %v1204 = vpack.c.bf16 %v1170, %v1169
        %v1205 = vpack.c.bf16 %v1172, %v1171
        %v1206 = vpack.c.bf16 %v1174, %v1173
        %v1207 = vpack.c.bf16 %v1176, %v1175
        %v1208 = vpack.c.bf16 %v1178, %v1177
        %v1209 = vpack.c.bf16 %v1180, %v1179
        %v1210 = vpack.c.bf16 %v1182, %v1181
        %v1211 = vpack.c.bf16 %v1184, %v1183
        %v1212 = vpack.c.bf16 %v1186, %v1185
        %v1213 = vpack.c.bf16 %v1188, %v1187
        %v1214 = vpack.c.bf16 %v1190, %v1189
        %v1215 = vpack.c.bf16 %v1192, %v1191
        %v1216 = vpack.c.bf16 %v1194, %v1193
        %v1217 = vpack.c.bf16 %v1196, %v1195
        %v1218 = vpack.c.bf16 %v1198, %v1197
        %v1219 = vpack.c.bf16 %v1200, %v1199
        %v1220 = vpack.c.bf16 %v1202, %v1201
        %s1221 = scalar_lea.vmem %s1, 8
        %v1222 = vld [vmem:[%s1221] sm:$0x3]
        %v1224 = vsel %vm354, %v1203, 0
        %v1227 = vsel %vm354, %v1204, 0
        %v1230 = vsel %vm354, %v1205, 0
        %v1233 = vsel %vm354, %v1206, 0
        %v1236 = vsel %vm354, %v1207, 0
        %v1239 = vsel %vm354, %v1208, 0
        %v1242 = vsel %vm354, %v1209, 0
        %v1245 = vsel %vm354, %v1210, 0
        %v1248 = vsel %vm354, %v1211, 0
        %v1251 = vsel %vm354, %v1212, 0
        %v1254 = vsel %vm354, %v1213, 0
        %v1257 = vsel %vm354, %v1214, 0
        %v1260 = vsel %vm354, %v1215, 0
        %v1263 = vsel %vm354, %v1216, 0
        %v1266 = vsel %vm354, %v1217, 0
        %v1269 = vsel %vm354, %v1218, 0
        %v1272 = vsel %vm354, %v1219, 0
        %v1275 = vsel %vm354, %v1220, 0
        %v1278 = vand.u32 %v1222, %v412
        %1280 = vmatpush.bf16.msra.mxu0 0
        %1281 = vmatpush.bf16.msra.mxu0 0
        %1282 = vmatpush.bf16.msra.mxu0 0
        %1283 = vmatpush.bf16.msra.mxu0 0
        %1284 = vmatpush.bf16.msra.mxu0 0
        %1285 = vmatpush.bf16.msra.mxu0 0
        %1286 = vmatpush.bf16.msra.mxu0 0
        %1287 = vmatpush.bf16.msra.mxu0 %v1278
        %1288 = vmatmul.bf16.gmra.mxu0 %v1224
        %v1289 = vpop.f32.mrf.mxu0
        %v1290 = vadd.f32 0.0, %v1289
        %v1291 = vpop.f32.mrf.mxu0
        %v1292 = vadd.f32 0.0, %v1291
        %1293 = vmatmul.bf16.gmra.mxu0 %v1227
        %v1294 = vpop.f32.mrf.mxu0
        %v1295 = vadd.f32 0.0, %v1294
        %v1296 = vpop.f32.mrf.mxu0
        %v1297 = vadd.f32 0.0, %v1296
        %1298 = vmatmul.bf16.gmra.mxu0 %v1230
        %v1299 = vpop.f32.mrf.mxu0
        %v1300 = vadd.f32 0.0, %v1299
        %v1301 = vpop.f32.mrf.mxu0
        %v1302 = vadd.f32 0.0, %v1301
        %1303 = vmatmul.bf16.gmra.mxu0 %v1233
        %v1304 = vpop.f32.mrf.mxu0
        %v1305 = vadd.f32 0.0, %v1304
        %v1306 = vpop.f32.mrf.mxu0
        %v1307 = vadd.f32 0.0, %v1306
        %1308 = vmatmul.bf16.gmra.mxu0 %v1236
        %v1309 = vpop.f32.mrf.mxu0
        %v1310 = vadd.f32 0.0, %v1309
        %v1311 = vpop.f32.mrf.mxu0
        %v1312 = vadd.f32 0.0, %v1311
        %1313 = vmatmul.bf16.gmra.mxu0 %v1239
        %v1314 = vpop.f32.mrf.mxu0
        %v1315 = vadd.f32 0.0, %v1314
        %v1316 = vpop.f32.mrf.mxu0
        %v1317 = vadd.f32 0.0, %v1316
        %1318 = vmatmul.bf16.gmra.mxu0 %v1242
        %v1319 = vpop.f32.mrf.mxu0
        %v1320 = vadd.f32 0.0, %v1319
        %v1321 = vpop.f32.mrf.mxu0
        %v1322 = vadd.f32 0.0, %v1321
        %1323 = vmatmul.bf16.gmra.mxu0 %v1245
        %v1324 = vpop.f32.mrf.mxu0
        %v1325 = vadd.f32 0.0, %v1324
        %v1326 = vpop.f32.mrf.mxu0
        %v1327 = vadd.f32 0.0, %v1326
        %1328 = vmatmul.bf16.gmra.mxu0 %v1248
        %v1329 = vpop.f32.mrf.mxu0
        %v1330 = vadd.f32 0.0, %v1329
        %v1331 = vpop.f32.mrf.mxu0
        %v1332 = vadd.f32 0.0, %v1331
        %1333 = vmatmul.bf16.gmra.mxu0 %v1251
        %v1334 = vpop.f32.mrf.mxu0
        %v1335 = vadd.f32 0.0, %v1334
        %v1336 = vpop.f32.mrf.mxu0
        %v1337 = vadd.f32 0.0, %v1336
        %1338 = vmatmul.bf16.gmra.mxu0 %v1254
        %v1339 = vpop.f32.mrf.mxu0
        %v1340 = vadd.f32 0.0, %v1339
        %v1341 = vpop.f32.mrf.mxu0
        %v1342 = vadd.f32 0.0, %v1341
        %1343 = vmatmul.bf16.gmra.mxu0 %v1257
        %v1344 = vpop.f32.mrf.mxu0
        %v1345 = vadd.f32 0.0, %v1344
        %v1346 = vpop.f32.mrf.mxu0
        %v1347 = vadd.f32 0.0, %v1346
        %1348 = vmatmul.bf16.gmra.mxu0 %v1260
        %v1349 = vpop.f32.mrf.mxu0
        %v1350 = vadd.f32 0.0, %v1349
        %v1351 = vpop.f32.mrf.mxu0
        %v1352 = vadd.f32 0.0, %v1351
        %1353 = vmatmul.bf16.gmra.mxu0 %v1263
        %v1354 = vpop.f32.mrf.mxu0
        %v1355 = vadd.f32 0.0, %v1354
        %v1356 = vpop.f32.mrf.mxu0
        %v1357 = vadd.f32 0.0, %v1356
        %1358 = vmatmul.bf16.gmra.mxu0 %v1266
        %v1359 = vpop.f32.mrf.mxu0
        %v1360 = vadd.f32 0.0, %v1359
        %v1361 = vpop.f32.mrf.mxu0
        %v1362 = vadd.f32 0.0, %v1361
        %1363 = vmatmul.bf16.gmra.mxu0 %v1269
        %v1364 = vpop.f32.mrf.mxu0
        %v1365 = vadd.f32 0.0, %v1364
        %v1366 = vpop.f32.mrf.mxu0
        %v1367 = vadd.f32 0.0, %v1366
        %1368 = vmatmul.bf16.gmra.mxu0 %v1272
        %v1369 = vpop.f32.mrf.mxu0
        %v1370 = vadd.f32 0.0, %v1369
        %v1371 = vpop.f32.mrf.mxu0
        %v1372 = vadd.f32 0.0, %v1371
        %1373 = vmatmul.bf16.gmra.mxu0 %v1275
        %v1374 = vpop.f32.mrf.mxu0
        %v1375 = vadd.f32 0.0, %v1374
        %v1376 = vpop.f32.mrf.mxu0
        %v1377 = vadd.f32 0.0, %v1376
        %1378 = vdwg.mxu0
        %v1379 = vadd.f32 %v1131, %v1290
        %v1380 = vadd.f32 %v1132, %v1292
        %v1381 = vadd.f32 %v1133, %v1295
        %v1382 = vadd.f32 %v1134, %v1297
        %v1383 = vadd.f32 %v1135, %v1300
        %v1384 = vadd.f32 %v1136, %v1302
        %v1385 = vadd.f32 %v1137, %v1305
        %v1386 = vadd.f32 %v1138, %v1307
        %v1387 = vadd.f32 %v1139, %v1310
        %v1388 = vadd.f32 %v1140, %v1312
        %v1389 = vadd.f32 %v1141, %v1315
        %v1390 = vadd.f32 %v1142, %v1317
        %v1391 = vadd.f32 %v1143, %v1320
        %v1392 = vadd.f32 %v1144, %v1322
        %v1393 = vadd.f32 %v1145, %v1325
        %v1394 = vadd.f32 %v1146, %v1327
        %v1395 = vadd.f32 %v1147, %v1330
        %v1396 = vadd.f32 %v1148, %v1332
        %v1397 = vadd.f32 %v1149, %v1335
        %v1398 = vadd.f32 %v1150, %v1337
        %v1399 = vadd.f32 %v1151, %v1340
        %v1400 = vadd.f32 %v1152, %v1342
        %v1401 = vadd.f32 %v1153, %v1345
        %v1402 = vadd.f32 %v1154, %v1347
        %v1403 = vadd.f32 %v1155, %v1350
        %v1404 = vadd.f32 %v1156, %v1352
        %v1405 = vadd.f32 %v1157, %v1355
        %v1406 = vadd.f32 %v1158, %v1357
        %v1407 = vadd.f32 %v1159, %v1360
        %v1408 = vadd.f32 %v1160, %v1362
        %v1409 = vadd.f32 %v1161, %v1365
        %v1410 = vadd.f32 %v1162, %v1367
        %v1411 = vadd.f32 %v1163, %v1370
        %v1412 = vadd.f32 %v1164, %v1372
        %v1413 = vadd.f32 %v1165, %v1375
        %v1414 = vadd.f32 %v1166, %v1377
        %v1415 = vld [vmem:[%s236 + $0x14] sm:$0xff]
        %v1416 = vld [vmem:[%s236 + $0x1c] sm:$0xff]
        %v1417 = vld [vmem:[%s236 + $0x24] sm:$0xff]
        %v1418 = vld [vmem:[%s236 + $0x2c] sm:$0xff]
        %v1419 = vld [vmem:[%s236 + $0x34] sm:$0xff]
        %v1420 = vld [vmem:[%s236 + $0x3c] sm:$0xff]
        %v1421 = vld [vmem:[%s236 + $0x44] sm:$0xff]
        %v1422 = vld [vmem:[%s236 + $0x4c] sm:$0xff]
        %v1423 = vld [vmem:[%s236 + $0x54] sm:$0xff]
        %v1424 = vld [vmem:[%s236 + $0x5c] sm:$0xff]
        %v1425 = vld [vmem:[%s236 + $0x64] sm:$0xff]
        %v1426 = vld [vmem:[%s236 + $0x6c] sm:$0xff]
        %v1427 = vld [vmem:[%s236 + $0x74] sm:$0xff]
        %v1428 = vld [vmem:[%s236 + $0x7c] sm:$0xff]
        %v1429 = vld [vmem:[%s236 + $0x84] sm:$0xff]
        %v1430 = vld [vmem:[%s236 + $0x8c] sm:$0xff]
        %v1431 = vld [vmem:[%s236 + $0x94] sm:$0xff]
        %v1432 = vld [vmem:[%s236 + $0x9c] sm:$0xff]
        %v1433 = vld [vmem:[%s236 + $0xa4] sm:$0xff]
        %v1434 = vld [vmem:[%s236 + $0xac] sm:$0xff]
        %v1435 = vld [vmem:[%s236 + $0xb4] sm:$0xff]
        %v1436 = vld [vmem:[%s236 + $0xbc] sm:$0xff]
        %v1437 = vld [vmem:[%s236 + $0xc4] sm:$0xff]
        %v1438 = vld [vmem:[%s236 + $0xcc] sm:$0xff]
        %v1439 = vld [vmem:[%s236 + $0xd4] sm:$0xff]
        %v1440 = vld [vmem:[%s236 + $0xdc] sm:$0xff]
        %v1441 = vld [vmem:[%s236 + $0xe4] sm:$0xff]
        %v1442 = vld [vmem:[%s236 + $0xec] sm:$0xff]
        %v1443 = vld [vmem:[%s236 + $0xf4] sm:$0xff]
        %v1444 = vld [vmem:[%s236 + $0xfc] sm:$0xff]
        %v1445 = vld [vmem:[%s236 + $0x104] sm:$0xff]
        %v1446 = vld [vmem:[%s236 + $0x10c] sm:$0xff]
        %v1447 = vld [vmem:[%s236 + $0x114] sm:$0xff]
        %v1448 = vld [vmem:[%s236 + $0x11c] sm:$0xff]
        %v1449 = vld [vmem:[%s236 + $0x124] sm:$0xff]
        %v1450 = vld [vmem:[%s236 + $0x12c] sm:$0x3f]
        %v1451 = vpack.c.bf16 %v1416, %v1415
        %v1452 = vpack.c.bf16 %v1418, %v1417
        %v1453 = vpack.c.bf16 %v1420, %v1419
        %v1454 = vpack.c.bf16 %v1422, %v1421
        %v1455 = vpack.c.bf16 %v1424, %v1423
        %v1456 = vpack.c.bf16 %v1426, %v1425
        %v1457 = vpack.c.bf16 %v1428, %v1427
        %v1458 = vpack.c.bf16 %v1430, %v1429
        %v1459 = vpack.c.bf16 %v1432, %v1431
        %v1460 = vpack.c.bf16 %v1434, %v1433
        %v1461 = vpack.c.bf16 %v1436, %v1435
        %v1462 = vpack.c.bf16 %v1438, %v1437
        %v1463 = vpack.c.bf16 %v1440, %v1439
        %v1464 = vpack.c.bf16 %v1442, %v1441
        %v1465 = vpack.c.bf16 %v1444, %v1443
        %v1466 = vpack.c.bf16 %v1446, %v1445
        %v1467 = vpack.c.bf16 %v1448, %v1447
        %v1468 = vpack.c.bf16 %v1450, %v1449
        %s1469 = scalar_lea.vmem %s1, 10
        %v1470 = vld [vmem:[%s1469] sm:$0x3]
        %v1472 = vsel %vm354, %v1451, 0
        %v1475 = vsel %vm354, %v1452, 0
        %v1478 = vsel %vm354, %v1453, 0
        %v1481 = vsel %vm354, %v1454, 0
        %v1484 = vsel %vm354, %v1455, 0
        %v1487 = vsel %vm354, %v1456, 0
        %v1490 = vsel %vm354, %v1457, 0
        %v1493 = vsel %vm354, %v1458, 0
        %v1496 = vsel %vm354, %v1459, 0
        %v1499 = vsel %vm354, %v1460, 0
        %v1502 = vsel %vm354, %v1461, 0
        %v1505 = vsel %vm354, %v1462, 0
        %v1508 = vsel %vm354, %v1463, 0
        %v1511 = vsel %vm354, %v1464, 0
        %v1514 = vsel %vm354, %v1465, 0
        %v1517 = vsel %vm354, %v1466, 0
        %v1520 = vsel %vm354, %v1467, 0
        %v1523 = vsel %vm354, %v1468, 0
        %v1526 = vand.u32 %v1470, %v412
        %1528 = vmatpush.bf16.msra.mxu0 0
        %1529 = vmatpush.bf16.msra.mxu0 0
        %1530 = vmatpush.bf16.msra.mxu0 0
        %1531 = vmatpush.bf16.msra.mxu0 0
        %1532 = vmatpush.bf16.msra.mxu0 0
        %1533 = vmatpush.bf16.msra.mxu0 0
        %1534 = vmatpush.bf16.msra.mxu0 0
        %1535 = vmatpush.bf16.msra.mxu0 %v1526
        %1536 = vmatmul.bf16.gmra.mxu0 %v1472
        %v1537 = vpop.f32.mrf.mxu0
        %v1538 = vadd.f32 0.0, %v1537
        %v1539 = vpop.f32.mrf.mxu0
        %v1540 = vadd.f32 0.0, %v1539
        %1541 = vmatmul.bf16.gmra.mxu0 %v1475
        %v1542 = vpop.f32.mrf.mxu0
        %v1543 = vadd.f32 0.0, %v1542
        %v1544 = vpop.f32.mrf.mxu0
        %v1545 = vadd.f32 0.0, %v1544
        %1546 = vmatmul.bf16.gmra.mxu0 %v1478
        %v1547 = vpop.f32.mrf.mxu0
        %v1548 = vadd.f32 0.0, %v1547
        %v1549 = vpop.f32.mrf.mxu0
        %v1550 = vadd.f32 0.0, %v1549
        %1551 = vmatmul.bf16.gmra.mxu0 %v1481
        %v1552 = vpop.f32.mrf.mxu0
        %v1553 = vadd.f32 0.0, %v1552
        %v1554 = vpop.f32.mrf.mxu0
        %v1555 = vadd.f32 0.0, %v1554
        %1556 = vmatmul.bf16.gmra.mxu0 %v1484
        %v1557 = vpop.f32.mrf.mxu0
        %v1558 = vadd.f32 0.0, %v1557
        %v1559 = vpop.f32.mrf.mxu0
        %v1560 = vadd.f32 0.0, %v1559
        %1561 = vmatmul.bf16.gmra.mxu0 %v1487
        %v1562 = vpop.f32.mrf.mxu0
        %v1563 = vadd.f32 0.0, %v1562
        %v1564 = vpop.f32.mrf.mxu0
        %v1565 = vadd.f32 0.0, %v1564
        %1566 = vmatmul.bf16.gmra.mxu0 %v1490
        %v1567 = vpop.f32.mrf.mxu0
        %v1568 = vadd.f32 0.0, %v1567
        %v1569 = vpop.f32.mrf.mxu0
        %v1570 = vadd.f32 0.0, %v1569
        %1571 = vmatmul.bf16.gmra.mxu0 %v1493
        %v1572 = vpop.f32.mrf.mxu0
        %v1573 = vadd.f32 0.0, %v1572
        %v1574 = vpop.f32.mrf.mxu0
        %v1575 = vadd.f32 0.0, %v1574
        %1576 = vmatmul.bf16.gmra.mxu0 %v1496
        %v1577 = vpop.f32.mrf.mxu0
        %v1578 = vadd.f32 0.0, %v1577
        %v1579 = vpop.f32.mrf.mxu0
        %v1580 = vadd.f32 0.0, %v1579
        %1581 = vmatmul.bf16.gmra.mxu0 %v1499
        %v1582 = vpop.f32.mrf.mxu0
        %v1583 = vadd.f32 0.0, %v1582
        %v1584 = vpop.f32.mrf.mxu0
        %v1585 = vadd.f32 0.0, %v1584
        %1586 = vmatmul.bf16.gmra.mxu0 %v1502
        %v1587 = vpop.f32.mrf.mxu0
        %v1588 = vadd.f32 0.0, %v1587
        %v1589 = vpop.f32.mrf.mxu0
        %v1590 = vadd.f32 0.0, %v1589
        %1591 = vmatmul.bf16.gmra.mxu0 %v1505
        %v1592 = vpop.f32.mrf.mxu0
        %v1593 = vadd.f32 0.0, %v1592
        %v1594 = vpop.f32.mrf.mxu0
        %v1595 = vadd.f32 0.0, %v1594
        %1596 = vmatmul.bf16.gmra.mxu0 %v1508
        %v1597 = vpop.f32.mrf.mxu0
        %v1598 = vadd.f32 0.0, %v1597
        %v1599 = vpop.f32.mrf.mxu0
        %v1600 = vadd.f32 0.0, %v1599
        %1601 = vmatmul.bf16.gmra.mxu0 %v1511
        %v1602 = vpop.f32.mrf.mxu0
        %v1603 = vadd.f32 0.0, %v1602
        %v1604 = vpop.f32.mrf.mxu0
        %v1605 = vadd.f32 0.0, %v1604
        %1606 = vmatmul.bf16.gmra.mxu0 %v1514
        %v1607 = vpop.f32.mrf.mxu0
        %v1608 = vadd.f32 0.0, %v1607
        %v1609 = vpop.f32.mrf.mxu0
        %v1610 = vadd.f32 0.0, %v1609
        %1611 = vmatmul.bf16.gmra.mxu0 %v1517
        %v1612 = vpop.f32.mrf.mxu0
        %v1613 = vadd.f32 0.0, %v1612
        %v1614 = vpop.f32.mrf.mxu0
        %v1615 = vadd.f32 0.0, %v1614
        %1616 = vmatmul.bf16.gmra.mxu0 %v1520
        %v1617 = vpop.f32.mrf.mxu0
        %v1618 = vadd.f32 0.0, %v1617
        %v1619 = vpop.f32.mrf.mxu0
        %v1620 = vadd.f32 0.0, %v1619
        %1621 = vmatmul.bf16.gmra.mxu0 %v1523
        %v1622 = vpop.f32.mrf.mxu0
        %v1623 = vadd.f32 0.0, %v1622
        %v1624 = vpop.f32.mrf.mxu0
        %v1625 = vadd.f32 0.0, %v1624
        %1626 = vdwg.mxu0
        %v1627 = vadd.f32 %v1379, %v1538
        %v1628 = vadd.f32 %v1380, %v1540
        %v1629 = vadd.f32 %v1381, %v1543
        %v1630 = vadd.f32 %v1382, %v1545
        %v1631 = vadd.f32 %v1383, %v1548
        %v1632 = vadd.f32 %v1384, %v1550
        %v1633 = vadd.f32 %v1385, %v1553
        %v1634 = vadd.f32 %v1386, %v1555
        %v1635 = vadd.f32 %v1387, %v1558
        %v1636 = vadd.f32 %v1388, %v1560
        %v1637 = vadd.f32 %v1389, %v1563
        %v1638 = vadd.f32 %v1390, %v1565
        %v1639 = vadd.f32 %v1391, %v1568
        %v1640 = vadd.f32 %v1392, %v1570
        %v1641 = vadd.f32 %v1393, %v1573
        %v1642 = vadd.f32 %v1394, %v1575
        %v1643 = vadd.f32 %v1395, %v1578
        %v1644 = vadd.f32 %v1396, %v1580
        %v1645 = vadd.f32 %v1397, %v1583
        %v1646 = vadd.f32 %v1398, %v1585
        %v1647 = vadd.f32 %v1399, %v1588
        %v1648 = vadd.f32 %v1400, %v1590
        %v1649 = vadd.f32 %v1401, %v1593
        %v1650 = vadd.f32 %v1402, %v1595
        %v1651 = vadd.f32 %v1403, %v1598
        %v1652 = vadd.f32 %v1404, %v1600
        %v1653 = vadd.f32 %v1405, %v1603
        %v1654 = vadd.f32 %v1406, %v1605
        %v1655 = vadd.f32 %v1407, %v1608
        %v1656 = vadd.f32 %v1408, %v1610
        %v1657 = vadd.f32 %v1409, %v1613
        %v1658 = vadd.f32 %v1410, %v1615
        %v1659 = vadd.f32 %v1411, %v1618
        %v1660 = vadd.f32 %v1412, %v1620
        %v1661 = vadd.f32 %v1413, %v1623
        %v1662 = vadd.f32 %v1414, %v1625
        %v1663 = vld [vmem:[%s236 + $0x24] sm:$0xff]
        %v1664 = vld [vmem:[%s236 + $0x2c] sm:$0xff]
        %v1665 = vld [vmem:[%s236 + $0x34] sm:$0xff]
        %v1666 = vld [vmem:[%s236 + $0x3c] sm:$0xff]
        %v1667 = vld [vmem:[%s236 + $0x44] sm:$0xff]
        %v1668 = vld [vmem:[%s236 + $0x4c] sm:$0xff]
        %v1669 = vld [vmem:[%s236 + $0x54] sm:$0xff]
        %v1670 = vld [vmem:[%s236 + $0x5c] sm:$0xff]
        %v1671 = vld [vmem:[%s236 + $0x64] sm:$0xff]
        %v1672 = vld [vmem:[%s236 + $0x6c] sm:$0xff]
        %v1673 = vld [vmem:[%s236 + $0x74] sm:$0xff]
        %v1674 = vld [vmem:[%s236 + $0x7c] sm:$0xff]
        %v1675 = vld [vmem:[%s236 + $0x84] sm:$0xff]
        %v1676 = vld [vmem:[%s236 + $0x8c] sm:$0xff]
        %v1677 = vld [vmem:[%s236 + $0x94] sm:$0xff]
        %v1678 = vld [vmem:[%s236 + $0x9c] sm:$0xff]
        %v1679 = vld [vmem:[%s236 + $0xa4] sm:$0xff]
        %v1680 = vld [vmem:[%s236 + $0xac] sm:$0xff]
        %v1681 = vld [vmem:[%s236 + $0xb4] sm:$0xff]
        %v1682 = vld [vmem:[%s236 + $0xbc] sm:$0xff]
        %v1683 = vld [vmem:[%s236 + $0xc4] sm:$0xff]
        %v1684 = vld [vmem:[%s236 + $0xcc] sm:$0xff]
        %v1685 = vld [vmem:[%s236 + $0xd4] sm:$0xff]
        %v1686 = vld [vmem:[%s236 + $0xdc] sm:$0xff]
        %v1687 = vld [vmem:[%s236 + $0xe4] sm:$0xff]
        %v1688 = vld [vmem:[%s236 + $0xec] sm:$0xff]
        %v1689 = vld [vmem:[%s236 + $0xf4] sm:$0xff]
        %v1690 = vld [vmem:[%s236 + $0xfc] sm:$0xff]
        %v1691 = vld [vmem:[%s236 + $0x104] sm:$0xff]
        %v1692 = vld [vmem:[%s236 + $0x10c] sm:$0xff]
        %v1693 = vld [vmem:[%s236 + $0x114] sm:$0xff]
        %v1694 = vld [vmem:[%s236 + $0x11c] sm:$0xff]
        %v1695 = vld [vmem:[%s236 + $0x124] sm:$0xff]
        %v1696 = vld [vmem:[%s236 + $0x12c] sm:$0xff]
        %v1697 = vld [vmem:[%s236 + $0x134] sm:$0xff]
        %v1698 = vld [vmem:[%s236 + $0x13c] sm:$0x3f]
        %v1699 = vpack.c.bf16 %v1664, %v1663
        %v1700 = vpack.c.bf16 %v1666, %v1665
        %v1701 = vpack.c.bf16 %v1668, %v1667
        %v1702 = vpack.c.bf16 %v1670, %v1669
        %v1703 = vpack.c.bf16 %v1672, %v1671
        %v1704 = vpack.c.bf16 %v1674, %v1673
        %v1705 = vpack.c.bf16 %v1676, %v1675
        %v1706 = vpack.c.bf16 %v1678, %v1677
        %v1707 = vpack.c.bf16 %v1680, %v1679
        %v1708 = vpack.c.bf16 %v1682, %v1681
        %v1709 = vpack.c.bf16 %v1684, %v1683
        %v1710 = vpack.c.bf16 %v1686, %v1685
        %v1711 = vpack.c.bf16 %v1688, %v1687
        %v1712 = vpack.c.bf16 %v1690, %v1689
        %v1713 = vpack.c.bf16 %v1692, %v1691
        %v1714 = vpack.c.bf16 %v1694, %v1693
        %v1715 = vpack.c.bf16 %v1696, %v1695
        %v1716 = vpack.c.bf16 %v1698, %v1697
        %s1717 = scalar_lea.vmem %s1, 12
        %v1718 = vld [vmem:[%s1717] sm:$0x3]
        %v1720 = vsel %vm354, %v1699, 0
        %v1723 = vsel %vm354, %v1700, 0
        %v1726 = vsel %vm354, %v1701, 0
        %v1729 = vsel %vm354, %v1702, 0
        %v1732 = vsel %vm354, %v1703, 0
        %v1735 = vsel %vm354, %v1704, 0
        %v1738 = vsel %vm354, %v1705, 0
        %v1741 = vsel %vm354, %v1706, 0
        %v1744 = vsel %vm354, %v1707, 0
        %v1747 = vsel %vm354, %v1708, 0
        %v1750 = vsel %vm354, %v1709, 0
        %v1753 = vsel %vm354, %v1710, 0
        %v1756 = vsel %vm354, %v1711, 0
        %v1759 = vsel %vm354, %v1712, 0
        %v1762 = vsel %vm354, %v1713, 0
        %v1765 = vsel %vm354, %v1714, 0
        %v1768 = vsel %vm354, %v1715, 0
        %v1771 = vsel %vm354, %v1716, 0
        %v1774 = vand.u32 %v1718, %v412
        %1776 = vmatpush.bf16.msra.mxu0 0
        %1777 = vmatpush.bf16.msra.mxu0 0
        %1778 = vmatpush.bf16.msra.mxu0 0
        %1779 = vmatpush.bf16.msra.mxu0 0
        %1780 = vmatpush.bf16.msra.mxu0 0
        %1781 = vmatpush.bf16.msra.mxu0 0
        %1782 = vmatpush.bf16.msra.mxu0 0
        %1783 = vmatpush.bf16.msra.mxu0 %v1774
        %1784 = vmatmul.bf16.gmra.mxu0 %v1720
        %v1785 = vpop.f32.mrf.mxu0
        %v1786 = vadd.f32 0.0, %v1785
        %v1787 = vpop.f32.mrf.mxu0
        %v1788 = vadd.f32 0.0, %v1787
        %1789 = vmatmul.bf16.gmra.mxu0 %v1723
        %v1790 = vpop.f32.mrf.mxu0
        %v1791 = vadd.f32 0.0, %v1790
        %v1792 = vpop.f32.mrf.mxu0
        %v1793 = vadd.f32 0.0, %v1792
        %1794 = vmatmul.bf16.gmra.mxu0 %v1726
        %v1795 = vpop.f32.mrf.mxu0
        %v1796 = vadd.f32 0.0, %v1795
        %v1797 = vpop.f32.mrf.mxu0
        %v1798 = vadd.f32 0.0, %v1797
        %1799 = vmatmul.bf16.gmra.mxu0 %v1729
        %v1800 = vpop.f32.mrf.mxu0
        %v1801 = vadd.f32 0.0, %v1800
        %v1802 = vpop.f32.mrf.mxu0
        %v1803 = vadd.f32 0.0, %v1802
        %1804 = vmatmul.bf16.gmra.mxu0 %v1732
        %v1805 = vpop.f32.mrf.mxu0
        %v1806 = vadd.f32 0.0, %v1805
        %v1807 = vpop.f32.mrf.mxu0
        %v1808 = vadd.f32 0.0, %v1807
        %1809 = vmatmul.bf16.gmra.mxu0 %v1735
        %v1810 = vpop.f32.mrf.mxu0
        %v1811 = vadd.f32 0.0, %v1810
        %v1812 = vpop.f32.mrf.mxu0
        %v1813 = vadd.f32 0.0, %v1812
        %1814 = vmatmul.bf16.gmra.mxu0 %v1738
        %v1815 = vpop.f32.mrf.mxu0
        %v1816 = vadd.f32 0.0, %v1815
        %v1817 = vpop.f32.mrf.mxu0
        %v1818 = vadd.f32 0.0, %v1817
        %1819 = vmatmul.bf16.gmra.mxu0 %v1741
        %v1820 = vpop.f32.mrf.mxu0
        %v1821 = vadd.f32 0.0, %v1820
        %v1822 = vpop.f32.mrf.mxu0
        %v1823 = vadd.f32 0.0, %v1822
        %1824 = vmatmul.bf16.gmra.mxu0 %v1744
        %v1825 = vpop.f32.mrf.mxu0
        %v1826 = vadd.f32 0.0, %v1825
        %v1827 = vpop.f32.mrf.mxu0
        %v1828 = vadd.f32 0.0, %v1827
        %1829 = vmatmul.bf16.gmra.mxu0 %v1747
        %v1830 = vpop.f32.mrf.mxu0
        %v1831 = vadd.f32 0.0, %v1830
        %v1832 = vpop.f32.mrf.mxu0
        %v1833 = vadd.f32 0.0, %v1832
        %1834 = vmatmul.bf16.gmra.mxu0 %v1750
        %v1835 = vpop.f32.mrf.mxu0
        %v1836 = vadd.f32 0.0, %v1835
        %v1837 = vpop.f32.mrf.mxu0
        %v1838 = vadd.f32 0.0, %v1837
        %1839 = vmatmul.bf16.gmra.mxu0 %v1753
        %v1840 = vpop.f32.mrf.mxu0
        %v1841 = vadd.f32 0.0, %v1840
        %v1842 = vpop.f32.mrf.mxu0
        %v1843 = vadd.f32 0.0, %v1842
        %1844 = vmatmul.bf16.gmra.mxu0 %v1756
        %v1845 = vpop.f32.mrf.mxu0
        %v1846 = vadd.f32 0.0, %v1845
        %v1847 = vpop.f32.mrf.mxu0
        %v1848 = vadd.f32 0.0, %v1847
        %1849 = vmatmul.bf16.gmra.mxu0 %v1759
        %v1850 = vpop.f32.mrf.mxu0
        %v1851 = vadd.f32 0.0, %v1850
        %v1852 = vpop.f32.mrf.mxu0
        %v1853 = vadd.f32 0.0, %v1852
        %1854 = vmatmul.bf16.gmra.mxu0 %v1762
        %v1855 = vpop.f32.mrf.mxu0
        %v1856 = vadd.f32 0.0, %v1855
        %v1857 = vpop.f32.mrf.mxu0
        %v1858 = vadd.f32 0.0, %v1857
        %1859 = vmatmul.bf16.gmra.mxu0 %v1765
        %v1860 = vpop.f32.mrf.mxu0
        %v1861 = vadd.f32 0.0, %v1860
        %v1862 = vpop.f32.mrf.mxu0
        %v1863 = vadd.f32 0.0, %v1862
        %1864 = vmatmul.bf16.gmra.mxu0 %v1768
        %v1865 = vpop.f32.mrf.mxu0
        %v1866 = vadd.f32 0.0, %v1865
        %v1867 = vpop.f32.mrf.mxu0
        %v1868 = vadd.f32 0.0, %v1867
        %1869 = vmatmul.bf16.gmra.mxu0 %v1771
        %v1870 = vpop.f32.mrf.mxu0
        %v1871 = vadd.f32 0.0, %v1870
        %v1872 = vpop.f32.mrf.mxu0
        %v1873 = vadd.f32 0.0, %v1872
        %1874 = vdwg.mxu0
        %v1875 = vadd.f32 %v1627, %v1786
        %v1876 = vadd.f32 %v1628, %v1788
        %v1877 = vadd.f32 %v1629, %v1791
        %v1878 = vadd.f32 %v1630, %v1793
        %v1879 = vadd.f32 %v1631, %v1796
        %v1880 = vadd.f32 %v1632, %v1798
        %v1881 = vadd.f32 %v1633, %v1801
        %v1882 = vadd.f32 %v1634, %v1803
        %v1883 = vadd.f32 %v1635, %v1806
        %v1884 = vadd.f32 %v1636, %v1808
        %v1885 = vadd.f32 %v1637, %v1811
        %v1886 = vadd.f32 %v1638, %v1813
        %v1887 = vadd.f32 %v1639, %v1816
        %v1888 = vadd.f32 %v1640, %v1818
        %v1889 = vadd.f32 %v1641, %v1821
        %v1890 = vadd.f32 %v1642, %v1823
        %v1891 = vadd.f32 %v1643, %v1826
        %v1892 = vadd.f32 %v1644, %v1828
        %v1893 = vadd.f32 %v1645, %v1831
        %v1894 = vadd.f32 %v1646, %v1833
        %v1895 = vadd.f32 %v1647, %v1836
        %v1896 = vadd.f32 %v1648, %v1838
        %v1897 = vadd.f32 %v1649, %v1841
        %v1898 = vadd.f32 %v1650, %v1843
        %v1899 = vadd.f32 %v1651, %v1846
        %v1900 = vadd.f32 %v1652, %v1848
        %v1901 = vadd.f32 %v1653, %v1851
        %v1902 = vadd.f32 %v1654, %v1853
        %v1903 = vadd.f32 %v1655, %v1856
        %v1904 = vadd.f32 %v1656, %v1858
        %v1905 = vadd.f32 %v1657, %v1861
        %v1906 = vadd.f32 %v1658, %v1863
        %v1907 = vadd.f32 %v1659, %v1866
        %v1908 = vadd.f32 %v1660, %v1868
        %v1909 = vadd.f32 %v1661, %v1871
        %v1910 = vadd.f32 %v1662, %v1873
        %v1911 = vld [vmem:[%s236 + $0x25] sm:$0xff]
        %v1912 = vld [vmem:[%s236 + $0x2d] sm:$0xff]
        %v1913 = vld [vmem:[%s236 + $0x35] sm:$0xff]
        %v1914 = vld [vmem:[%s236 + $0x3d] sm:$0xff]
        %v1915 = vld [vmem:[%s236 + $0x45] sm:$0xff]
        %v1916 = vld [vmem:[%s236 + $0x4d] sm:$0xff]
        %v1917 = vld [vmem:[%s236 + $0x55] sm:$0xff]
        %v1918 = vld [vmem:[%s236 + $0x5d] sm:$0xff]
        %v1919 = vld [vmem:[%s236 + $0x65] sm:$0xff]
        %v1920 = vld [vmem:[%s236 + $0x6d] sm:$0xff]
        %v1921 = vld [vmem:[%s236 + $0x75] sm:$0xff]
        %v1922 = vld [vmem:[%s236 + $0x7d] sm:$0xff]
        %v1923 = vld [vmem:[%s236 + $0x85] sm:$0xff]
        %v1924 = vld [vmem:[%s236 + $0x8d] sm:$0xff]
        %v1925 = vld [vmem:[%s236 + $0x95] sm:$0xff]
        %v1926 = vld [vmem:[%s236 + $0x9d] sm:$0xff]
        %v1927 = vld [vmem:[%s236 + $0xa5] sm:$0xff]
        %v1928 = vld [vmem:[%s236 + $0xad] sm:$0xff]
        %v1929 = vld [vmem:[%s236 + $0xb5] sm:$0xff]
        %v1930 = vld [vmem:[%s236 + $0xbd] sm:$0xff]
        %v1931 = vld [vmem:[%s236 + $0xc5] sm:$0xff]
        %v1932 = vld [vmem:[%s236 + $0xcd] sm:$0xff]
        %v1933 = vld [vmem:[%s236 + $0xd5] sm:$0xff]
        %v1934 = vld [vmem:[%s236 + $0xdd] sm:$0xff]
        %v1935 = vld [vmem:[%s236 + $0xe5] sm:$0xff]
        %v1936 = vld [vmem:[%s236 + $0xed] sm:$0xff]
        %v1937 = vld [vmem:[%s236 + $0xf5] sm:$0xff]
        %v1938 = vld [vmem:[%s236 + $0xfd] sm:$0xff]
        %v1939 = vld [vmem:[%s236 + $0x105] sm:$0xff]
        %v1940 = vld [vmem:[%s236 + $0x10d] sm:$0xff]
        %v1941 = vld [vmem:[%s236 + $0x115] sm:$0xff]
        %v1942 = vld [vmem:[%s236 + $0x11d] sm:$0xff]
        %v1943 = vld [vmem:[%s236 + $0x125] sm:$0xff]
        %v1944 = vld [vmem:[%s236 + $0x12d] sm:$0xff]
        %v1945 = vld [vmem:[%s236 + $0x135] sm:$0xff]
        %v1946 = vld [vmem:[%s236 + $0x13d] sm:$0x3f]
        %v1947 = vpack.c.bf16 %v1912, %v1911
        %v1948 = vpack.c.bf16 %v1914, %v1913
        %v1949 = vpack.c.bf16 %v1916, %v1915
        %v1950 = vpack.c.bf16 %v1918, %v1917
        %v1951 = vpack.c.bf16 %v1920, %v1919
        %v1952 = vpack.c.bf16 %v1922, %v1921
        %v1953 = vpack.c.bf16 %v1924, %v1923
        %v1954 = vpack.c.bf16 %v1926, %v1925
        %v1955 = vpack.c.bf16 %v1928, %v1927
        %v1956 = vpack.c.bf16 %v1930, %v1929
        %v1957 = vpack.c.bf16 %v1932, %v1931
        %v1958 = vpack.c.bf16 %v1934, %v1933
        %v1959 = vpack.c.bf16 %v1936, %v1935
        %v1960 = vpack.c.bf16 %v1938, %v1937
        %v1961 = vpack.c.bf16 %v1940, %v1939
        %v1962 = vpack.c.bf16 %v1942, %v1941
        %v1963 = vpack.c.bf16 %v1944, %v1943
        %v1964 = vpack.c.bf16 %v1946, %v1945
        %s1965 = scalar_lea.vmem %s1, 14
        %v1966 = vld [vmem:[%s1965] sm:$0x3]
        %v1968 = vsel %vm354, %v1947, 0
        %v1971 = vsel %vm354, %v1948, 0
        %v1974 = vsel %vm354, %v1949, 0
        %v1977 = vsel %vm354, %v1950, 0
        %v1980 = vsel %vm354, %v1951, 0
        %v1983 = vsel %vm354, %v1952, 0
        %v1986 = vsel %vm354, %v1953, 0
        %v1989 = vsel %vm354, %v1954, 0
        %v1992 = vsel %vm354, %v1955, 0
        %v1995 = vsel %vm354, %v1956, 0
        %v1998 = vsel %vm354, %v1957, 0
        %v2001 = vsel %vm354, %v1958, 0
        %v2004 = vsel %vm354, %v1959, 0
        %v2007 = vsel %vm354, %v1960, 0
        %v2010 = vsel %vm354, %v1961, 0
        %v2013 = vsel %vm354, %v1962, 0
        %v2016 = vsel %vm354, %v1963, 0
        %v2019 = vsel %vm354, %v1964, 0
        %v2022 = vand.u32 %v1966, %v412
        %2024 = vmatpush.bf16.msra.mxu0 0
        %2025 = vmatpush.bf16.msra.mxu0 0
        %2026 = vmatpush.bf16.msra.mxu0 0
        %2027 = vmatpush.bf16.msra.mxu0 0
        %2028 = vmatpush.bf16.msra.mxu0 0
        %2029 = vmatpush.bf16.msra.mxu0 0
        %2030 = vmatpush.bf16.msra.mxu0 0
        %2031 = vmatpush.bf16.msra.mxu0 %v2022
        %2032 = vmatmul.bf16.gmra.mxu0 %v1968
        %v2033 = vpop.f32.mrf.mxu0
        %v2034 = vadd.f32 0.0, %v2033
        %v2035 = vpop.f32.mrf.mxu0
        %v2036 = vadd.f32 0.0, %v2035
        %2037 = vmatmul.bf16.gmra.mxu0 %v1971
        %v2038 = vpop.f32.mrf.mxu0
        %v2039 = vadd.f32 0.0, %v2038
        %v2040 = vpop.f32.mrf.mxu0
        %v2041 = vadd.f32 0.0, %v2040
        %2042 = vmatmul.bf16.gmra.mxu0 %v1974
        %v2043 = vpop.f32.mrf.mxu0
        %v2044 = vadd.f32 0.0, %v2043
        %v2045 = vpop.f32.mrf.mxu0
        %v2046 = vadd.f32 0.0, %v2045
        %2047 = vmatmul.bf16.gmra.mxu0 %v1977
        %v2048 = vpop.f32.mrf.mxu0
        %v2049 = vadd.f32 0.0, %v2048
        %v2050 = vpop.f32.mrf.mxu0
        %v2051 = vadd.f32 0.0, %v2050
        %2052 = vmatmul.bf16.gmra.mxu0 %v1980
        %v2053 = vpop.f32.mrf.mxu0
        %v2054 = vadd.f32 0.0, %v2053
        %v2055 = vpop.f32.mrf.mxu0
        %v2056 = vadd.f32 0.0, %v2055
        %2057 = vmatmul.bf16.gmra.mxu0 %v1983
        %v2058 = vpop.f32.mrf.mxu0
        %v2059 = vadd.f32 0.0, %v2058
        %v2060 = vpop.f32.mrf.mxu0
        %v2061 = vadd.f32 0.0, %v2060
        %2062 = vmatmul.bf16.gmra.mxu0 %v1986
        %v2063 = vpop.f32.mrf.mxu0
        %v2064 = vadd.f32 0.0, %v2063
        %v2065 = vpop.f32.mrf.mxu0
        %v2066 = vadd.f32 0.0, %v2065
        %2067 = vmatmul.bf16.gmra.mxu0 %v1989
        %v2068 = vpop.f32.mrf.mxu0
        %v2069 = vadd.f32 0.0, %v2068
        %v2070 = vpop.f32.mrf.mxu0
        %v2071 = vadd.f32 0.0, %v2070
        %2072 = vmatmul.bf16.gmra.mxu0 %v1992
        %v2073 = vpop.f32.mrf.mxu0
        %v2074 = vadd.f32 0.0, %v2073
        %v2075 = vpop.f32.mrf.mxu0
        %v2076 = vadd.f32 0.0, %v2075
        %2077 = vmatmul.bf16.gmra.mxu0 %v1995
        %v2078 = vpop.f32.mrf.mxu0
        %v2079 = vadd.f32 0.0, %v2078
        %v2080 = vpop.f32.mrf.mxu0
        %v2081 = vadd.f32 0.0, %v2080
        %2082 = vmatmul.bf16.gmra.mxu0 %v1998
        %v2083 = vpop.f32.mrf.mxu0
        %v2084 = vadd.f32 0.0, %v2083
        %v2085 = vpop.f32.mrf.mxu0
        %v2086 = vadd.f32 0.0, %v2085
        %2087 = vmatmul.bf16.gmra.mxu0 %v2001
        %v2088 = vpop.f32.mrf.mxu0
        %v2089 = vadd.f32 0.0, %v2088
        %v2090 = vpop.f32.mrf.mxu0
        %v2091 = vadd.f32 0.0, %v2090
        %2092 = vmatmul.bf16.gmra.mxu0 %v2004
        %v2093 = vpop.f32.mrf.mxu0
        %v2094 = vadd.f32 0.0, %v2093
        %v2095 = vpop.f32.mrf.mxu0
        %v2096 = vadd.f32 0.0, %v2095
        %2097 = vmatmul.bf16.gmra.mxu0 %v2007
        %v2098 = vpop.f32.mrf.mxu0
        %v2099 = vadd.f32 0.0, %v2098
        %v2100 = vpop.f32.mrf.mxu0
        %v2101 = vadd.f32 0.0, %v2100
        %2102 = vmatmul.bf16.gmra.mxu0 %v2010
        %v2103 = vpop.f32.mrf.mxu0
        %v2104 = vadd.f32 0.0, %v2103
        %v2105 = vpop.f32.mrf.mxu0
        %v2106 = vadd.f32 0.0, %v2105
        %2107 = vmatmul.bf16.gmra.mxu0 %v2013
        %v2108 = vpop.f32.mrf.mxu0
        %v2109 = vadd.f32 0.0, %v2108
        %v2110 = vpop.f32.mrf.mxu0
        %v2111 = vadd.f32 0.0, %v2110
        %2112 = vmatmul.bf16.gmra.mxu0 %v2016
        %v2113 = vpop.f32.mrf.mxu0
        %v2114 = vadd.f32 0.0, %v2113
        %v2115 = vpop.f32.mrf.mxu0
        %v2116 = vadd.f32 0.0, %v2115
        %2117 = vmatmul.bf16.gmra.mxu0 %v2019
        %v2118 = vpop.f32.mrf.mxu0
        %v2119 = vadd.f32 0.0, %v2118
        %v2120 = vpop.f32.mrf.mxu0
        %v2121 = vadd.f32 0.0, %v2120
        %2122 = vdwg.mxu0
        %v2123 = vadd.f32 %v1875, %v2034
        %v2124 = vadd.f32 %v1876, %v2036
        %v2125 = vadd.f32 %v1877, %v2039
        %v2126 = vadd.f32 %v1878, %v2041
        %v2127 = vadd.f32 %v1879, %v2044
        %v2128 = vadd.f32 %v1880, %v2046
        %v2129 = vadd.f32 %v1881, %v2049
        %v2130 = vadd.f32 %v1882, %v2051
        %v2131 = vadd.f32 %v1883, %v2054
        %v2132 = vadd.f32 %v1884, %v2056
        %v2133 = vadd.f32 %v1885, %v2059
        %v2134 = vadd.f32 %v1886, %v2061
        %v2135 = vadd.f32 %v1887, %v2064
        %v2136 = vadd.f32 %v1888, %v2066
        %v2137 = vadd.f32 %v1889, %v2069
        %v2138 = vadd.f32 %v1890, %v2071
        %v2139 = vadd.f32 %v1891, %v2074
        %v2140 = vadd.f32 %v1892, %v2076
        %v2141 = vadd.f32 %v1893, %v2079
        %v2142 = vadd.f32 %v1894, %v2081
        %v2143 = vadd.f32 %v1895, %v2084
        %v2144 = vadd.f32 %v1896, %v2086
        %v2145 = vadd.f32 %v1897, %v2089
        %v2146 = vadd.f32 %v1898, %v2091
        %v2147 = vadd.f32 %v1899, %v2094
        %v2148 = vadd.f32 %v1900, %v2096
        %v2149 = vadd.f32 %v1901, %v2099
        %v2150 = vadd.f32 %v1902, %v2101
        %v2151 = vadd.f32 %v1903, %v2104
        %v2152 = vadd.f32 %v1904, %v2106
        %v2153 = vadd.f32 %v1905, %v2109
        %v2154 = vadd.f32 %v1906, %v2111
        %v2155 = vadd.f32 %v1907, %v2114
        %v2156 = vadd.f32 %v1908, %v2116
        %v2157 = vadd.f32 %v1909, %v2119
        %v2158 = vadd.f32 %v1910, %v2121
        %v2159 = vld [vmem:[%s236 + $0x26] sm:$0xff]
        %v2160 = vld [vmem:[%s236 + $0x2e] sm:$0xff]
        %v2161 = vld [vmem:[%s236 + $0x36] sm:$0xff]
        %v2162 = vld [vmem:[%s236 + $0x3e] sm:$0xff]
        %v2163 = vld [vmem:[%s236 + $0x46] sm:$0xff]
        %v2164 = vld [vmem:[%s236 + $0x4e] sm:$0xff]
        %v2165 = vld [vmem:[%s236 + $0x56] sm:$0xff]
        %v2166 = vld [vmem:[%s236 + $0x5e] sm:$0xff]
        %v2167 = vld [vmem:[%s236 + $0x66] sm:$0xff]
        %v2168 = vld [vmem:[%s236 + $0x6e] sm:$0xff]
        %v2169 = vld [vmem:[%s236 + $0x76] sm:$0xff]
        %v2170 = vld [vmem:[%s236 + $0x7e] sm:$0xff]
        %v2171 = vld [vmem:[%s236 + $0x86] sm:$0xff]
        %v2172 = vld [vmem:[%s236 + $0x8e] sm:$0xff]
        %v2173 = vld [vmem:[%s236 + $0x96] sm:$0xff]
        %v2174 = vld [vmem:[%s236 + $0x9e] sm:$0xff]
        %v2175 = vld [vmem:[%s236 + $0xa6] sm:$0xff]
        %v2176 = vld [vmem:[%s236 + $0xae] sm:$0xff]
        %v2177 = vld [vmem:[%s236 + $0xb6] sm:$0xff]
        %v2178 = vld [vmem:[%s236 + $0xbe] sm:$0xff]
        %v2179 = vld [vmem:[%s236 + $0xc6] sm:$0xff]
        %v2180 = vld [vmem:[%s236 + $0xce] sm:$0xff]
        %v2181 = vld [vmem:[%s236 + $0xd6] sm:$0xff]
        %v2182 = vld [vmem:[%s236 + $0xde] sm:$0xff]
        %v2183 = vld [vmem:[%s236 + $0xe6] sm:$0xff]
        %v2184 = vld [vmem:[%s236 + $0xee] sm:$0xff]
        %v2185 = vld [vmem:[%s236 + $0xf6] sm:$0xff]
        %v2186 = vld [vmem:[%s236 + $0xfe] sm:$0xff]
        %v2187 = vld [vmem:[%s236 + $0x106] sm:$0xff]
        %v2188 = vld [vmem:[%s236 + $0x10e] sm:$0xff]
        %v2189 = vld [vmem:[%s236 + $0x116] sm:$0xff]
        %v2190 = vld [vmem:[%s236 + $0x11e] sm:$0xff]
        %v2191 = vld [vmem:[%s236 + $0x126] sm:$0xff]
        %v2192 = vld [vmem:[%s236 + $0x12e] sm:$0xff]
        %v2193 = vld [vmem:[%s236 + $0x136] sm:$0xff]
        %v2194 = vld [vmem:[%s236 + $0x13e] sm:$0x3f]
        %v2195 = vpack.c.bf16 %v2160, %v2159
        %v2196 = vpack.c.bf16 %v2162, %v2161
        %v2197 = vpack.c.bf16 %v2164, %v2163
        %v2198 = vpack.c.bf16 %v2166, %v2165
        %v2199 = vpack.c.bf16 %v2168, %v2167
        %v2200 = vpack.c.bf16 %v2170, %v2169
        %v2201 = vpack.c.bf16 %v2172, %v2171
        %v2202 = vpack.c.bf16 %v2174, %v2173
        %v2203 = vpack.c.bf16 %v2176, %v2175
        %v2204 = vpack.c.bf16 %v2178, %v2177
        %v2205 = vpack.c.bf16 %v2180, %v2179
        %v2206 = vpack.c.bf16 %v2182, %v2181
        %v2207 = vpack.c.bf16 %v2184, %v2183
        %v2208 = vpack.c.bf16 %v2186, %v2185
        %v2209 = vpack.c.bf16 %v2188, %v2187
        %v2210 = vpack.c.bf16 %v2190, %v2189
        %v2211 = vpack.c.bf16 %v2192, %v2191
        %v2212 = vpack.c.bf16 %v2194, %v2193
        %s2213 = scalar_lea.vmem %s1, 16
        %v2214 = vld [vmem:[%s2213] sm:$0x3]
        %v2216 = vsel %vm354, %v2195, 0
        %v2219 = vsel %vm354, %v2196, 0
        %v2222 = vsel %vm354, %v2197, 0
        %v2225 = vsel %vm354, %v2198, 0
        %v2228 = vsel %vm354, %v2199, 0
        %v2231 = vsel %vm354, %v2200, 0
        %v2234 = vsel %vm354, %v2201, 0
        %v2237 = vsel %vm354, %v2202, 0
        %v2240 = vsel %vm354, %v2203, 0
        %v2243 = vsel %vm354, %v2204, 0
        %v2246 = vsel %vm354, %v2205, 0
        %v2249 = vsel %vm354, %v2206, 0
        %v2252 = vsel %vm354, %v2207, 0
        %v2255 = vsel %vm354, %v2208, 0
        %v2258 = vsel %vm354, %v2209, 0
        %v2261 = vsel %vm354, %v2210, 0
        %v2264 = vsel %vm354, %v2211, 0
        %v2267 = vsel %vm354, %v2212, 0
        %v2270 = vand.u32 %v2214, %v412
        %2272 = vmatpush.bf16.msra.mxu0 0
        %2273 = vmatpush.bf16.msra.mxu0 0
        %2274 = vmatpush.bf16.msra.mxu0 0
        %2275 = vmatpush.bf16.msra.mxu0 0
        %2276 = vmatpush.bf16.msra.mxu0 0
        %2277 = vmatpush.bf16.msra.mxu0 0
        %2278 = vmatpush.bf16.msra.mxu0 0
        %2279 = vmatpush.bf16.msra.mxu0 %v2270
        %2280 = vmatmul.bf16.gmra.mxu0 %v2216
        %v2281 = vpop.f32.mrf.mxu0
        %v2282 = vadd.f32 0.0, %v2281
        %v2283 = vpop.f32.mrf.mxu0
        %v2284 = vadd.f32 0.0, %v2283
        %2285 = vmatmul.bf16.gmra.mxu0 %v2219
        %v2286 = vpop.f32.mrf.mxu0
        %v2287 = vadd.f32 0.0, %v2286
        %v2288 = vpop.f32.mrf.mxu0
        %v2289 = vadd.f32 0.0, %v2288
        %2290 = vmatmul.bf16.gmra.mxu0 %v2222
        %v2291 = vpop.f32.mrf.mxu0
        %v2292 = vadd.f32 0.0, %v2291
        %v2293 = vpop.f32.mrf.mxu0
        %v2294 = vadd.f32 0.0, %v2293
        %2295 = vmatmul.bf16.gmra.mxu0 %v2225
        %v2296 = vpop.f32.mrf.mxu0
        %v2297 = vadd.f32 0.0, %v2296
        %v2298 = vpop.f32.mrf.mxu0
        %v2299 = vadd.f32 0.0, %v2298
        %2300 = vmatmul.bf16.gmra.mxu0 %v2228
        %v2301 = vpop.f32.mrf.mxu0
        %v2302 = vadd.f32 0.0, %v2301
        %v2303 = vpop.f32.mrf.mxu0
        %v2304 = vadd.f32 0.0, %v2303
        %2305 = vmatmul.bf16.gmra.mxu0 %v2231
        %v2306 = vpop.f32.mrf.mxu0
        %v2307 = vadd.f32 0.0, %v2306
        %v2308 = vpop.f32.mrf.mxu0
        %v2309 = vadd.f32 0.0, %v2308
        %2310 = vmatmul.bf16.gmra.mxu0 %v2234
        %v2311 = vpop.f32.mrf.mxu0
        %v2312 = vadd.f32 0.0, %v2311
        %v2313 = vpop.f32.mrf.mxu0
        %v2314 = vadd.f32 0.0, %v2313
        %2315 = vmatmul.bf16.gmra.mxu0 %v2237
        %v2316 = vpop.f32.mrf.mxu0
        %v2317 = vadd.f32 0.0, %v2316
        %v2318 = vpop.f32.mrf.mxu0
        %v2319 = vadd.f32 0.0, %v2318
        %2320 = vmatmul.bf16.gmra.mxu0 %v2240
        %v2321 = vpop.f32.mrf.mxu0
        %v2322 = vadd.f32 0.0, %v2321
        %v2323 = vpop.f32.mrf.mxu0
        %v2324 = vadd.f32 0.0, %v2323
        %2325 = vmatmul.bf16.gmra.mxu0 %v2243
        %v2326 = vpop.f32.mrf.mxu0
        %v2327 = vadd.f32 0.0, %v2326
        %v2328 = vpop.f32.mrf.mxu0
        %v2329 = vadd.f32 0.0, %v2328
        %2330 = vmatmul.bf16.gmra.mxu0 %v2246
        %v2331 = vpop.f32.mrf.mxu0
        %v2332 = vadd.f32 0.0, %v2331
        %v2333 = vpop.f32.mrf.mxu0
        %v2334 = vadd.f32 0.0, %v2333
        %2335 = vmatmul.bf16.gmra.mxu0 %v2249
        %v2336 = vpop.f32.mrf.mxu0
        %v2337 = vadd.f32 0.0, %v2336
        %v2338 = vpop.f32.mrf.mxu0
        %v2339 = vadd.f32 0.0, %v2338
        %2340 = vmatmul.bf16.gmra.mxu0 %v2252
        %v2341 = vpop.f32.mrf.mxu0
        %v2342 = vadd.f32 0.0, %v2341
        %v2343 = vpop.f32.mrf.mxu0
        %v2344 = vadd.f32 0.0, %v2343
        %2345 = vmatmul.bf16.gmra.mxu0 %v2255
        %v2346 = vpop.f32.mrf.mxu0
        %v2347 = vadd.f32 0.0, %v2346
        %v2348 = vpop.f32.mrf.mxu0
        %v2349 = vadd.f32 0.0, %v2348
        %2350 = vmatmul.bf16.gmra.mxu0 %v2258
        %v2351 = vpop.f32.mrf.mxu0
        %v2352 = vadd.f32 0.0, %v2351
        %v2353 = vpop.f32.mrf.mxu0
        %v2354 = vadd.f32 0.0, %v2353
        %2355 = vmatmul.bf16.gmra.mxu0 %v2261
        %v2356 = vpop.f32.mrf.mxu0
        %v2357 = vadd.f32 0.0, %v2356
        %v2358 = vpop.f32.mrf.mxu0
        %v2359 = vadd.f32 0.0, %v2358
        %2360 = vmatmul.bf16.gmra.mxu0 %v2264
        %v2361 = vpop.f32.mrf.mxu0
        %v2362 = vadd.f32 0.0, %v2361
        %v2363 = vpop.f32.mrf.mxu0
        %v2364 = vadd.f32 0.0, %v2363
        %2365 = vmatmul.bf16.gmra.mxu0 %v2267
        %v2366 = vpop.f32.mrf.mxu0
        %v2367 = vadd.f32 0.0, %v2366
        %v2368 = vpop.f32.mrf.mxu0
        %v2369 = vadd.f32 0.0, %v2368
        %2370 = vdwg.mxu0
        %v2371 = vadd.f32 %v2123, %v2282
        %v2372 = vadd.f32 %v2124, %v2284
        %v2373 = vadd.f32 %v2125, %v2287
        %v2374 = vadd.f32 %v2126, %v2289
        %v2375 = vadd.f32 %v2127, %v2292
        %v2376 = vadd.f32 %v2128, %v2294
        %v2377 = vadd.f32 %v2129, %v2297
        %v2378 = vadd.f32 %v2130, %v2299
        %v2379 = vadd.f32 %v2131, %v2302
        %v2380 = vadd.f32 %v2132, %v2304
        %v2381 = vadd.f32 %v2133, %v2307
        %v2382 = vadd.f32 %v2134, %v2309
        %v2383 = vadd.f32 %v2135, %v2312
        %v2384 = vadd.f32 %v2136, %v2314
        %v2385 = vadd.f32 %v2137, %v2317
        %v2386 = vadd.f32 %v2138, %v2319
        %v2387 = vadd.f32 %v2139, %v2322
        %v2388 = vadd.f32 %v2140, %v2324
        %v2389 = vadd.f32 %v2141, %v2327
        %v2390 = vadd.f32 %v2142, %v2329
        %v2391 = vadd.f32 %v2143, %v2332
        %v2392 = vadd.f32 %v2144, %v2334
        %v2393 = vadd.f32 %v2145, %v2337
        %v2394 = vadd.f32 %v2146, %v2339
        %v2395 = vadd.f32 %v2147, %v2342
        %v2396 = vadd.f32 %v2148, %v2344
        %v2397 = vadd.f32 %v2149, %v2347
        %v2398 = vadd.f32 %v2150, %v2349
        %v2399 = vadd.f32 %v2151, %v2352
        %v2400 = vadd.f32 %v2152, %v2354
        %v2401 = vadd.f32 %v2153, %v2357
        %v2402 = vadd.f32 %v2154, %v2359
        %v2403 = vadd.f32 %v2155, %v2362
        %v2404 = vadd.f32 %v2156, %v2364
        %v2405 = vadd.f32 %v2157, %v2367
        %v2406 = vadd.f32 %v2158, %v2369
        %v2407 = vld [vmem:[%s2] sm:$0x1]
        %v2409 = vperm.slane %v2407, 0
        %v2411 = vmul.f32 %v2371, %v2409
        %v2412 = vmul.f32 %v2372, %v2409
        %v2413 = vmul.f32 %v2373, %v2409
        %v2414 = vmul.f32 %v2374, %v2409
        %v2415 = vmul.f32 %v2375, %v2409
        %v2416 = vmul.f32 %v2376, %v2409
        %v2417 = vmul.f32 %v2377, %v2409
        %v2418 = vmul.f32 %v2378, %v2409
        %v2419 = vmul.f32 %v2379, %v2409
        %v2420 = vmul.f32 %v2380, %v2409
        %v2421 = vmul.f32 %v2381, %v2409
        %v2422 = vmul.f32 %v2382, %v2409
        %v2423 = vmul.f32 %v2383, %v2409
        %v2424 = vmul.f32 %v2384, %v2409
        %v2425 = vmul.f32 %v2385, %v2409
        %v2426 = vmul.f32 %v2386, %v2409
        %v2427 = vmul.f32 %v2387, %v2409
        %v2428 = vmul.f32 %v2388, %v2409
        %v2429 = vmul.f32 %v2389, %v2409
        %v2430 = vmul.f32 %v2390, %v2409
        %v2431 = vmul.f32 %v2391, %v2409
        %v2432 = vmul.f32 %v2392, %v2409
        %v2433 = vmul.f32 %v2393, %v2409
        %v2434 = vmul.f32 %v2394, %v2409
        %v2435 = vmul.f32 %v2395, %v2409
        %v2436 = vmul.f32 %v2396, %v2409
        %v2437 = vmul.f32 %v2397, %v2409
        %v2438 = vmul.f32 %v2398, %v2409
        %v2439 = vmul.f32 %v2399, %v2409
        %v2440 = vmul.f32 %v2400, %v2409
        %v2441 = vmul.f32 %v2401, %v2409
        %v2442 = vmul.f32 %v2402, %v2409
        %v2443 = vmul.f32 %v2403, %v2409
        %v2444 = vmul.f32 %v2404, %v2409
        %v2445 = vmul.f32 %v2405, %v2409
        %v2446 = vmul.f32 %v2406, %v2409
        %v2447 = vld [vmem:[%s3] sm:$0x1]
        %v2449 = vperm.slane %v2447, 0
        %v2451 = vadd.f32 %v2411, %v2449
        %v2452 = vadd.f32 %v2412, %v2449
        %v2453 = vadd.f32 %v2413, %v2449
        %v2454 = vadd.f32 %v2414, %v2449
        %v2455 = vadd.f32 %v2415, %v2449
        %v2456 = vadd.f32 %v2416, %v2449
        %v2457 = vadd.f32 %v2417, %v2449
        %v2458 = vadd.f32 %v2418, %v2449
        %v2459 = vadd.f32 %v2419, %v2449
        %v2460 = vadd.f32 %v2420, %v2449
        %v2461 = vadd.f32 %v2421, %v2449
        %v2462 = vadd.f32 %v2422, %v2449
        %v2463 = vadd.f32 %v2423, %v2449
        %v2464 = vadd.f32 %v2424, %v2449
        %v2465 = vadd.f32 %v2425, %v2449
        %v2466 = vadd.f32 %v2426, %v2449
        %v2467 = vadd.f32 %v2427, %v2449
        %v2468 = vadd.f32 %v2428, %v2449
        %v2469 = vadd.f32 %v2429, %v2449
        %v2470 = vadd.f32 %v2430, %v2449
        %v2471 = vadd.f32 %v2431, %v2449
        %v2472 = vadd.f32 %v2432, %v2449
        %v2473 = vadd.f32 %v2433, %v2449
        %v2474 = vadd.f32 %v2434, %v2449
        %v2475 = vadd.f32 %v2435, %v2449
        %v2476 = vadd.f32 %v2436, %v2449
        %v2477 = vadd.f32 %v2437, %v2449
        %v2478 = vadd.f32 %v2438, %v2449
        %v2479 = vadd.f32 %v2439, %v2449
        %v2480 = vadd.f32 %v2440, %v2449
        %v2481 = vadd.f32 %v2441, %v2449
        %v2482 = vadd.f32 %v2442, %v2449
        %v2483 = vadd.f32 %v2443, %v2449
        %v2484 = vadd.f32 %v2444, %v2449
        %v2485 = vadd.f32 %v2445, %v2449
        %v2486 = vadd.f32 %v2446, %v2449
        %v2487 = vmax.f32 %v2451, 0.0
        %v2488 = vmax.f32 %v2452, 0.0
        %v2489 = vmax.f32 %v2453, 0.0
        %v2490 = vmax.f32 %v2454, 0.0
        %v2491 = vmax.f32 %v2455, 0.0
        %v2492 = vmax.f32 %v2456, 0.0
        %v2493 = vmax.f32 %v2457, 0.0
        %v2494 = vmax.f32 %v2458, 0.0
        %v2495 = vmax.f32 %v2459, 0.0
        %v2496 = vmax.f32 %v2460, 0.0
        %v2497 = vmax.f32 %v2461, 0.0
        %v2498 = vmax.f32 %v2462, 0.0
        %v2499 = vmax.f32 %v2463, 0.0
        %v2500 = vmax.f32 %v2464, 0.0
        %v2501 = vmax.f32 %v2465, 0.0
        %v2502 = vmax.f32 %v2466, 0.0
        %v2503 = vmax.f32 %v2467, 0.0
        %v2504 = vmax.f32 %v2468, 0.0
        %v2505 = vmax.f32 %v2469, 0.0
        %v2506 = vmax.f32 %v2470, 0.0
        %v2507 = vmax.f32 %v2471, 0.0
        %v2508 = vmax.f32 %v2472, 0.0
        %v2509 = vmax.f32 %v2473, 0.0
        %v2510 = vmax.f32 %v2474, 0.0
        %v2511 = vmax.f32 %v2475, 0.0
        %v2512 = vmax.f32 %v2476, 0.0
        %v2513 = vmax.f32 %v2477, 0.0
        %v2514 = vmax.f32 %v2478, 0.0
        %v2515 = vmax.f32 %v2479, 0.0
        %v2516 = vmax.f32 %v2480, 0.0
        %v2517 = vmax.f32 %v2481, 0.0
        %v2518 = vmax.f32 %v2482, 0.0
        %v2519 = vmax.f32 %v2483, 0.0
        %v2520 = vmax.f32 %v2484, 0.0
        %v2521 = vmax.f32 %v2485, 0.0
        %v2522 = vmax.f32 %v2486, 0.0
        %vm2559 = vcmask 1046528
        %v2560 = vrot.slane %v2487, 1
        %v2561 = vrot.slane %v2488, 1
        %v2562 = vsel %vm2559, %v2560, %v2561
        %v2563 = vrot.slane %v2489, 1
        %v2564 = vsel %vm2559, %v2561, %v2563
        %v2565 = vrot.slane %v2490, 1
        %v2566 = vsel %vm2559, %v2563, %v2565
        %v2567 = vrot.slane %v2491, 1
        %v2568 = vsel %vm2559, %v2565, %v2567
        %v2569 = vrot.slane %v2492, 1
        %v2570 = vsel %vm2559, %v2567, %v2569
        %v2571 = vrot.slane %v2493, 1
        %v2572 = vsel %vm2559, %v2569, %v2571
        %v2573 = vrot.slane %v2494, 1
        %v2574 = vsel %vm2559, %v2571, %v2573
        %v2575 = vrot.slane %v2495, 1
        %v2576 = vsel %vm2559, %v2573, %v2575
        %v2577 = vrot.slane %v2496, 1
        %v2578 = vsel %vm2559, %v2575, %v2577
        %v2579 = vrot.slane %v2497, 1
        %v2580 = vsel %vm2559, %v2577, %v2579
        %v2581 = vrot.slane %v2498, 1
        %v2582 = vsel %vm2559, %v2579, %v2581
        %v2583 = vrot.slane %v2499, 1
        %v2584 = vsel %vm2559, %v2581, %v2583
        %v2585 = vrot.slane %v2500, 1
        %v2586 = vsel %vm2559, %v2583, %v2585
        %v2587 = vrot.slane %v2501, 1
        %v2588 = vsel %vm2559, %v2585, %v2587
        %v2589 = vrot.slane %v2502, 1
        %v2590 = vsel %vm2559, %v2587, %v2589
        %v2591 = vrot.slane %v2503, 1
        %v2592 = vsel %vm2559, %v2589, %v2591
        %v2593 = vrot.slane %v2504, 1
        %v2594 = vsel %vm2559, %v2591, %v2593
        %v2595 = vrot.slane %v2505, 1
        %v2596 = vsel %vm2559, %v2593, %v2595
        %v2597 = vrot.slane %v2506, 1
        %v2598 = vsel %vm2559, %v2595, %v2597
        %v2599 = vrot.slane %v2507, 1
        %v2600 = vsel %vm2559, %v2597, %v2599
        %v2601 = vrot.slane %v2508, 1
        %v2602 = vsel %vm2559, %v2599, %v2601
        %v2603 = vrot.slane %v2509, 1
        %v2604 = vsel %vm2559, %v2601, %v2603
        %v2605 = vrot.slane %v2510, 1
        %v2606 = vsel %vm2559, %v2603, %v2605
        %v2607 = vrot.slane %v2511, 1
        %v2608 = vsel %vm2559, %v2605, %v2607
        %v2609 = vrot.slane %v2512, 1
        %v2610 = vsel %vm2559, %v2607, %v2609
        %v2611 = vrot.slane %v2513, 1
        %v2612 = vsel %vm2559, %v2609, %v2611
        %v2613 = vrot.slane %v2514, 1
        %v2614 = vsel %vm2559, %v2611, %v2613
        %v2615 = vrot.slane %v2515, 1
        %v2616 = vsel %vm2559, %v2613, %v2615
        %v2617 = vrot.slane %v2516, 1
        %v2618 = vsel %vm2559, %v2615, %v2617
        %v2619 = vrot.slane %v2517, 1
        %v2620 = vsel %vm2559, %v2617, %v2619
        %v2621 = vrot.slane %v2518, 1
        %v2622 = vsel %vm2559, %v2619, %v2621
        %v2623 = vrot.slane %v2519, 1
        %v2624 = vsel %vm2559, %v2621, %v2623
        %v2625 = vrot.slane %v2520, 1
        %v2626 = vsel %vm2559, %v2623, %v2625
        %v2627 = vrot.slane %v2521, 1
        %v2628 = vsel %vm2559, %v2625, %v2627
        %v2629 = vrot.slane %v2522, 1
        %v2630 = vsel %vm2559, %v2627, %v2629
        %v2667 = vmax.f32 %v2487, %v2562
        %v2668 = vmax.f32 %v2488, %v2564
        %v2669 = vmax.f32 %v2489, %v2566
        %v2670 = vmax.f32 %v2490, %v2568
        %v2671 = vmax.f32 %v2491, %v2570
        %v2672 = vmax.f32 %v2492, %v2572
        %v2673 = vmax.f32 %v2493, %v2574
        %v2674 = vmax.f32 %v2494, %v2576
        %v2675 = vmax.f32 %v2495, %v2578
        %v2676 = vmax.f32 %v2496, %v2580
        %v2677 = vmax.f32 %v2497, %v2582
        %v2678 = vmax.f32 %v2498, %v2584
        %v2679 = vmax.f32 %v2499, %v2586
        %v2680 = vmax.f32 %v2500, %v2588
        %v2681 = vmax.f32 %v2501, %v2590
        %v2682 = vmax.f32 %v2502, %v2592
        %v2683 = vmax.f32 %v2503, %v2594
        %v2684 = vmax.f32 %v2504, %v2596
        %v2685 = vmax.f32 %v2505, %v2598
        %v2686 = vmax.f32 %v2506, %v2600
        %v2687 = vmax.f32 %v2507, %v2602
        %v2688 = vmax.f32 %v2508, %v2604
        %v2689 = vmax.f32 %v2509, %v2606
        %v2690 = vmax.f32 %v2510, %v2608
        %v2691 = vmax.f32 %v2511, %v2610
        %v2692 = vmax.f32 %v2512, %v2612
        %v2693 = vmax.f32 %v2513, %v2614
        %v2694 = vmax.f32 %v2514, %v2616
        %v2695 = vmax.f32 %v2515, %v2618
        %v2696 = vmax.f32 %v2516, %v2620
        %v2697 = vmax.f32 %v2517, %v2622
        %v2698 = vmax.f32 %v2518, %v2624
        %v2699 = vmax.f32 %v2519, %v2626
        %v2700 = vmax.f32 %v2520, %v2628
        %v2701 = vmax.f32 %v2521, %v2630
        %v2702 = vmax.f32 %v2522, %v2629
        %vm2737 = vcmask 1045504
        %v2738 = vrot.slane %v2669, 2
        %v2739 = vrot.slane %v2670, 2
        %v2740 = vsel %vm2737, %v2738, %v2739
        %v2741 = vrot.slane %v2671, 2
        %v2742 = vsel %vm2737, %v2739, %v2741
        %v2743 = vrot.slane %v2672, 2
        %v2744 = vsel %vm2737, %v2741, %v2743
        %v2745 = vrot.slane %v2673, 2
        %v2746 = vsel %vm2737, %v2743, %v2745
        %v2747 = vrot.slane %v2674, 2
        %v2748 = vsel %vm2737, %v2745, %v2747
        %v2749 = vrot.slane %v2675, 2
        %v2750 = vsel %vm2737, %v2747, %v2749
        %v2751 = vrot.slane %v2676, 2
        %v2752 = vsel %vm2737, %v2749, %v2751
        %v2753 = vrot.slane %v2677, 2
        %v2754 = vsel %vm2737, %v2751, %v2753
        %v2755 = vrot.slane %v2678, 2
        %v2756 = vsel %vm2737, %v2753, %v2755
        %v2757 = vrot.slane %v2679, 2
        %v2758 = vsel %vm2737, %v2755, %v2757
        %v2759 = vrot.slane %v2680, 2
        %v2760 = vsel %vm2737, %v2757, %v2759
        %v2761 = vrot.slane %v2681, 2
        %v2762 = vsel %vm2737, %v2759, %v2761
        %v2763 = vrot.slane %v2682, 2
        %v2764 = vsel %vm2737, %v2761, %v2763
        %v2765 = vrot.slane %v2683, 2
        %v2766 = vsel %vm2737, %v2763, %v2765
        %v2767 = vrot.slane %v2684, 2
        %v2768 = vsel %vm2737, %v2765, %v2767
        %v2769 = vrot.slane %v2685, 2
        %v2770 = vsel %vm2737, %v2767, %v2769
        %v2771 = vrot.slane %v2686, 2
        %v2772 = vsel %vm2737, %v2769, %v2771
        %v2773 = vrot.slane %v2687, 2
        %v2774 = vsel %vm2737, %v2771, %v2773
        %v2775 = vrot.slane %v2688, 2
        %v2776 = vsel %vm2737, %v2773, %v2775
        %v2777 = vrot.slane %v2689, 2
        %v2778 = vsel %vm2737, %v2775, %v2777
        %v2779 = vrot.slane %v2690, 2
        %v2780 = vsel %vm2737, %v2777, %v2779
        %v2781 = vrot.slane %v2691, 2
        %v2782 = vsel %vm2737, %v2779, %v2781
        %v2783 = vrot.slane %v2692, 2
        %v2784 = vsel %vm2737, %v2781, %v2783
        %v2785 = vrot.slane %v2693, 2
        %v2786 = vsel %vm2737, %v2783, %v2785
        %v2787 = vrot.slane %v2694, 2
        %v2788 = vsel %vm2737, %v2785, %v2787
        %v2789 = vrot.slane %v2695, 2
        %v2790 = vsel %vm2737, %v2787, %v2789
        %v2791 = vrot.slane %v2696, 2
        %v2792 = vsel %vm2737, %v2789, %v2791
        %v2793 = vrot.slane %v2697, 2
        %v2794 = vsel %vm2737, %v2791, %v2793
        %v2795 = vrot.slane %v2698, 2
        %v2796 = vsel %vm2737, %v2793, %v2795
        %v2797 = vrot.slane %v2699, 2
        %v2798 = vsel %vm2737, %v2795, %v2797
        %v2799 = vrot.slane %v2700, 2
        %v2800 = vsel %vm2737, %v2797, %v2799
        %v2801 = vrot.slane %v2701, 2
        %v2802 = vsel %vm2737, %v2799, %v2801
        %v2803 = vrot.slane %v2702, 2
        %v2804 = vsel %vm2737, %v2801, %v2803
        %v2839 = vmax.f32 %v2667, %v2740
        %v2840 = vmax.f32 %v2668, %v2742
        %v2841 = vmax.f32 %v2669, %v2744
        %v2842 = vmax.f32 %v2670, %v2746
        %v2843 = vmax.f32 %v2671, %v2748
        %v2844 = vmax.f32 %v2672, %v2750
        %v2845 = vmax.f32 %v2673, %v2752
        %v2846 = vmax.f32 %v2674, %v2754
        %v2847 = vmax.f32 %v2675, %v2756
        %v2848 = vmax.f32 %v2676, %v2758
        %v2849 = vmax.f32 %v2677, %v2760
        %v2850 = vmax.f32 %v2678, %v2762
        %v2851 = vmax.f32 %v2679, %v2764
        %v2852 = vmax.f32 %v2680, %v2766
        %v2853 = vmax.f32 %v2681, %v2768
        %v2854 = vmax.f32 %v2682, %v2770
        %v2855 = vmax.f32 %v2683, %v2772
        %v2856 = vmax.f32 %v2684, %v2774
        %v2857 = vmax.f32 %v2685, %v2776
        %v2858 = vmax.f32 %v2686, %v2778
        %v2859 = vmax.f32 %v2687, %v2780
        %v2860 = vmax.f32 %v2688, %v2782
        %v2861 = vmax.f32 %v2689, %v2784
        %v2862 = vmax.f32 %v2690, %v2786
        %v2863 = vmax.f32 %v2691, %v2788
        %v2864 = vmax.f32 %v2692, %v2790
        %v2865 = vmax.f32 %v2693, %v2792
        %v2866 = vmax.f32 %v2694, %v2794
        %v2867 = vmax.f32 %v2695, %v2796
        %v2868 = vmax.f32 %v2696, %v2798
        %v2869 = vmax.f32 %v2697, %v2800
        %v2870 = vmax.f32 %v2698, %v2802
        %v2871 = vmax.f32 %v2699, %v2804
        %v2872 = vmax.f32 %v2700, %v2803
        %v2873 = vld [vmem:[#allocation2] sm:$0xff]
        %v2874 = vld [vmem:[#allocation2 + $0x8] sm:$0xff]
        %v2875 = vld [vmem:[#allocation2 + $0x10] sm:$0xff]
        %v2876 = vld [vmem:[#allocation2 + $0x18] sm:$0xff]
        %v2877 = vld [vmem:[#allocation2 + $0x20] sm:$0xff]
        %v2878 = vld [vmem:[#allocation2 + $0x28] sm:$0xff]
        %v2879 = vld [vmem:[#allocation2 + $0x30] sm:$0xff]
        %v2880 = vld [vmem:[#allocation2 + $0x38] sm:$0xff]
        %v2881 = vld [vmem:[#allocation2 + $0x40] sm:$0xff]
        %v2882 = vld [vmem:[#allocation2 + $0x48] sm:$0xff]
        %v2883 = vld [vmem:[#allocation2 + $0x50] sm:$0xff]
        %v2884 = vld [vmem:[#allocation2 + $0x58] sm:$0xff]
        %v2885 = vld [vmem:[#allocation2 + $0x60] sm:$0xff]
        %v2886 = vld [vmem:[#allocation2 + $0x68] sm:$0xff]
        %v2887 = vld [vmem:[#allocation2 + $0x70] sm:$0xff]
        %v2888 = vld [vmem:[#allocation2 + $0x78] sm:$0xff]
        %v2889 = vld [vmem:[#allocation2 + $0x80] sm:$0xff]
        %v2890 = vld [vmem:[#allocation2 + $0x88] sm:$0xff]
        %v2891 = vld [vmem:[#allocation2 + $0x90] sm:$0xff]
        %v2892 = vld [vmem:[#allocation2 + $0x98] sm:$0xff]
        %v2893 = vld [vmem:[#allocation2 + $0xa0] sm:$0xff]
        %v2894 = vld [vmem:[#allocation2 + $0xa8] sm:$0xff]
        %v2895 = vld [vmem:[#allocation2 + $0xb0] sm:$0xff]
        %v2896 = vld [vmem:[#allocation2 + $0xb8] sm:$0xff]
        %v2897 = vld [vmem:[#allocation2 + $0xc0] sm:$0xff]
        %v2898 = vld [vmem:[#allocation2 + $0xc8] sm:$0xff]
        %v2899 = vld [vmem:[#allocation2 + $0xd0] sm:$0xff]
        %v2900 = vld [vmem:[#allocation2 + $0xd8] sm:$0xff]
        %v2901 = vld [vmem:[#allocation2 + $0xe0] sm:$0xff]
        %v2902 = vld [vmem:[#allocation2 + $0xe8] sm:$0xff]
        %v2903 = vld [vmem:[#allocation2 + $0xf0] sm:$0xff]
        %v2904 = vld [vmem:[#allocation2 + $0xf8] sm:$0xff]
        %v2905 = vld [vmem:[#allocation2 + $0x100] sm:$0xff]
        %v2906 = vld [vmem:[#allocation2 + $0x108] sm:$0xff]
        %v2907 = vld [vmem:[#allocation2 + $0x110] sm:$0xff]
        %v2908 = vld [vmem:[#allocation2 + $0x118] sm:$0xff]
        %v2909 = vld [vmem:[#allocation2 + $0x120] sm:$0xf]
        %v2910 = vld [vmem:[#allocation2 + $0x128] sm:$0xf]
        %v2911 = vld [vmem:[#allocation2 + $0x130] sm:$0xf]
        %vm2912 = vcmask 89088
        %v2914 = vsel %vm2912, %v2875, 0
        %v2917 = vsel %vm2912, %v2878, 0
        %v2920 = vsel %vm2912, %v2881, 0
        %v2923 = vsel %vm2912, %v2884, 0
        %v2926 = vsel %vm2912, %v2887, 0
        %v2929 = vsel %vm2912, %v2890, 0
        %v2932 = vsel %vm2912, %v2893, 0
        %v2935 = vsel %vm2912, %v2896, 0
        %v2938 = vsel %vm2912, %v2899, 0
        %v2941 = vsel %vm2912, %v2902, 0
        %v2944 = vsel %vm2912, %v2905, 0
        %v2947 = vsel %vm2912, %v2908, 0
        %v2950 = vsel %vm2912, %v2911, 0
        %vm2952 = vcmask 1042432
        %v2954 = vsel %vm2952, %v2872, 0
        %2956 = vmatpush.msra.mxu0 %v2854
        %2957 = vmatpush.msra.mxu0 %v2853
        %2958 = vmatpush.msra.mxu0 %v2852
        %2959 = vmatpush.msra.mxu0 %v2851
        %2960 = vmatpush.msra.mxu0 %v2850
        %2961 = vmatpush.msra.mxu0 %v2849
        %2962 = vmatpush.msra.mxu0 %v2848
        %2963 = vmatpush.msra.mxu0 %v2847
        %2964 = vmatpush.msra.mxu0 %v2846
        %2965 = vmatpush.msra.mxu0 %v2845
        %2966 = vmatpush.msra.mxu0 %v2844
        %2967 = vmatpush.msra.mxu0 %v2843
        %2968 = vmatpush.msra.mxu0 %v2842
        %2969 = vmatpush.msra.mxu0 %v2841
        %2970 = vmatpush.msra.mxu0 %v2840
        %2971 = vmatpush.msra.mxu0 %v2839
        %2972 = vmatmul.f32.gmra.mxu0 %v2873
        %v2973 = vpop.f32.mrf.mxu0
        %v2974 = vadd.f32 0.0, %v2973
        %2975 = vmatmul.f32.gmra.mxu0 %v2876
        %v2976 = vpop.f32.mrf.mxu0
        %v2977 = vadd.f32 0.0, %v2976
        %2978 = vmatmul.f32.gmra.mxu0 %v2879
        %v2979 = vpop.f32.mrf.mxu0
        %v2980 = vadd.f32 0.0, %v2979
        %2981 = vmatmul.f32.gmra.mxu0 %v2882
        %v2982 = vpop.f32.mrf.mxu0
        %v2983 = vadd.f32 0.0, %v2982
        %2984 = vmatmul.f32.gmra.mxu0 %v2885
        %v2985 = vpop.f32.mrf.mxu0
        %v2986 = vadd.f32 0.0, %v2985
        %2987 = vmatmul.f32.gmra.mxu0 %v2888
        %v2988 = vpop.f32.mrf.mxu0
        %v2989 = vadd.f32 0.0, %v2988
        %2990 = vmatmul.f32.gmra.mxu0 %v2891
        %v2991 = vpop.f32.mrf.mxu0
        %v2992 = vadd.f32 0.0, %v2991
        %2993 = vmatmul.f32.gmra.mxu0 %v2894
        %v2994 = vpop.f32.mrf.mxu0
        %v2995 = vadd.f32 0.0, %v2994
        %2996 = vmatmul.f32.gmra.mxu0 %v2897
        %v2997 = vpop.f32.mrf.mxu0
        %v2998 = vadd.f32 0.0, %v2997
        %2999 = vmatmul.f32.gmra.mxu0 %v2900
        %v3000 = vpop.f32.mrf.mxu0
        %v3001 = vadd.f32 0.0, %v3000
        %3002 = vmatmul.f32.gmra.mxu0 %v2903
        %v3003 = vpop.f32.mrf.mxu0
        %v3004 = vadd.f32 0.0, %v3003
        %3005 = vmatmul.f32.gmra.mxu0 %v2906
        %v3006 = vpop.f32.mrf.mxu0
        %v3007 = vadd.f32 0.0, %v3006
        %3008 = vmatmul.f32.gmra.mxu0 %v2909
        %v3009 = vpop.f32.mrf.mxu0
        %v3010 = vadd.f32 0.0, %v3009
        %3011 = vdwg.mxu0
        %3012 = vmatpush.msra.mxu0 %v2870
        %3013 = vmatpush.msra.mxu0 %v2869
        %3014 = vmatpush.msra.mxu0 %v2868
        %3015 = vmatpush.msra.mxu0 %v2867
        %3016 = vmatpush.msra.mxu0 %v2866
        %3017 = vmatpush.msra.mxu0 %v2865
        %3018 = vmatpush.msra.mxu0 %v2864
        %3019 = vmatpush.msra.mxu0 %v2863
        %3020 = vmatpush.msra.mxu0 %v2862
        %3021 = vmatpush.msra.mxu0 %v2861
        %3022 = vmatpush.msra.mxu0 %v2860
        %3023 = vmatpush.msra.mxu0 %v2859
        %3024 = vmatpush.msra.mxu0 %v2858
        %3025 = vmatpush.msra.mxu0 %v2857
        %3026 = vmatpush.msra.mxu0 %v2856
        %3027 = vmatpush.msra.mxu0 %v2855
        %3028 = vmatmul.f32.gmra.mxu0 %v2874
        %v3029 = vpop.f32.mrf.mxu0
        %v3030 = vadd.f32 %v2974, %v3029
        %3031 = vmatmul.f32.gmra.mxu0 %v2877
        %v3032 = vpop.f32.mrf.mxu0
        %v3033 = vadd.f32 %v2977, %v3032
        %3034 = vmatmul.f32.gmra.mxu0 %v2880
        %v3035 = vpop.f32.mrf.mxu0
        %v3036 = vadd.f32 %v2980, %v3035
        %3037 = vmatmul.f32.gmra.mxu0 %v2883
        %v3038 = vpop.f32.mrf.mxu0
        %v3039 = vadd.f32 %v2983, %v3038
        %3040 = vmatmul.f32.gmra.mxu0 %v2886
        %v3041 = vpop.f32.mrf.mxu0
        %v3042 = vadd.f32 %v2986, %v3041
        %3043 = vmatmul.f32.gmra.mxu0 %v2889
        %v3044 = vpop.f32.mrf.mxu0
        %v3045 = vadd.f32 %v2989, %v3044
        %3046 = vmatmul.f32.gmra.mxu0 %v2892
        %v3047 = vpop.f32.mrf.mxu0
        %v3048 = vadd.f32 %v2992, %v3047
        %3049 = vmatmul.f32.gmra.mxu0 %v2895
        %v3050 = vpop.f32.mrf.mxu0
        %v3051 = vadd.f32 %v2995, %v3050
        %3052 = vmatmul.f32.gmra.mxu0 %v2898
        %v3053 = vpop.f32.mrf.mxu0
        %v3054 = vadd.f32 %v2998, %v3053
        %3055 = vmatmul.f32.gmra.mxu0 %v2901
        %v3056 = vpop.f32.mrf.mxu0
        %v3057 = vadd.f32 %v3001, %v3056
        %3058 = vmatmul.f32.gmra.mxu0 %v2904
        %v3059 = vpop.f32.mrf.mxu0
        %v3060 = vadd.f32 %v3004, %v3059
        %3061 = vmatmul.f32.gmra.mxu0 %v2907
        %v3062 = vpop.f32.mrf.mxu0
        %v3063 = vadd.f32 %v3007, %v3062
        %3064 = vmatmul.f32.gmra.mxu0 %v2910
        %v3065 = vpop.f32.mrf.mxu0
        %v3066 = vadd.f32 %v3010, %v3065
        %3067 = vdwg.mxu0
        %3068 = vmatpush.msra.mxu0 0.0
        %3069 = vmatpush.msra.mxu0 0.0
        %3070 = vmatpush.msra.mxu0 0.0
        %3071 = vmatpush.msra.mxu0 0.0
        %3072 = vmatpush.msra.mxu0 0.0
        %3073 = vmatpush.msra.mxu0 0.0
        %3074 = vmatpush.msra.mxu0 0.0
        %3075 = vmatpush.msra.mxu0 0.0
        %3076 = vmatpush.msra.mxu0 0.0
        %3077 = vmatpush.msra.mxu0 0.0
        %3078 = vmatpush.msra.mxu0 0.0
        %3079 = vmatpush.msra.mxu0 0.0
        %3080 = vmatpush.msra.mxu0 0.0
        %3081 = vmatpush.msra.mxu0 0.0
        %3082 = vmatpush.msra.mxu0 %v2954
        %3083 = vmatpush.msra.mxu0 %v2871
        %3084 = vmatmul.f32.gmra.mxu0 %v2914
        %v3085 = vpop.f32.mrf.mxu0
        %v3086 = vadd.f32 %v3030, %v3085
        %3087 = vmatmul.f32.gmra.mxu0 %v2917
        %v3088 = vpop.f32.mrf.mxu0
        %v3089 = vadd.f32 %v3033, %v3088
        %3090 = vmatmul.f32.gmra.mxu0 %v2920
        %v3091 = vpop.f32.mrf.mxu0
        %v3092 = vadd.f32 %v3036, %v3091
        %3093 = vmatmul.f32.gmra.mxu0 %v2923
        %v3094 = vpop.f32.mrf.mxu0
        %v3095 = vadd.f32 %v3039, %v3094
        %3096 = vmatmul.f32.gmra.mxu0 %v2926
        %v3097 = vpop.f32.mrf.mxu0
        %v3098 = vadd.f32 %v3042, %v3097
        %3099 = vmatmul.f32.gmra.mxu0 %v2929
        %v3100 = vpop.f32.mrf.mxu0
        %v3101 = vadd.f32 %v3045, %v3100
        %3102 = vmatmul.f32.gmra.mxu0 %v2932
        %v3103 = vpop.f32.mrf.mxu0
        %v3104 = vadd.f32 %v3048, %v3103
        %3105 = vmatmul.f32.gmra.mxu0 %v2935
        %v3106 = vpop.f32.mrf.mxu0
        %v3107 = vadd.f32 %v3051, %v3106
        %3108 = vmatmul.f32.gmra.mxu0 %v2938
        %v3109 = vpop.f32.mrf.mxu0
        %v3110 = vadd.f32 %v3054, %v3109
        %3111 = vmatmul.f32.gmra.mxu0 %v2941
        %v3112 = vpop.f32.mrf.mxu0
        %v3113 = vadd.f32 %v3057, %v3112
        %3114 = vmatmul.f32.gmra.mxu0 %v2944
        %v3115 = vpop.f32.mrf.mxu0
        %v3116 = vadd.f32 %v3060, %v3115
        %3117 = vmatmul.f32.gmra.mxu0 %v2947
        %v3118 = vpop.f32.mrf.mxu0
        %v3119 = vadd.f32 %v3063, %v3118
        %3120 = vmatmul.f32.gmra.mxu0 %v2950
        %v3121 = vpop.f32.mrf.mxu0
        %v3122 = vadd.f32 %v3066, %v3121
        %3123 = vdwg.mxu0
        %vm3124 = vcmask 523264
        %3125 = vst.msk [vmem:[%s241] sm:$0xff] %vm3124, %v3086
        %3126 = vst.msk [vmem:[%s241 + $0x8] sm:$0xff] %vm3124, %v3089
        %3127 = vst.msk [vmem:[%s241 + $0x10] sm:$0xff] %vm3124, %v3092
        %3128 = vst.msk [vmem:[%s241 + $0x18] sm:$0xff] %vm3124, %v3095
        %3129 = vst.msk [vmem:[%s241 + $0x20] sm:$0xff] %vm3124, %v3098
        %3130 = vst.msk [vmem:[%s241 + $0x28] sm:$0xff] %vm3124, %v3101
        %3131 = vst.msk [vmem:[%s241 + $0x30] sm:$0xff] %vm3124, %v3104
        %3132 = vst.msk [vmem:[%s241 + $0x38] sm:$0xff] %vm3124, %v3107
        %3133 = vst.msk [vmem:[%s241 + $0x40] sm:$0xff] %vm3124, %v3110
        %3134 = vst.msk [vmem:[%s241 + $0x48] sm:$0xff] %vm3124, %v3113
        %3135 = vst.msk [vmem:[%s241 + $0x50] sm:$0xff] %vm3124, %v3116
        %3136 = vst.msk [vmem:[%s241 + $0x58] sm:$0xff] %vm3124, %v3119
        %vm3137 = vcmask 519168
        %3138 = vst.msk [vmem:[%s241 + $0x60] sm:$0xf] %vm3137, %v3122
        %p3139 = scmp.lt.s32.totalorder %s17, 1
        %s3140 = scalar_select %p3139, %s17, 1
        %s3141 = smul.addr %s3140, 13
        %s3142 = smul.addr %s3141, 8
        %s3143 = scalar_lea.vmem %s5, %s3142
        // Predicated region
        $region45: #{toy_model_forward.3} parent=39 // pred_check
          %p3144 = pneg %p145
        $region46: #{toy_model_forward.3} parent=39 // pred_check_branch
          %3146 = sbr.rel (%p3144) target = $region48
        $region47: #{toy_model_forward.3} parent=39 // pred_region
          _
        $region48: #{toy_model_forward.3} parent=39 // pred_fallthru
          _
      $region40: #{toy_model_forward.3} parent=5 // pred_fallthru
        _
      %p3147 = scmp.le.s32.totalorder 2, %s12
      // Predicated region
      $region49: #{toy_model_forward.3} parent=5 // pred_check
        %p3148 = pneg %p3147
      $region50: #{toy_model_forward.3} parent=5 // pred_check_branch
        %3150 = sbr.rel (%p3148) target = $region52
      $region51: #{toy_model_forward.3} parent=5 // pred_region
        %s3151 = ssub.s32 %s12, 2
        // Predicated region
        $region53: #{toy_model_forward.3} parent=51 // pred_check
          %p3152 = pneg %p151
        $region54: #{toy_model_forward.3} parent=51 // pred_check_branch
          %3154 = sbr.rel (%p3152) target = $region56
        $region55: #{toy_model_forward.3} parent=51 // pred_region
          %p3155 = scmp.lt.s32.totalorder %s18, 1
          %s3156 = scalar_select %p3155, %s18, 1
          %s3157 = smul.addr %s3156, 13
          %s3158 = smul.addr %s3157, 8
          %s3159 = scalar_lea.vmem %s5, %s3158
        $region56: #{toy_model_forward.3} parent=51 // pred_fallthru
          _
      $region52: #{toy_model_forward.3} parent=5 // pred_fallthru
        _
    $region6: #{toy_model_forward.3} parent=1 // loop_footer
      %s16 = sadd.s32 1, %s12
    $region7: #{toy_model_forward.3} parent=1 // loop_footer_branch
      %11 = sbr.rel target = $region3
    $region8: #{toy_model_forward.3} parent=1 // loop_exit
      _
    %3160 = vsyncpa [#allocation3], 1
    %s3161 = scalar_lea.sflag [#allocation3], 1
    %3162 = vsyncpa %s3161, 1

</llo_original>
